<compile_context>
chip_gen: v6e
topology: v6e:2x2x1
jax: 0.10.0
libtpu: 0.0.40
codegen_flags: <defaults>
</compile_context>

<pallas_src>
import functools
import math

import jax
import jax.numpy as jnp
from jax import lax
from jax.experimental import pallas as pl
from jax.experimental.pallas import tpu as pltpu


# --------------------------------------------------------------------------
# Pallas kernel: conv3x3(+bias, scalar folded) -> exp  OR  relu, one image.
# --------------------------------------------------------------------------
def _reg_pred_head_kernel(x_ref, w_ref, shift_ref, o_ref, xp_ref, *,
                          k, linear_reg):
    # x_ref:     (1, H, W, Cin)       unpadded NHWC input block
    # w_ref:     (k*k, Cin, Cout)     conv taps, scalar (adjust|stride) pre-folded
    # shift_ref: (1, Cout)            folded per-channel shift
    # o_ref:     (1, H*W, Cout)       output block (wrapper reshapes to NHWC)
    # xp_ref:    (H+k-1, W+k-1, Cin)  VMEM scratch for in-kernel zero padding
    _, H, W, Cin = x_ref.shape
    Cout = w_ref.shape[2]
    p = (k - 1) // 2
    Hp, Wp = H + 2 * p, W + 2 * p

    # In-kernel 'same' padding: zero the scratch, write the interior, read back.
    xp_ref[...] = jnp.zeros((Hp, Wp, Cin), jnp.float32)
    xp_ref[p:p + H, p:p + W, :] = x_ref[0].astype(jnp.float32)
    xp = xp_ref[...]

    w = w_ref[...].astype(jnp.float32)          # (k*k, Cin, Cout)
    shift = shift_ref[...].astype(jnp.float32)  # (1, Cout)

    # conv3x3 as k*k accumulating (H*W, Cin) x (Cin, Cout) MXU matmuls.
    # Only k dx slices (sublane-offset) are materialized; the dy offsets are
    # multiples of W (=> multiples of 8 sublanes) on the flattened view, so
    # they are free vreg-boundary shifts.
    acc = jnp.zeros((H * W, Cout), jnp.float32)
    for dx in range(k):
        xs = xp[:, dx:dx + W, :].reshape(Hp * W, Cin)   # free leading-dim merge
        for dy in range(k):
            patch = xs[dy * W:dy * W + H * W, :]        # (H*W, Cin)
            acc = acc + jnp.dot(patch, w[dy * k + dx],
                                preferred_element_type=jnp.float32)

    y = acc + shift
    if linear_reg:
        y = jnp.maximum(y, 0.0)      # relu(conv + b) * stride, stride folded in
    else:
        y = jnp.exp(y)               # exp(adjust * (conv + b) + bias), folded
    o_ref[0] = y.astype(o_ref.dtype)  # single bulk store


def reg_pred_head_forward(x, params, *, linear_reg=False, stride=16):
    """x: (N, H, W, Cin) NHWC -> (N, H, W, 4)."""
    N, H, W, Cin = x.shape
    w, b, k = params["w"], params["b"], params["k"]
    Cout = w.shape[-1]

    # Fold the scalar multiplier and every bias into (weights, per-channel shift):
    #   linear:  relu(conv + b) * s      == max(conv_{w*s} + b*s, 0)
    #   default: exp(a*(conv + b) + bias) == exp(conv_{w*a} + (a*b + bias))
    if linear_reg:
        w_eff = w * float(stride)
        shift = (b * float(stride)).reshape(1, Cout)
    else:
        w_eff = w * params["adjust"]
        shift = (params["adjust"] * b + params["bias"]).reshape(1, Cout)

    kernel = functools.partial(_reg_pred_head_kernel, k=k, linear_reg=linear_reg)
    out = pl.pallas_call(
        kernel,
        out_shape=jax.ShapeDtypeStruct((N, H * W, Cout), x.dtype),
        grid_spec=pltpu.PrefetchScalarGridSpec(
            num_scalar_prefetch=0,
            grid=(N,),
            in_specs=[
                pl.BlockSpec((1, H, W, Cin), lambda n: (n, 0, 0, 0)),
                pl.BlockSpec((k * k, Cin, Cout), lambda n: (0, 0, 0)),
                pl.BlockSpec((1, Cout), lambda n: (0, 0)),
            ],
            out_specs=pl.BlockSpec((1, H * W, Cout), lambda n: (n, 0, 0)),
            scratch_shapes=[
                pltpu.VMEM((H + k - 1, W + k - 1, Cin), jnp.float32)],
        ),
        compiler_params=pltpu.CompilerParams(
            dimension_semantics=("parallel",)),  # v7x: one image per TensorCore
    )(x, w_eff, shift)
    return out.reshape(N, H, W, Cout)


# --------------------------------------------------------------------------
# Parameter construction (deterministic, synthetic, PyTorch-default-like init)
# --------------------------------------------------------------------------
def init_params(key, cin, cout=4, k=3, dtype=jnp.float32):
    k1, k2 = jax.random.split(key)
    bound = 1.0 / math.sqrt(cin * k * k)            # Conv2d default init bound
    w = jax.random.uniform(k1, (k * k, cin, cout), dtype, -bound, bound)
    b = jax.random.uniform(k2, (cout,), dtype, -bound, bound)
    return dict(k=k, w=w, b=b,
                adjust=jnp.asarray(0.1, dtype),     # nn.Parameter(0.1 * ones(1))
                bias=jnp.ones((cout,), dtype))      # nn.Parameter(ones(1, 4, 1, 1))


# --------------------------------------------------------------------------
# Pure-JAX reference for validation
# --------------------------------------------------------------------------
def ref_forward(x, params, *, linear_reg=False, stride=16):
    k = params["k"]
    cin = x.shape[-1]
    w = params["w"].reshape(k, k, cin, -1)          # HWIO
    p = (k - 1) // 2
    y = lax.conv_general_dilated(
        x, w, (1, 1), [(p, p), (p, p)],
        dimension_numbers=("NHWC", "HWIO", "NHWC")) + params["b"]
    if linear_reg:
        return jax.nn.relu(y) * stride
    return jnp.exp(params["adjust"] * y + params["bias"])


# --------------------------------------------------------------------------
if __name__ == "__main__":
    key = jax.random.PRNGKey(0)
    kx, kp = jax.random.split(key)

    # Small shapes consistent with the module (Cout is fixed at 4 by the head).
    N, H, W, Cin = 2, 16, 16, 32
    x = jax.random.normal(kx, (N, H, W, Cin), jnp.float32)
    params = init_params(kp, Cin)

    # Default path: linear_reg=False -> exp(adjust * conv + bias)
    out = jax.block_until_ready(reg_pred_head_forward(x, params, linear_reg=False))
    ref = jax.block_until_ready(ref_forward(x, params, linear_reg=False))
    assert out.shape == (N, H, W, 4)
    assert jnp.allclose(out, ref, atol=1e-3, rtol=1e-3), (
        float(jnp.max(jnp.abs(out - ref))))

    # linear_reg=True path: relu(conv) * stride
    out2 = jax.block_until_ready(
        reg_pred_head_forward(x, params, linear_reg=True, stride=16))
    ref2 = jax.block_until_ready(ref_forward(x, params, linear_reg=True, stride=16))
    assert jnp.allclose(out2, ref2, atol=1e-3, rtol=1e-3), (
        float(jnp.max(jnp.abs(out2 - ref2))))

    print("KERNEL_OK")
</pallas_src>

<mosaic_0001>
module attributes {stable_mosaic.version = 11 : i64} {
  func.func @_reg_pred_head_kernel(%arg0: i32, %arg1: memref<1x16x16x32xf32, #tpu.memory_space<vmem>>, %arg2: memref<9x32x4xf32, #tpu.memory_space<vmem>>, %arg3: memref<1x4xf32, #tpu.memory_space<vmem>>, %arg4: memref<1x256x4xf32, #tpu.memory_space<vmem>>, %arg5: memref<18x18x32xf32, #tpu.memory_space<vmem>>) attributes {dimension_semantics = [#tpu.dimension_semantics<parallel>], iteration_bounds = array<i64: 2>, scalar_prefetch = 0 : i64, scratch_operands = 1 : i64, tpu.core_type = #tpu.core_type<tc>, window_params = [{transform_indices = @transform_0, window_bounds = array<i64: 1, 16, 16, 32>}, {pipeline_mode = #tpu.pipeline_mode<synchronous>, transform_indices = @transform_1, window_bounds = array<i64: 9, 32, 4>}, {pipeline_mode = #tpu.pipeline_mode<synchronous>, transform_indices = @transform_2, window_bounds = array<i64: 1, 4>}, {transform_indices = @transform_3, window_bounds = array<i64: 1, 256, 4>}]} {
    %cst = arith.constant 0.000000e+00 : f32
    %0 = vector.broadcast %cst : f32 to vector<18x18x32xf32>
    %c0 = arith.constant 0 : index
    %c0_0 = arith.constant 0 : index
    %c0_1 = arith.constant 0 : index
    %1 = vector.load %arg5[%c0, %c0_0, %c0_1] : memref<18x18x32xf32, #tpu.memory_space<vmem>>, vector<18x18x32xf32>
    tpu.vector_store %arg5[%c0, %c0_0, %c0_1], %0 {strides = array<i32>} : memref<18x18x32xf32, #tpu.memory_space<vmem>>, vector<18x18x32xf32>,
    %c0_2 = arith.constant 0 : index
    %c0_3 = arith.constant 0 : index
    %c0_4 = arith.constant 0 : index
    %c0_5 = arith.constant 0 : index
    %2 = vector.load %arg1[%c0_2, %c0_3, %c0_4, %c0_5] : memref<1x16x16x32xf32, #tpu.memory_space<vmem>>, vector<1x16x16x32xf32>
    %3 = vector.shape_cast %2 : vector<1x16x16x32xf32> to vector<16x16x32xf32>
    %c1 = arith.constant 1 : index
    %c1_6 = arith.constant 1 : index
    %c0_7 = arith.constant 0 : index
    %4 = vector.load %arg5[%c1, %c1_6, %c0_7] : memref<18x18x32xf32, #tpu.memory_space<vmem>>, vector<16x16x32xf32>
    tpu.vector_store %arg5[%c1, %c1_6, %c0_7], %3 {strides = array<i32>} : memref<18x18x32xf32, #tpu.memory_space<vmem>>, vector<16x16x32xf32>,
    %c0_8 = arith.constant 0 : index
    %c0_9 = arith.constant 0 : index
    %c0_10 = arith.constant 0 : index
    %5 = vector.load %arg5[%c0_8, %c0_9, %c0_10] : memref<18x18x32xf32, #tpu.memory_space<vmem>>, vector<18x18x32xf32>
    %c0_11 = arith.constant 0 : index
    %c0_12 = arith.constant 0 : index
    %c0_13 = arith.constant 0 : index
    %6 = vector.load %arg2[%c0_11, %c0_12, %c0_13] : memref<9x32x4xf32, #tpu.memory_space<vmem>>, vector<9x32x4xf32>
    %c0_14 = arith.constant 0 : index
    %c0_15 = arith.constant 0 : index
    %7 = vector.load %arg3[%c0_14, %c0_15] : memref<1x4xf32, #tpu.memory_space<vmem>>, vector<1x4xf32>
    %cst_16 = arith.constant 0.000000e+00 : f32
    %8 = vector.broadcast %cst_16 : f32 to vector<256x4xf32>
    %9 = vector.extract_strided_slice %5 {offsets = [0, 0, 0], sizes = [18, 16, 32], strides = [1, 1, 1]} : vector<18x18x32xf32> to vector<18x16x32xf32>
    %10 = vector.shape_cast %9 : vector<18x16x32xf32> to vector<288x32xf32>
    %11 = vector.extract_strided_slice %10 {offsets = [0, 0], sizes = [256, 32], strides = [1, 1]} : vector<288x32xf32> to vector<256x32xf32>
    %12 = vector.extract_strided_slice %6 {offsets = [0, 0, 0], sizes = [1, 32, 4], strides = [1, 1, 1]} : vector<9x32x4xf32> to vector<1x32x4xf32>
    %13 = vector.shape_cast %12 : vector<1x32x4xf32> to vector<32x4xf32>
    %cst_17 = arith.constant dense<0.000000e+00> : vector<256x4xf32>
    %14 = tpu.matmul %11, %13, %cst_17 {dimension_numbers = #tpu.dot_dimension_numbers<[1], [0], [0], [1], [0, 0, 1, 1], [], []>} : vector<256x32xf32>, vector<32x4xf32>, vector<256x4xf32> -> vector<256x4xf32>
    %15 = arith.addf %8, %14 : vector<256x4xf32>
    %16 = vector.extract_strided_slice %10 {offsets = [16, 0], sizes = [256, 32], strides = [1, 1]} : vector<288x32xf32> to vector<256x32xf32>
    %17 = vector.extract_strided_slice %6 {offsets = [3, 0, 0], sizes = [1, 32, 4], strides = [1, 1, 1]} : vector<9x32x4xf32> to vector<1x32x4xf32>
    %18 = vector.shape_cast %17 : vector<1x32x4xf32> to vector<32x4xf32>
    %cst_18 = arith.constant dense<0.000000e+00> : vector<256x4xf32>
    %19 = tpu.matmul %16, %18, %cst_18 {dimension_numbers = #tpu.dot_dimension_numbers<[1], [0], [0], [1], [0, 0, 1, 1], [], []>} : vector<256x32xf32>, vector<32x4xf32>, vector<256x4xf32> -> vector<256x4xf32>
    %20 = arith.addf %15, %19 : vector<256x4xf32>
    %21 = vector.extract_strided_slice %10 {offsets = [32, 0], sizes = [256, 32], strides = [1, 1]} : vector<288x32xf32> to vector<256x32xf32>
    %22 = vector.extract_strided_slice %6 {offsets = [6, 0, 0], sizes = [1, 32, 4], strides = [1, 1, 1]} : vector<9x32x4xf32> to vector<1x32x4xf32>
    %23 = vector.shape_cast %22 : vector<1x32x4xf32> to vector<32x4xf32>
    %cst_19 = arith.constant dense<0.000000e+00> : vector<256x4xf32>
    %24 = tpu.matmul %21, %23, %cst_19 {dimension_numbers = #tpu.dot_dimension_numbers<[1], [0], [0], [1], [0, 0, 1, 1], [], []>} : vector<256x32xf32>, vector<32x4xf32>, vector<256x4xf32> -> vector<256x4xf32>
    %25 = arith.addf %20, %24 : vector<256x4xf32>
    %26 = vector.extract_strided_slice %5 {offsets = [0, 1, 0], sizes = [18, 16, 32], strides = [1, 1, 1]} : vector<18x18x32xf32> to vector<18x16x32xf32>
    %27 = vector.shape_cast %26 : vector<18x16x32xf32> to vector<288x32xf32>
    %28 = vector.extract_strided_slice %27 {offsets = [0, 0], sizes = [256, 32], strides = [1, 1]} : vector<288x32xf32> to vector<256x32xf32>
    %29 = vector.extract_strided_slice %6 {offsets = [1, 0, 0], sizes = [1, 32, 4], strides = [1, 1, 1]} : vector<9x32x4xf32> to vector<1x32x4xf32>
    %30 = vector.shape_cast %29 : vector<1x32x4xf32> to vector<32x4xf32>
    %cst_20 = arith.constant dense<0.000000e+00> : vector<256x4xf32>
    %31 = tpu.matmul %28, %30, %cst_20 {dimension_numbers = #tpu.dot_dimension_numbers<[1], [0], [0], [1], [0, 0, 1, 1], [], []>} : vector<256x32xf32>, vector<32x4xf32>, vector<256x4xf32> -> vector<256x4xf32>
    %32 = arith.addf %25, %31 : vector<256x4xf32>
    %33 = vector.extract_strided_slice %27 {offsets = [16, 0], sizes = [256, 32], strides = [1, 1]} : vector<288x32xf32> to vector<256x32xf32>
    %34 = vector.extract_strided_slice %6 {offsets = [4, 0, 0], sizes = [1, 32, 4], strides = [1, 1, 1]} : vector<9x32x4xf32> to vector<1x32x4xf32>
    %35 = vector.shape_cast %34 : vector<1x32x4xf32> to vector<32x4xf32>
    %cst_21 = arith.constant dense<0.000000e+00> : vector<256x4xf32>
    %36 = tpu.matmul %33, %35, %cst_21 {dimension_numbers = #tpu.dot_dimension_numbers<[1], [0], [0], [1], [0, 0, 1, 1], [], []>} : vector<256x32xf32>, vector<32x4xf32>, vector<256x4xf32> -> vector<256x4xf32>
    %37 = arith.addf %32, %36 : vector<256x4xf32>
    %38 = vector.extract_strided_slice %27 {offsets = [32, 0], sizes = [256, 32], strides = [1, 1]} : vector<288x32xf32> to vector<256x32xf32>
    %39 = vector.extract_strided_slice %6 {offsets = [7, 0, 0], sizes = [1, 32, 4], strides = [1, 1, 1]} : vector<9x32x4xf32> to vector<1x32x4xf32>
    %40 = vector.shape_cast %39 : vector<1x32x4xf32> to vector<32x4xf32>
    %cst_22 = arith.constant dense<0.000000e+00> : vector<256x4xf32>
    %41 = tpu.matmul %38, %40, %cst_22 {dimension_numbers = #tpu.dot_dimension_numbers<[1], [0], [0], [1], [0, 0, 1, 1], [], []>} : vector<256x32xf32>, vector<32x4xf32>, vector<256x4xf32> -> vector<256x4xf32>
    %42 = arith.addf %37, %41 : vector<256x4xf32>
    %43 = vector.extract_strided_slice %5 {offsets = [0, 2, 0], sizes = [18, 16, 32], strides = [1, 1, 1]} : vector<18x18x32xf32> to vector<18x16x32xf32>
    %44 = vector.shape_cast %43 : vector<18x16x32xf32> to vector<288x32xf32>
    %45 = vector.extract_strided_slice %44 {offsets = [0, 0], sizes = [256, 32], strides = [1, 1]} : vector<288x32xf32> to vector<256x32xf32>
    %46 = vector.extract_strided_slice %6 {offsets = [2, 0, 0], sizes = [1, 32, 4], strides = [1, 1, 1]} : vector<9x32x4xf32> to vector<1x32x4xf32>
    %47 = vector.shape_cast %46 : vector<1x32x4xf32> to vector<32x4xf32>
    %cst_23 = arith.constant dense<0.000000e+00> : vector<256x4xf32>
    %48 = tpu.matmul %45, %47, %cst_23 {dimension_numbers = #tpu.dot_dimension_numbers<[1], [0], [0], [1], [0, 0, 1, 1], [], []>} : vector<256x32xf32>, vector<32x4xf32>, vector<256x4xf32> -> vector<256x4xf32>
    %49 = arith.addf %42, %48 : vector<256x4xf32>
    %50 = vector.extract_strided_slice %44 {offsets = [16, 0], sizes = [256, 32], strides = [1, 1]} : vector<288x32xf32> to vector<256x32xf32>
    %51 = vector.extract_strided_slice %6 {offsets = [5, 0, 0], sizes = [1, 32, 4], strides = [1, 1, 1]} : vector<9x32x4xf32> to vector<1x32x4xf32>
    %52 = vector.shape_cast %51 : vector<1x32x4xf32> to vector<32x4xf32>
    %cst_24 = arith.constant dense<0.000000e+00> : vector<256x4xf32>
    %53 = tpu.matmul %50, %52, %cst_24 {dimension_numbers = #tpu.dot_dimension_numbers<[1], [0], [0], [1], [0, 0, 1, 1], [], []>} : vector<256x32xf32>, vector<32x4xf32>, vector<256x4xf32> -> vector<256x4xf32>
    %54 = arith.addf %49, %53 : vector<256x4xf32>
    %55 = vector.extract_strided_slice %44 {offsets = [32, 0], sizes = [256, 32], strides = [1, 1]} : vector<288x32xf32> to vector<256x32xf32>
    %56 = vector.extract_strided_slice %6 {offsets = [8, 0, 0], sizes = [1, 32, 4], strides = [1, 1, 1]} : vector<9x32x4xf32> to vector<1x32x4xf32>
    %57 = vector.shape_cast %56 : vector<1x32x4xf32> to vector<32x4xf32>
    %cst_25 = arith.constant dense<0.000000e+00> : vector<256x4xf32>
    %58 = tpu.matmul %55, %57, %cst_25 {dimension_numbers = #tpu.dot_dimension_numbers<[1], [0], [0], [1], [0, 0, 1, 1], [], []>} : vector<256x32xf32>, vector<32x4xf32>, vector<256x4xf32> -> vector<256x4xf32>
    %59 = arith.addf %54, %58 : vector<256x4xf32>
    %60 = vector.broadcast %7 : vector<1x4xf32> to vector<256x4xf32>
    %61 = arith.addf %59, %60 : vector<256x4xf32>
    %62 = math.exp %61 : vector<256x4xf32>
    %c0_26 = arith.constant 0 : index
    %c0_27 = arith.constant 0 : index
    %c0_28 = arith.constant 0 : index
    %63 = vector.load %arg4[%c0_26, %c0_27, %c0_28] : memref<1x256x4xf32, #tpu.memory_space<vmem>>, vector<1x256x4xf32>
    %64 = vector.shape_cast %63 : vector<1x256x4xf32> to vector<256x4xf32>
    %65 = vector.shape_cast %62 : vector<256x4xf32> to vector<1x256x4xf32>
    tpu.vector_store %arg4[%c0_26, %c0_27, %c0_28], %65 {strides = array<i32>} : memref<1x256x4xf32, #tpu.memory_space<vmem>>, vector<1x256x4xf32>,
    return
  }
  func.func @transform_0(%arg0: i32) -> (i32, i32, i32, i32) {
    %c0_i32 = arith.constant 0 : i32
    %c0_i32_0 = arith.constant 0 : i32
    %c0_i32_1 = arith.constant 0 : i32
    %c0_i32_2 = arith.constant 0 : i32
    return %arg0, %c0_i32, %c0_i32_0, %c0_i32_1 : i32, i32, i32, i32
  }
  func.func @transform_1(%arg0: i32) -> (i32, i32, i32) {
    %c0_i32 = arith.constant 0 : i32
    %c0_i32_0 = arith.constant 0 : i32
    %c0_i32_1 = arith.constant 0 : i32
    %c0_i32_2 = arith.constant 0 : i32
    return %c0_i32, %c0_i32_0, %c0_i32_1 : i32, i32, i32
  }
  func.func @transform_2(%arg0: i32) -> (i32, i32) {
    %c0_i32 = arith.constant 0 : i32
    %c0_i32_0 = arith.constant 0 : i32
    %c0_i32_1 = arith.constant 0 : i32
    return %c0_i32, %c0_i32_0 : i32, i32
  }
  func.func @transform_3(%arg0: i32) -> (i32, i32, i32) {
    %c0_i32 = arith.constant 0 : i32
    %c0_i32_0 = arith.constant 0 : i32
    %c0_i32_1 = arith.constant 0 : i32
    return %arg0, %c0_i32, %c0_i32_0 : i32, i32, i32
  }
}

</mosaic_0001>

<llo_original>
// kernel: tpu_custom_call.1
$region0: #{tpu_custom_call.1}
  #allocation0 [shape = 'u32[]', space=smem, size = 0x4, offset = 0x4, fixed_abs, tag = 'smem constant byte address 0x4 - core index']
  #allocation1 [shape = 'u32[144,128]{1,0:T(1,128)}', space=vmem, size = 0x12000, scoped, tag = 'internal scratch']
  #allocation2 [shape = 'f32[18,18,32]{2,1,0:T(8,128)}', space=vmem, size = 0x36000, scoped, tag = 'scratch operand']
  %s0 = inlined_call_operand.hbm [shape: f32[2,16,16,32], index: 0, kind: input, shape index: {}]
  %s1 = inlined_call_operand.vmem [shape: f32[9,32,4], index: 1, kind: input, shape index: {}]
  %s2 = inlined_call_operand.vmem [shape: f32[1,4], index: 2, kind: input, shape index: {}]
  %s3 = inlined_call_operand.vmem [shape: f32[2,256,4], index: 3, kind: output, shape index: {}]
  %s4 = sld [smem:[#allocation0]]
  $region49: #{tpu_custom_call.1} parent=0
    _
  %s6 = ssub.s32 1, %s4
  %s7 = scalar_select 0, %s6, %s4
  $region1: #{tpu_custom_call.1} parent=0
    #allocation3 [shape = 'u8[262144]{0}', space=vmem, size = 0x40000, scoped, tag = 'input window, operand 0']
    #allocation4 [shape = 's32[2]{0}', space=sflag, size = 0x8, scoped, tag = 'scoped memory for tpu_custom_call.1']
    %8 = vsyncpa [#allocation4], 0
    %s9 = scalar_lea.sflag [#allocation4], 1
    %10 = vsyncpa %s9, 0
    loop: start=0, step=1, limit=4
    $region2: #{tpu_custom_call.1} parent=1 // loop_pre_header
      _
    $region3: #{tpu_custom_call.1} parent=1 // loop_header
      %s12 = sphi 0, %s16
      %p13 = scmp.ge.s32.totalorder %s12, 4
      %s22 = sphi 0, %s24
      %s25 = sphi 0, %s22
      %s26 = sphi 0, %s25
      %s42 = sphi 0, %s26
      %s46 = sphi 0, %s46
      %s48 = sphi 0, %s46
      %s49 = sphi 0, %s48
      %s63 = sphi 0, %s49
      %s67 = sphi 0, %s67
      %s69 = sphi 0, %s67
      %s70 = sphi 0, %s69
      %s84 = sphi 0, %s70
      %s90 = sphi 0, %s92
      %s93 = sphi 0, %s90
      %s94 = sphi 0, %s93
      %s110 = sphi 0, %s94
    $region4: #{tpu_custom_call.1} parent=1 // loop_header_branch
      %15 = sbr.rel (%p13) target = $region8
    $region5: #{tpu_custom_call.1} parent=1 // loop_body
      %s17 = ssub.s32 %s12, 1
      %s18 = ssub.s32 %s12, 2
      %s19 = sadd.s32 %s12, 1
      %s20 = ssub.s32 %s12, %s19
      %p21 = scmp.eq.s32.totalorder %s20, 0
      %s23 = sadd.s32 %s22, 1
      %s24 = scalar_select %p21, %s22, %s23
      %p27 = pneg %p21
      %p28 = scmp.eq.s32.totalorder %s12, 1
      %p29 = por %p27, %p28
      %p30 = scmp.ne.s32.totalorder %s22, %s25
      %p31 = scmp.eq.s32.totalorder %s12, 0
      %p32 = por %p30, %p31
      %p33 = scmp.ne.s32.totalorder %s22, %s25
      %p34 = scmp.eq.s32.totalorder %s17, 1
      %p35 = por %p33, %p34
      %p36 = scmp.ne.s32.totalorder %s25, %s26
      %p37 = scmp.eq.s32.totalorder %s17, 0
      %p38 = por %p36, %p37
      %p39 = scmp.ne.s32.totalorder %s25, %s26
      %p40 = scmp.eq.s32.totalorder %s18, 1
      %p41 = por %p39, %p40
      %p43 = scmp.ne.s32.totalorder %s26, %s42
      %p44 = scmp.eq.s32.totalorder %s18, 0
      %p45 = por %p43, %p44
      %s47 = sadd.s32 %s46, 1
      %p50 = scmp.eq.s32.totalorder %s12, 1
      %p51 = scmp.ne.s32.totalorder %s46, %s48
      %p52 = scmp.eq.s32.totalorder %s12, 0
      %p53 = por %p51, %p52
      %p54 = scmp.ne.s32.totalorder %s46, %s48
      %p55 = scmp.eq.s32.totalorder %s17, 1
      %p56 = por %p54, %p55
      %p57 = scmp.ne.s32.totalorder %s48, %s49
      %p58 = scmp.eq.s32.totalorder %s17, 0
      %p59 = por %p57, %p58
      %p60 = scmp.ne.s32.totalorder %s48, %s49
      %p61 = scmp.eq.s32.totalorder %s18, 1
      %p62 = por %p60, %p61
      %p64 = scmp.ne.s32.totalorder %s49, %s63
      %p65 = scmp.eq.s32.totalorder %s18, 0
      %p66 = por %p64, %p65
      %s68 = sadd.s32 %s67, 1
      %p71 = scmp.eq.s32.totalorder %s12, 1
      %p72 = scmp.ne.s32.totalorder %s67, %s69
      %p73 = scmp.eq.s32.totalorder %s12, 0
      %p74 = por %p72, %p73
      %p75 = scmp.ne.s32.totalorder %s67, %s69
      %p76 = scmp.eq.s32.totalorder %s17, 1
      %p77 = por %p75, %p76
      %p78 = scmp.ne.s32.totalorder %s69, %s70
      %p79 = scmp.eq.s32.totalorder %s17, 0
      %p80 = por %p78, %p79
      %p81 = scmp.ne.s32.totalorder %s69, %s70
      %p82 = scmp.eq.s32.totalorder %s18, 1
      %p83 = por %p81, %p82
      %p85 = scmp.ne.s32.totalorder %s70, %s84
      %p86 = scmp.eq.s32.totalorder %s18, 0
      %p87 = por %p85, %p86
      %s88 = ssub.s32 %s12, %s19
      %p89 = scmp.eq.s32.totalorder %s88, 0
      %s91 = sadd.s32 %s90, 1
      %s92 = scalar_select %p89, %s90, %s91
      %p95 = pneg %p89
      %p96 = scmp.eq.s32.totalorder %s12, 1
      %p97 = por %p95, %p96
      %p98 = scmp.ne.s32.totalorder %s90, %s93
      %p99 = scmp.eq.s32.totalorder %s12, 0
      %p100 = por %p98, %p99
      %p101 = scmp.ne.s32.totalorder %s90, %s93
      %p102 = scmp.eq.s32.totalorder %s17, 1
      %p103 = por %p101, %p102
      %p104 = scmp.ne.s32.totalorder %s93, %s94
      %p105 = scmp.eq.s32.totalorder %s17, 0
      %p106 = por %p104, %p105
      %p107 = scmp.ne.s32.totalorder %s93, %s94
      %p108 = scmp.eq.s32.totalorder %s18, 1
      %p109 = por %p107, %p108
      %p111 = scmp.ne.s32.totalorder %s94, %s110
      %p112 = scmp.eq.s32.totalorder %s18, 0
      %p113 = por %p111, %p112
      %p114 = scmp.le.s32.totalorder 1, %s12
      %p115 = scmp.lt.s32.totalorder %s12, 3
      %p116 = pnand %p114, %p115
      %p117 = pneg %p116
      // Predicated region
      $region9: #{tpu_custom_call.1} parent=5 // pred_check
        _
      $region10: #{tpu_custom_call.1} parent=5 // pred_check_branch
        %119 = sbr.rel (%p116) target = $region12
      $region11: #{tpu_custom_call.1} parent=5 // pred_region
        %s120 = ssub.s32 %s12, 1
        // Predicated region
        $region13: #{tpu_custom_call.1} parent=11 // pred_check
          %p121 = pneg %p59
        $region14: #{tpu_custom_call.1} parent=11 // pred_check_branch
          %123 = sbr.rel (%p121) target = $region16
        $region15: #{tpu_custom_call.1} parent=11 // pred_region
          _
        $region16: #{tpu_custom_call.1} parent=11 // pred_fallthru
          _
        // Predicated region
        $region17: #{tpu_custom_call.1} parent=11 // pred_check
          %p124 = pneg %p80
        $region18: #{tpu_custom_call.1} parent=11 // pred_check_branch
          %126 = sbr.rel (%p124) target = $region20
        $region19: #{tpu_custom_call.1} parent=11 // pred_region
          _
        $region20: #{tpu_custom_call.1} parent=11 // pred_fallthru
          _
      $region12: #{tpu_custom_call.1} parent=5 // pred_fallthru
        _
      %p127 = scmp.lt.s32.totalorder %s12, 2
      // Predicated region
      $region21: #{tpu_custom_call.1} parent=5 // pred_check
        %p128 = pneg %p127
      $region22: #{tpu_custom_call.1} parent=5 // pred_check_branch
        %130 = sbr.rel (%p128) target = $region24
      $region23: #{tpu_custom_call.1} parent=5 // pred_region
        // Predicated region
        $region25: #{tpu_custom_call.1} parent=23 // pred_check
          %p131 = pneg %p32
        $region26: #{tpu_custom_call.1} parent=23 // pred_check_branch
          %133 = sbr.rel (%p131) target = $region28
        $region27: #{tpu_custom_call.1} parent=23 // pred_region
          %s134 = sand.u32 %s22, 1
          %s135 = scalar_lea.sflag [#allocation4], %s134
          %s136 = sand.u32 %s22, 1
          %s137 = smul.addr %s136, 256
          %s138 = scalar_lea.vmem [#allocation3], %s137
          %s140 = ssub.s32 4096, 4096
          %141 = vsyncadd %s135, %s140
          %s142 = smul.addr %s12, 32
          %s143 = smul.addr %s142, 128
          %s144 = scalar_lea.hbm %s0, %s143
          %s145 = sshll.u32 %s138, 4
          %s146 = int_to_ptr.vmem [resolvable:$true] %s145
          %151 = dma.hbm_to_vmem [thread:$0]  %s144, 4096, %s146, %s135, 128, 128, 8
        $region28: #{tpu_custom_call.1} parent=23 // pred_fallthru
          _
      $region24: #{tpu_custom_call.1} parent=5 // pred_fallthru
        _
      %p152 = scmp.le.s32.totalorder 1, %s12
      %p153 = scmp.lt.s32.totalorder %s12, 3
      %p154 = pnand %p152, %p153
      %p155 = pneg %p154
      // Predicated region
      $region29: #{tpu_custom_call.1} parent=5 // pred_check
        _
      $region30: #{tpu_custom_call.1} parent=5 // pred_check_branch
        %157 = sbr.rel (%p154) target = $region32
      $region31: #{tpu_custom_call.1} parent=5 // pred_region
        %s158 = ssub.s32 %s12, 1
        %s159 = sand.u32 %s25, 1
        %s160 = scalar_lea.sflag [#allocation4], %s159
        %s161 = sand.u32 %s25, 1
        %s162 = smul.addr %s161, 256
        %s163 = scalar_lea.vmem [#allocation3], %s162
        // Predicated region
        $region33: #{tpu_custom_call.1} parent=31 // pred_check
          %p164 = pneg %p38
        $region34: #{tpu_custom_call.1} parent=31 // pred_check_branch
          %166 = sbr.rel (%p164) target = $region36
        $region35: #{tpu_custom_call.1} parent=31 // pred_region
          %167 = dma.done %s160, 4096
        $region36: #{tpu_custom_call.1} parent=31 // pred_fallthru
          _
        %s168 = sand.u32 %s25, 1
        %s169 = scalar_lea.sflag [#allocation4], %s168
        %s170 = sand.u32 %s25, 1
        %s171 = smul.addr %s170, 256
        %s172 = scalar_lea.vmem [#allocation3], %s171
        %p173 = pneg %p38
        %p174 = pneg %p35
        %p175 = pneg %p59
        %p176 = pneg %p56
        %p177 = pneg %p80
        %p178 = pneg %p77
        %p179 = pneg %p106
        %p180 = pneg %p103
        %p181 = scmp.lt.s32.totalorder %s17, 1
        %s182 = scalar_select %p181, %s17, 1
        %s183 = smul.addr %s182, 32
        %s184 = smul.addr %s183, 8
        %s185 = scalar_lea.vmem %s3, %s184
        %p186 = scmp.lt.s32.totalorder %s17, 1
        %s187 = scalar_select %p186, %s17, 1
        %s188 = smul.addr %s187, 32
        %s189 = smul.addr %s188, 8
        %s190 = scalar_lea.vmem %s3, %s189
        %vm191 = vcmask 261120
        %192 = vst.msk [vmem:[#allocation2] sm:$0xff] %vm191, 0.0
        %193 = vst.msk [vmem:[#allocation2 + $0x8] sm:$0xff] %vm191, 0.0
        %vm194 = vcmask 254976
        %195 = vst.msk [vmem:[#allocation2 + $0x10] sm:$0x3] %vm194, 0.0
        %196 = vst.msk [vmem:[#allocation2 + $0x18] sm:$0xff] %vm191, 0.0
        %197 = vst.msk [vmem:[#allocation2 + $0x20] sm:$0xff] %vm191, 0.0
        %198 = vst.msk [vmem:[#allocation2 + $0x28] sm:$0x3] %vm194, 0.0
        %199 = vst.msk [vmem:[#allocation2 + $0x30] sm:$0xff] %vm191, 0.0
        %200 = vst.msk [vmem:[#allocation2 + $0x38] sm:$0xff] %vm191, 0.0
        %201 = vst.msk [vmem:[#allocation2 + $0x40] sm:$0x3] %vm194, 0.0
        %202 = vst.msk [vmem:[#allocation2 + $0x48] sm:$0xff] %vm191, 0.0
        %203 = vst.msk [vmem:[#allocation2 + $0x50] sm:$0xff] %vm191, 0.0
        %204 = vst.msk [vmem:[#allocation2 + $0x58] sm:$0x3] %vm194, 0.0
        %205 = vst.msk [vmem:[#allocation2 + $0x60] sm:$0xff] %vm191, 0.0
        %206 = vst.msk [vmem:[#allocation2 + $0x68] sm:$0xff] %vm191, 0.0
        %207 = vst.msk [vmem:[#allocation2 + $0x70] sm:$0x3] %vm194, 0.0
        %208 = vst.msk [vmem:[#allocation2 + $0x78] sm:$0xff] %vm191, 0.0
        %209 = vst.msk [vmem:[#allocation2 + $0x80] sm:$0xff] %vm191, 0.0
        %210 = vst.msk [vmem:[#allocation2 + $0x88] sm:$0x3] %vm194, 0.0
        %211 = vst.msk [vmem:[#allocation2 + $0x90] sm:$0xff] %vm191, 0.0
        %212 = vst.msk [vmem:[#allocation2 + $0x98] sm:$0xff] %vm191, 0.0
        %213 = vst.msk [vmem:[#allocation2 + $0xa0] sm:$0x3] %vm194, 0.0
        %214 = vst.msk [vmem:[#allocation2 + $0xa8] sm:$0xff] %vm191, 0.0
        %215 = vst.msk [vmem:[#allocation2 + $0xb0] sm:$0xff] %vm191, 0.0
        %216 = vst.msk [vmem:[#allocation2 + $0xb8] sm:$0x3] %vm194, 0.0
        %217 = vst.msk [vmem:[#allocation2 + $0xc0] sm:$0xff] %vm191, 0.0
        %218 = vst.msk [vmem:[#allocation2 + $0xc8] sm:$0xff] %vm191, 0.0
        %219 = vst.msk [vmem:[#allocation2 + $0xd0] sm:$0x3] %vm194, 0.0
        %220 = vst.msk [vmem:[#allocation2 + $0xd8] sm:$0xff] %vm191, 0.0
        %221 = vst.msk [vmem:[#allocation2 + $0xe0] sm:$0xff] %vm191, 0.0
        %222 = vst.msk [vmem:[#allocation2 + $0xe8] sm:$0x3] %vm194, 0.0
        %223 = vst.msk [vmem:[#allocation2 + $0xf0] sm:$0xff] %vm191, 0.0
        %224 = vst.msk [vmem:[#allocation2 + $0xf8] sm:$0xff] %vm191, 0.0
        %225 = vst.msk [vmem:[#allocation2 + $0x100] sm:$0x3] %vm194, 0.0
        %226 = vst.msk [vmem:[#allocation2 + $0x108] sm:$0xff] %vm191, 0.0
        %227 = vst.msk [vmem:[#allocation2 + $0x110] sm:$0xff] %vm191, 0.0
        %228 = vst.msk [vmem:[#allocation2 + $0x118] sm:$0x3] %vm194, 0.0
        %229 = vst.msk [vmem:[#allocation2 + $0x120] sm:$0xff] %vm191, 0.0
        %230 = vst.msk [vmem:[#allocation2 + $0x128] sm:$0xff] %vm191, 0.0
        %231 = vst.msk [vmem:[#allocation2 + $0x130] sm:$0x3] %vm194, 0.0
        %232 = vst.msk [vmem:[#allocation2 + $0x138] sm:$0xff] %vm191, 0.0
        %233 = vst.msk [vmem:[#allocation2 + $0x140] sm:$0xff] %vm191, 0.0
        %234 = vst.msk [vmem:[#allocation2 + $0x148] sm:$0x3] %vm194, 0.0
        %235 = vst.msk [vmem:[#allocation2 + $0x150] sm:$0xff] %vm191, 0.0
        %236 = vst.msk [vmem:[#allocation2 + $0x158] sm:$0xff] %vm191, 0.0
        %237 = vst.msk [vmem:[#allocation2 + $0x160] sm:$0x3] %vm194, 0.0
        %238 = vst.msk [vmem:[#allocation2 + $0x168] sm:$0xff] %vm191, 0.0
        %239 = vst.msk [vmem:[#allocation2 + $0x170] sm:$0xff] %vm191, 0.0
        %240 = vst.msk [vmem:[#allocation2 + $0x178] sm:$0x3] %vm194, 0.0
        %241 = vst.msk [vmem:[#allocation2 + $0x180] sm:$0xff] %vm191, 0.0
        %242 = vst.msk [vmem:[#allocation2 + $0x188] sm:$0xff] %vm191, 0.0
        %243 = vst.msk [vmem:[#allocation2 + $0x190] sm:$0x3] %vm194, 0.0
        %244 = vst.msk [vmem:[#allocation2 + $0x198] sm:$0xff] %vm191, 0.0
        %245 = vst.msk [vmem:[#allocation2 + $0x1a0] sm:$0xff] %vm191, 0.0
        %246 = vst.msk [vmem:[#allocation2 + $0x1a8] sm:$0x3] %vm194, 0.0
        %v247 = vld [vmem:[%s163] sm:$0xff]
        %v248 = vld [vmem:[%s163 + $0x8] sm:$0xff]
        %v249 = vld [vmem:[%s163 + $0x10] sm:$0xff]
        %v250 = vld [vmem:[%s163 + $0x18] sm:$0xff]
        %v251 = vld [vmem:[%s163 + $0x20] sm:$0xff]
        %v252 = vld [vmem:[%s163 + $0x28] sm:$0xff]
        %v253 = vld [vmem:[%s163 + $0x30] sm:$0xff]
        %v254 = vld [vmem:[%s163 + $0x38] sm:$0xff]
        %v255 = vld [vmem:[%s163 + $0x40] sm:$0xff]
        %v256 = vld [vmem:[%s163 + $0x48] sm:$0xff]
        %v257 = vld [vmem:[%s163 + $0x50] sm:$0xff]
        %v258 = vld [vmem:[%s163 + $0x58] sm:$0xff]
        %v259 = vld [vmem:[%s163 + $0x60] sm:$0xff]
        %v260 = vld [vmem:[%s163 + $0x68] sm:$0xff]
        %v261 = vld [vmem:[%s163 + $0x70] sm:$0xff]
        %v262 = vld [vmem:[%s163 + $0x78] sm:$0xff]
        %v263 = vld [vmem:[%s163 + $0x80] sm:$0xff]
        %v264 = vld [vmem:[%s163 + $0x88] sm:$0xff]
        %v265 = vld [vmem:[%s163 + $0x90] sm:$0xff]
        %v266 = vld [vmem:[%s163 + $0x98] sm:$0xff]
        %v267 = vld [vmem:[%s163 + $0xa0] sm:$0xff]
        %v268 = vld [vmem:[%s163 + $0xa8] sm:$0xff]
        %v269 = vld [vmem:[%s163 + $0xb0] sm:$0xff]
        %v270 = vld [vmem:[%s163 + $0xb8] sm:$0xff]
        %v271 = vld [vmem:[%s163 + $0xc0] sm:$0xff]
        %v272 = vld [vmem:[%s163 + $0xc8] sm:$0xff]
        %v273 = vld [vmem:[%s163 + $0xd0] sm:$0xff]
        %v274 = vld [vmem:[%s163 + $0xd8] sm:$0xff]
        %v275 = vld [vmem:[%s163 + $0xe0] sm:$0xff]
        %v276 = vld [vmem:[%s163 + $0xe8] sm:$0xff]
        %v277 = vld [vmem:[%s163 + $0xf0] sm:$0xff]
        %v278 = vld [vmem:[%s163 + $0xf8] sm:$0xff]
        %s279 = scalar_lea.vmem [#allocation2], 24
        %280 = vst.msk [vmem:[%s279 + $0x1] sm:$0xff] %vm191, %v247
        %281 = vst.msk [vmem:[%s279 + $0x9] sm:$0xff] %vm191, %v248
        %282 = vst.msk [vmem:[%s279 + $0x19] sm:$0xff] %vm191, %v249
        %283 = vst.msk [vmem:[%s279 + $0x21] sm:$0xff] %vm191, %v250
        %284 = vst.msk [vmem:[%s279 + $0x31] sm:$0xff] %vm191, %v251
        %285 = vst.msk [vmem:[%s279 + $0x39] sm:$0xff] %vm191, %v252
        %286 = vst.msk [vmem:[%s279 + $0x49] sm:$0xff] %vm191, %v253
        %287 = vst.msk [vmem:[%s279 + $0x51] sm:$0xff] %vm191, %v254
        %288 = vst.msk [vmem:[%s279 + $0x61] sm:$0xff] %vm191, %v255
        %289 = vst.msk [vmem:[%s279 + $0x69] sm:$0xff] %vm191, %v256
        %290 = vst.msk [vmem:[%s279 + $0x79] sm:$0xff] %vm191, %v257
        %291 = vst.msk [vmem:[%s279 + $0x81] sm:$0xff] %vm191, %v258
        %292 = vst.msk [vmem:[%s279 + $0x91] sm:$0xff] %vm191, %v259
        %293 = vst.msk [vmem:[%s279 + $0x99] sm:$0xff] %vm191, %v260
        %294 = vst.msk [vmem:[%s279 + $0xa9] sm:$0xff] %vm191, %v261
        %295 = vst.msk [vmem:[%s279 + $0xb1] sm:$0xff] %vm191, %v262
        %296 = vst.msk [vmem:[%s279 + $0xc1] sm:$0xff] %vm191, %v263
        %297 = vst.msk [vmem:[%s279 + $0xc9] sm:$0xff] %vm191, %v264
        %298 = vst.msk [vmem:[%s279 + $0xd9] sm:$0xff] %vm191, %v265
        %299 = vst.msk [vmem:[%s279 + $0xe1] sm:$0xff] %vm191, %v266
        %300 = vst.msk [vmem:[%s279 + $0xf1] sm:$0xff] %vm191, %v267
        %301 = vst.msk [vmem:[%s279 + $0xf9] sm:$0xff] %vm191, %v268
        %302 = vst.msk [vmem:[%s279 + $0x109] sm:$0xff] %vm191, %v269
        %303 = vst.msk [vmem:[%s279 + $0x111] sm:$0xff] %vm191, %v270
        %304 = vst.msk [vmem:[%s279 + $0x121] sm:$0xff] %vm191, %v271
        %305 = vst.msk [vmem:[%s279 + $0x129] sm:$0xff] %vm191, %v272
        %306 = vst.msk [vmem:[%s279 + $0x139] sm:$0xff] %vm191, %v273
        %307 = vst.msk [vmem:[%s279 + $0x141] sm:$0xff] %vm191, %v274
        %308 = vst.msk [vmem:[%s279 + $0x151] sm:$0xff] %vm191, %v275
        %309 = vst.msk [vmem:[%s279 + $0x159] sm:$0xff] %vm191, %v276
        %310 = vst.msk [vmem:[%s279 + $0x169] sm:$0xff] %vm191, %v277
        %311 = vst.msk [vmem:[%s279 + $0x171] sm:$0xff] %vm191, %v278
        %v312 = vld [vmem:[#allocation2] sm:$0xff]
        %v313 = vld [vmem:[#allocation2 + $0x8] sm:$0xff]
        %v314 = vld [vmem:[#allocation2 + $0x10] sm:$0x3]
        %v315 = vld [vmem:[#allocation2 + $0x18] sm:$0xff]
        %v316 = vld [vmem:[#allocation2 + $0x20] sm:$0xff]
        %v317 = vld [vmem:[#allocation2 + $0x28] sm:$0x3]
        %v318 = vld [vmem:[#allocation2 + $0x30] sm:$0xff]
        %v319 = vld [vmem:[#allocation2 + $0x38] sm:$0xff]
        %v320 = vld [vmem:[#allocation2 + $0x40] sm:$0x3]
        %v321 = vld [vmem:[#allocation2 + $0x48] sm:$0xff]
        %v322 = vld [vmem:[#allocation2 + $0x50] sm:$0xff]
        %v323 = vld [vmem:[#allocation2 + $0x58] sm:$0x3]
        %v324 = vld [vmem:[#allocation2 + $0x60] sm:$0xff]
        %v325 = vld [vmem:[#allocation2 + $0x68] sm:$0xff]
        %v326 = vld [vmem:[#allocation2 + $0x70] sm:$0x3]
        %v327 = vld [vmem:[#allocation2 + $0x78] sm:$0xff]
        %v328 = vld [vmem:[#allocation2 + $0x80] sm:$0xff]
        %v329 = vld [vmem:[#allocation2 + $0x88] sm:$0x3]
        %v330 = vld [vmem:[#allocation2 + $0x90] sm:$0xff]
        %v331 = vld [vmem:[#allocation2 + $0x98] sm:$0xff]
        %v332 = vld [vmem:[#allocation2 + $0xa0] sm:$0x3]
        %v333 = vld [vmem:[#allocation2 + $0xa8] sm:$0xff]
        %v334 = vld [vmem:[#allocation2 + $0xb0] sm:$0xff]
        %v335 = vld [vmem:[#allocation2 + $0xb8] sm:$0x3]
        %v336 = vld [vmem:[#allocation2 + $0xc0] sm:$0xff]
        %v337 = vld [vmem:[#allocation2 + $0xc8] sm:$0xff]
        %v338 = vld [vmem:[#allocation2 + $0xd0] sm:$0x3]
        %v339 = vld [vmem:[#allocation2 + $0xd8] sm:$0xff]
        %v340 = vld [vmem:[#allocation2 + $0xe0] sm:$0xff]
        %v341 = vld [vmem:[#allocation2 + $0xe8] sm:$0x3]
        %v342 = vld [vmem:[#allocation2 + $0xf0] sm:$0xff]
        %v343 = vld [vmem:[#allocation2 + $0xf8] sm:$0xff]
        %v344 = vld [vmem:[#allocation2 + $0x100] sm:$0x3]
        %v345 = vld [vmem:[#allocation2 + $0x108] sm:$0xff]
        %v346 = vld [vmem:[#allocation2 + $0x110] sm:$0xff]
        %v347 = vld [vmem:[#allocation2 + $0x118] sm:$0x3]
        %v348 = vld [vmem:[#allocation2 + $0x120] sm:$0xff]
        %v349 = vld [vmem:[#allocation2 + $0x128] sm:$0xff]
        %v350 = vld [vmem:[#allocation2 + $0x130] sm:$0x3]
        %v351 = vld [vmem:[#allocation2 + $0x138] sm:$0xff]
        %v352 = vld [vmem:[#allocation2 + $0x140] sm:$0xff]
        %v353 = vld [vmem:[#allocation2 + $0x148] sm:$0x3]
        %v354 = vld [vmem:[#allocation2 + $0x150] sm:$0xff]
        %v355 = vld [vmem:[#allocation2 + $0x158] sm:$0xff]
        %v356 = vld [vmem:[#allocation2 + $0x160] sm:$0x3]
        %v357 = vld [vmem:[#allocation2 + $0x168] sm:$0xff]
        %v358 = vld [vmem:[#allocation2 + $0x170] sm:$0xff]
        %v359 = vld [vmem:[#allocation2 + $0x178] sm:$0x3]
        %v360 = vld [vmem:[#allocation2 + $0x180] sm:$0xff]
        %v361 = vld [vmem:[#allocation2 + $0x188] sm:$0xff]
        %v362 = vld [vmem:[#allocation2 + $0x190] sm:$0x3]
        %v363 = vld [vmem:[#allocation2 + $0x198] sm:$0xff]
        %v364 = vld [vmem:[#allocation2 + $0x1a0] sm:$0xff]
        %v365 = vld [vmem:[#allocation2 + $0x1a8] sm:$0x3]
        %v366 = vld [vmem:[%s1] sm:$0xff]
        %v367 = vld [vmem:[%s1 + $0x8] sm:$0xff]
        %v368 = vld [vmem:[%s1 + $0x10] sm:$0xff]
        %v369 = vld [vmem:[%s1 + $0x18] sm:$0xff]
        %v370 = vld [vmem:[%s1 + $0x20] sm:$0xff]
        %v371 = vld [vmem:[%s1 + $0x28] sm:$0xff]
        %v372 = vld [vmem:[%s1 + $0x30] sm:$0xff]
        %v373 = vld [vmem:[%s1 + $0x38] sm:$0xff]
        %v374 = vld [vmem:[%s1 + $0x40] sm:$0xff]
        %v375 = vld [vmem:[%s1 + $0x48] sm:$0xff]
        %v376 = vld [vmem:[%s1 + $0x50] sm:$0xff]
        %v377 = vld [vmem:[%s1 + $0x58] sm:$0xff]
        %v378 = vld [vmem:[%s1 + $0x60] sm:$0xff]
        %v379 = vld [vmem:[%s1 + $0x68] sm:$0xff]
        %v380 = vld [vmem:[%s1 + $0x70] sm:$0xff]
        %v381 = vld [vmem:[%s1 + $0x78] sm:$0xff]
        %v382 = vld [vmem:[%s1 + $0x80] sm:$0xff]
        %v383 = vld [vmem:[%s1 + $0x88] sm:$0xff]
        %v384 = vld [vmem:[%s1 + $0x90] sm:$0xff]
        %v385 = vld [vmem:[%s1 + $0x98] sm:$0xff]
        %v386 = vld [vmem:[%s1 + $0xa0] sm:$0xff]
        %v387 = vld [vmem:[%s1 + $0xa8] sm:$0xff]
        %v388 = vld [vmem:[%s1 + $0xb0] sm:$0xff]
        %v389 = vld [vmem:[%s1 + $0xb8] sm:$0xff]
        %v390 = vld [vmem:[%s1 + $0xc0] sm:$0xff]
        %v391 = vld [vmem:[%s1 + $0xc8] sm:$0xff]
        %v392 = vld [vmem:[%s1 + $0xd0] sm:$0xff]
        %v393 = vld [vmem:[%s1 + $0xd8] sm:$0xff]
        %v394 = vld [vmem:[%s1 + $0xe0] sm:$0xff]
        %v395 = vld [vmem:[%s1 + $0xe8] sm:$0xff]
        %v396 = vld [vmem:[%s1 + $0xf0] sm:$0xff]
        %v397 = vld [vmem:[%s1 + $0xf8] sm:$0xff]
        %v398 = vld [vmem:[%s1 + $0x100] sm:$0xff]
        %v399 = vld [vmem:[%s1 + $0x108] sm:$0xff]
        %v400 = vld [vmem:[%s1 + $0x110] sm:$0xff]
        %v401 = vld [vmem:[%s1 + $0x118] sm:$0xff]
        %v402 = vld [vmem:[%s2] sm:$0x1]
        %v404 = vsel %vm191, %v315, 0
        %v407 = vsel %vm191, %v316, 0
        %v410 = vsel %vm191, %v318, 0
        %v413 = vsel %vm191, %v319, 0
        %v416 = vsel %vm191, %v321, 0
        %v419 = vsel %vm191, %v322, 0
        %v422 = vsel %vm191, %v324, 0
        %v425 = vsel %vm191, %v325, 0
        %v428 = vsel %vm191, %v327, 0
        %v431 = vsel %vm191, %v328, 0
        %v434 = vsel %vm191, %v330, 0
        %v437 = vsel %vm191, %v331, 0
        %v440 = vsel %vm191, %v333, 0
        %v443 = vsel %vm191, %v334, 0
        %v446 = vsel %vm191, %v336, 0
        %v449 = vsel %vm191, %v337, 0
        %v452 = vsel %vm191, %v339, 0
        %v455 = vsel %vm191, %v340, 0
        %v458 = vsel %vm191, %v342, 0
        %v461 = vsel %vm191, %v343, 0
        %v464 = vsel %vm191, %v345, 0
        %v467 = vsel %vm191, %v346, 0
        %v470 = vsel %vm191, %v348, 0
        %v473 = vsel %vm191, %v349, 0
        %v476 = vsel %vm191, %v351, 0
        %v479 = vsel %vm191, %v352, 0
        %v482 = vsel %vm191, %v354, 0
        %v485 = vsel %vm191, %v355, 0
        %v488 = vsel %vm191, %v357, 0
        %v491 = vsel %vm191, %v358, 0
        %v494 = vsel %vm191, %v360, 0
        %v497 = vsel %vm191, %v361, 0
        %499 = vmatprep.subr.mxu0 0.0
        %500 = vmatpush1.msra.mxu0 0.0
        %501 = vmatprep.subr.mxu0 0.0
        %502 = vmatpush1.msra.mxu0 0.0
        %503 = vmatprep.subr.mxu0 0.0
        %504 = vmatpush1.msra.mxu0 0.0
        %505 = vmatprep.subr.mxu0 0.0
        %506 = vmatpush1.msra.mxu0 0.0
        %507 = vmatprep.subr.mxu0 0.0
        %508 = vmatpush1.msra.mxu0 0.0
        %509 = vmatprep.subr.mxu0 0.0
        %510 = vmatpush1.msra.mxu0 0.0
        %511 = vmatprep.subr.mxu0 0.0
        %512 = vmatpush1.msra.mxu0 0.0
        %513 = vmatprep.subr.mxu0 0.0
        %514 = vmatpush1.msra.mxu0 0.0
        %515 = vmatprep.subr.mxu0 0.0
        %516 = vmatpush1.msra.mxu0 0.0
        %517 = vmatprep.subr.mxu0 0.0
        %518 = vmatpush1.msra.mxu0 0.0
        %519 = vmatprep.subr.mxu0 0.0
        %520 = vmatpush1.msra.mxu0 0.0
        %521 = vmatprep.subr.mxu0 0.0
        %522 = vmatpush1.msra.mxu0 0.0
        %523 = vmatprep.subr.mxu0 0.0
        %524 = vmatpush1.msra.mxu0 %v381
        %525 = vmatprep.subr.mxu0 0.0
        %526 = vmatpush1.msra.mxu0 %v380
        %527 = vmatprep.subr.mxu0 0.0
        %528 = vmatpush1.msra.mxu0 %v379
        %529 = vmatprep.subr.mxu0 0.0
        %530 = vmatpush1.msra.mxu0 %v378
        %531 = vmatprep.subr.mxu0 0.0
        %532 = vmatpush2.msra.mxu0 0.0
        %533 = vmatprep.subr.mxu0 0.0
        %534 = vmatpush2.msra.mxu0 0.0
        %535 = vmatprep.subr.mxu0 0.0
        %536 = vmatpush2.msra.mxu0 0.0
        %537 = vmatprep.subr.mxu0 0.0
        %538 = vmatpush2.msra.mxu0 0.0
        %539 = vmatprep.subr.mxu0 0.0
        %540 = vmatpush2.msra.mxu0 0.0
        %541 = vmatprep.subr.mxu0 0.0
        %542 = vmatpush2.msra.mxu0 0.0
        %543 = vmatprep.subr.mxu0 0.0
        %544 = vmatpush2.msra.mxu0 0.0
        %545 = vmatprep.subr.mxu0 0.0
        %546 = vmatpush2.msra.mxu0 0.0
        %547 = vmatprep.subr.mxu0 0.0
        %548 = vmatpush2.msra.mxu0 0.0
        %549 = vmatprep.subr.mxu0 0.0
        %550 = vmatpush2.msra.mxu0 0.0
        %551 = vmatprep.subr.mxu0 0.0
        %552 = vmatpush2.msra.mxu0 0.0
        %553 = vmatprep.subr.mxu0 0.0
        %554 = vmatpush2.msra.mxu0 0.0
        %555 = vmatprep.subr.mxu0 0.0
        %556 = vmatpush2.msra.mxu0 0.0
        %557 = vmatprep.subr.mxu0 0.0
        %558 = vmatpush2.msra.mxu0 0.0
        %559 = vmatprep.subr.mxu0 0.0
        %560 = vmatpush2.msra.mxu0 0.0
        %561 = vmatprep.subr.mxu0 0.0
        %562 = vmatpush2.msra.mxu0 0.0
        %563 = vmatprep.mubr.f32.mxu0 0.0
        %564 = vmatmul.mubr.f32.gmra.mxu0 %v404
        %v565 = vpop.f32.mrf.mxu0
        %v566 = vadd.f32 0.0, %v565
        %v567 = vpop.f32.mrf.mxu0
        %568 = vmatprep.mubr.f32.mxu0 0.0
        %569 = vmatmul.mubr.f32.gmra.mxu0 %v407
        %v570 = vpop.f32.mrf.mxu0
        %v571 = vadd.f32 0.0, %v570
        %v572 = vpop.f32.mrf.mxu0
        %573 = vmatprep.mubr.f32.mxu0 0.0
        %574 = vmatmul.mubr.f32.gmra.mxu0 %v410
        %v575 = vpop.f32.mrf.mxu0
        %v576 = vadd.f32 0.0, %v575
        %v577 = vpop.f32.mrf.mxu0
        %578 = vmatprep.mubr.f32.mxu0 0.0
        %579 = vmatmul.mubr.f32.gmra.mxu0 %v413
        %v580 = vpop.f32.mrf.mxu0
        %v581 = vadd.f32 0.0, %v580
        %v582 = vpop.f32.mrf.mxu0
        %583 = vmatprep.mubr.f32.mxu0 0.0
        %584 = vmatmul.mubr.f32.gmra.mxu0 %v416
        %v585 = vpop.f32.mrf.mxu0
        %v586 = vadd.f32 0.0, %v585
        %v587 = vpop.f32.mrf.mxu0
        %588 = vmatprep.mubr.f32.mxu0 0.0
        %589 = vmatmul.mubr.f32.gmra.mxu0 %v419
        %v590 = vpop.f32.mrf.mxu0
        %v591 = vadd.f32 0.0, %v590
        %v592 = vpop.f32.mrf.mxu0
        %593 = vmatprep.mubr.f32.mxu0 0.0
        %594 = vmatmul.mubr.f32.gmra.mxu0 %v422
        %v595 = vpop.f32.mrf.mxu0
        %v596 = vadd.f32 0.0, %v595
        %v597 = vpop.f32.mrf.mxu0
        %598 = vmatprep.mubr.f32.mxu0 0.0
        %599 = vmatmul.mubr.f32.gmra.mxu0 %v425
        %v600 = vpop.f32.mrf.mxu0
        %v601 = vadd.f32 0.0, %v600
        %v602 = vpop.f32.mrf.mxu0
        %603 = vmatprep.mubr.f32.mxu0 0.0
        %604 = vmatmul.mubr.f32.gmra.mxu0 %v428
        %v605 = vpop.f32.mrf.mxu0
        %v606 = vadd.f32 0.0, %v605
        %v607 = vpop.f32.mrf.mxu0
        %608 = vmatprep.mubr.f32.mxu0 0.0
        %609 = vmatmul.mubr.f32.gmra.mxu0 %v431
        %v610 = vpop.f32.mrf.mxu0
        %v611 = vadd.f32 0.0, %v610
        %v612 = vpop.f32.mrf.mxu0
        %613 = vmatprep.mubr.f32.mxu0 0.0
        %614 = vmatmul.mubr.f32.gmra.mxu0 %v434
        %v615 = vpop.f32.mrf.mxu0
        %v616 = vadd.f32 0.0, %v615
        %v617 = vpop.f32.mrf.mxu0
        %618 = vmatprep.mubr.f32.mxu0 0.0
        %619 = vmatmul.mubr.f32.gmra.mxu0 %v437
        %v620 = vpop.f32.mrf.mxu0
        %v621 = vadd.f32 0.0, %v620
        %v622 = vpop.f32.mrf.mxu0
        %623 = vmatprep.mubr.f32.mxu0 0.0
        %624 = vmatmul.mubr.f32.gmra.mxu0 %v440
        %v625 = vpop.f32.mrf.mxu0
        %v626 = vadd.f32 0.0, %v625
        %v627 = vpop.f32.mrf.mxu0
        %628 = vmatprep.mubr.f32.mxu0 0.0
        %629 = vmatmul.mubr.f32.gmra.mxu0 %v443
        %v630 = vpop.f32.mrf.mxu0
        %v631 = vadd.f32 0.0, %v630
        %v632 = vpop.f32.mrf.mxu0
        %633 = vmatprep.mubr.f32.mxu0 0.0
        %634 = vmatmul.mubr.f32.gmra.mxu0 %v446
        %v635 = vpop.f32.mrf.mxu0
        %v636 = vadd.f32 0.0, %v635
        %v637 = vpop.f32.mrf.mxu0
        %638 = vmatprep.mubr.f32.mxu0 0.0
        %639 = vmatmul.mubr.f32.gmra.mxu0 %v449
        %v640 = vpop.f32.mrf.mxu0
        %v641 = vadd.f32 0.0, %v640
        %v642 = vpop.f32.mrf.mxu0
        %643 = vmatprep.mubr.f32.mxu0 0.0
        %644 = vmatmul.mubr.f32.gmra.mxu0 %v452
        %v645 = vpop.f32.mrf.mxu0
        %v646 = vadd.f32 0.0, %v645
        %v647 = vpop.f32.mrf.mxu0
        %648 = vmatprep.mubr.f32.mxu0 0.0
        %649 = vmatmul.mubr.f32.gmra.mxu0 %v455
        %v650 = vpop.f32.mrf.mxu0
        %v651 = vadd.f32 0.0, %v650
        %v652 = vpop.f32.mrf.mxu0
        %653 = vmatprep.mubr.f32.mxu0 0.0
        %654 = vmatmul.mubr.f32.gmra.mxu0 %v458
        %v655 = vpop.f32.mrf.mxu0
        %v656 = vadd.f32 0.0, %v655
        %v657 = vpop.f32.mrf.mxu0
        %658 = vmatprep.mubr.f32.mxu0 0.0
        %659 = vmatmul.mubr.f32.gmra.mxu0 %v461
        %v660 = vpop.f32.mrf.mxu0
        %v661 = vadd.f32 0.0, %v660
        %v662 = vpop.f32.mrf.mxu0
        %663 = vmatprep.mubr.f32.mxu0 0.0
        %664 = vmatmul.mubr.f32.gmra.mxu0 %v464
        %v665 = vpop.f32.mrf.mxu0
        %v666 = vadd.f32 0.0, %v665
        %v667 = vpop.f32.mrf.mxu0
        %668 = vmatprep.mubr.f32.mxu0 0.0
        %669 = vmatmul.mubr.f32.gmra.mxu0 %v467
        %v670 = vpop.f32.mrf.mxu0
        %v671 = vadd.f32 0.0, %v670
        %v672 = vpop.f32.mrf.mxu0
        %673 = vmatprep.mubr.f32.mxu0 0.0
        %674 = vmatmul.mubr.f32.gmra.mxu0 %v470
        %v675 = vpop.f32.mrf.mxu0
        %v676 = vadd.f32 0.0, %v675
        %v677 = vpop.f32.mrf.mxu0
        %678 = vmatprep.mubr.f32.mxu0 0.0
        %679 = vmatmul.mubr.f32.gmra.mxu0 %v473
        %v680 = vpop.f32.mrf.mxu0
        %v681 = vadd.f32 0.0, %v680
        %v682 = vpop.f32.mrf.mxu0
        %683 = vmatprep.mubr.f32.mxu0 0.0
        %684 = vmatmul.mubr.f32.gmra.mxu0 %v476
        %v685 = vpop.f32.mrf.mxu0
        %v686 = vadd.f32 0.0, %v685
        %v687 = vpop.f32.mrf.mxu0
        %688 = vmatprep.mubr.f32.mxu0 0.0
        %689 = vmatmul.mubr.f32.gmra.mxu0 %v479
        %v690 = vpop.f32.mrf.mxu0
        %v691 = vadd.f32 0.0, %v690
        %v692 = vpop.f32.mrf.mxu0
        %693 = vmatprep.mubr.f32.mxu0 0.0
        %694 = vmatmul.mubr.f32.gmra.mxu0 %v482
        %v695 = vpop.f32.mrf.mxu0
        %v696 = vadd.f32 0.0, %v695
        %v697 = vpop.f32.mrf.mxu0
        %698 = vmatprep.mubr.f32.mxu0 0.0
        %699 = vmatmul.mubr.f32.gmra.mxu0 %v485
        %v700 = vpop.f32.mrf.mxu0
        %v701 = vadd.f32 0.0, %v700
        %v702 = vpop.f32.mrf.mxu0
        %703 = vmatprep.mubr.f32.mxu0 0.0
        %704 = vmatmul.mubr.f32.gmra.mxu0 %v488
        %v705 = vpop.f32.mrf.mxu0
        %v706 = vadd.f32 0.0, %v705
        %v707 = vpop.f32.mrf.mxu0
        %708 = vmatprep.mubr.f32.mxu0 0.0
        %709 = vmatmul.mubr.f32.gmra.mxu0 %v491
        %v710 = vpop.f32.mrf.mxu0
        %v711 = vadd.f32 0.0, %v710
        %v712 = vpop.f32.mrf.mxu0
        %713 = vmatprep.mubr.f32.mxu0 0.0
        %714 = vmatmul.mubr.f32.gmra.mxu0 %v494
        %v715 = vpop.f32.mrf.mxu0
        %v716 = vadd.f32 0.0, %v715
        %v717 = vpop.f32.mrf.mxu0
        %718 = vmatprep.mubr.f32.mxu0 0.0
        %719 = vmatmul.mubr.f32.gmra.mxu0 %v497
        %v720 = vpop.f32.mrf.mxu0
        %v721 = vadd.f32 0.0, %v720
        %v722 = vpop.f32.mrf.mxu0
        %723 = vdwg.mxu0
        %v725 = vsel %vm191, %v312, 0
        %v728 = vsel %vm191, %v313, 0
        %730 = vmatprep.subr.mxu0 0.0
        %731 = vmatpush1.msra.mxu0 0.0
        %732 = vmatprep.subr.mxu0 0.0
        %733 = vmatpush1.msra.mxu0 0.0
        %734 = vmatprep.subr.mxu0 0.0
        %735 = vmatpush1.msra.mxu0 0.0
        %736 = vmatprep.subr.mxu0 0.0
        %737 = vmatpush1.msra.mxu0 0.0
        %738 = vmatprep.subr.mxu0 0.0
        %739 = vmatpush1.msra.mxu0 0.0
        %740 = vmatprep.subr.mxu0 0.0
        %741 = vmatpush1.msra.mxu0 0.0
        %742 = vmatprep.subr.mxu0 0.0
        %743 = vmatpush1.msra.mxu0 0.0
        %744 = vmatprep.subr.mxu0 0.0
        %745 = vmatpush1.msra.mxu0 0.0
        %746 = vmatprep.subr.mxu0 0.0
        %747 = vmatpush1.msra.mxu0 0.0
        %748 = vmatprep.subr.mxu0 0.0
        %749 = vmatpush1.msra.mxu0 0.0
        %750 = vmatprep.subr.mxu0 0.0
        %751 = vmatpush1.msra.mxu0 0.0
        %752 = vmatprep.subr.mxu0 0.0
        %753 = vmatpush1.msra.mxu0 0.0
        %754 = vmatprep.subr.mxu0 0.0
        %755 = vmatpush1.msra.mxu0 %v369
        %756 = vmatprep.subr.mxu0 0.0
        %757 = vmatpush1.msra.mxu0 %v368
        %758 = vmatprep.subr.mxu0 0.0
        %759 = vmatpush1.msra.mxu0 %v367
        %760 = vmatprep.subr.mxu0 0.0
        %761 = vmatpush1.msra.mxu0 %v366
        %762 = vmatprep.subr.mxu0 0.0
        %763 = vmatpush2.msra.mxu0 0.0
        %764 = vmatprep.subr.mxu0 0.0
        %765 = vmatpush2.msra.mxu0 0.0
        %766 = vmatprep.subr.mxu0 0.0
        %767 = vmatpush2.msra.mxu0 0.0
        %768 = vmatprep.subr.mxu0 0.0
        %769 = vmatpush2.msra.mxu0 0.0
        %770 = vmatprep.subr.mxu0 0.0
        %771 = vmatpush2.msra.mxu0 0.0
        %772 = vmatprep.subr.mxu0 0.0
        %773 = vmatpush2.msra.mxu0 0.0
        %774 = vmatprep.subr.mxu0 0.0
        %775 = vmatpush2.msra.mxu0 0.0
        %776 = vmatprep.subr.mxu0 0.0
        %777 = vmatpush2.msra.mxu0 0.0
        %778 = vmatprep.subr.mxu0 0.0
        %779 = vmatpush2.msra.mxu0 0.0
        %780 = vmatprep.subr.mxu0 0.0
        %781 = vmatpush2.msra.mxu0 0.0
        %782 = vmatprep.subr.mxu0 0.0
        %783 = vmatpush2.msra.mxu0 0.0
        %784 = vmatprep.subr.mxu0 0.0
        %785 = vmatpush2.msra.mxu0 0.0
        %786 = vmatprep.subr.mxu0 0.0
        %787 = vmatpush2.msra.mxu0 0.0
        %788 = vmatprep.subr.mxu0 0.0
        %789 = vmatpush2.msra.mxu0 0.0
        %790 = vmatprep.subr.mxu0 0.0
        %791 = vmatpush2.msra.mxu0 0.0
        %792 = vmatprep.subr.mxu0 0.0
        %793 = vmatpush2.msra.mxu0 0.0
        %794 = vmatprep.mubr.f32.mxu0 0.0
        %795 = vmatmul.mubr.f32.gmra.mxu0 %v725
        %v796 = vpop.f32.mrf.mxu0
        %v797 = vadd.f32 %v566, %v796
        %v798 = vpop.f32.mrf.mxu0
        %799 = vmatprep.mubr.f32.mxu0 0.0
        %800 = vmatmul.mubr.f32.gmra.mxu0 %v728
        %v801 = vpop.f32.mrf.mxu0
        %v802 = vadd.f32 %v571, %v801
        %v803 = vpop.f32.mrf.mxu0
        %804 = vmatprep.mubr.f32.mxu0 0.0
        %805 = vmatmul.mubr.f32.gmra.mxu0 %v404
        %v806 = vpop.f32.mrf.mxu0
        %v807 = vadd.f32 %v576, %v806
        %v808 = vpop.f32.mrf.mxu0
        %809 = vmatprep.mubr.f32.mxu0 0.0
        %810 = vmatmul.mubr.f32.gmra.mxu0 %v407
        %v811 = vpop.f32.mrf.mxu0
        %v812 = vadd.f32 %v581, %v811
        %v813 = vpop.f32.mrf.mxu0
        %814 = vmatprep.mubr.f32.mxu0 0.0
        %815 = vmatmul.mubr.f32.gmra.mxu0 %v410
        %v816 = vpop.f32.mrf.mxu0
        %v817 = vadd.f32 %v586, %v816
        %v818 = vpop.f32.mrf.mxu0
        %819 = vmatprep.mubr.f32.mxu0 0.0
        %820 = vmatmul.mubr.f32.gmra.mxu0 %v413
        %v821 = vpop.f32.mrf.mxu0
        %v822 = vadd.f32 %v591, %v821
        %v823 = vpop.f32.mrf.mxu0
        %824 = vmatprep.mubr.f32.mxu0 0.0
        %825 = vmatmul.mubr.f32.gmra.mxu0 %v416
        %v826 = vpop.f32.mrf.mxu0
        %v827 = vadd.f32 %v596, %v826
        %v828 = vpop.f32.mrf.mxu0
        %829 = vmatprep.mubr.f32.mxu0 0.0
        %830 = vmatmul.mubr.f32.gmra.mxu0 %v419
        %v831 = vpop.f32.mrf.mxu0
        %v832 = vadd.f32 %v601, %v831
        %v833 = vpop.f32.mrf.mxu0
        %834 = vmatprep.mubr.f32.mxu0 0.0
        %835 = vmatmul.mubr.f32.gmra.mxu0 %v422
        %v836 = vpop.f32.mrf.mxu0
        %v837 = vadd.f32 %v606, %v836
        %v838 = vpop.f32.mrf.mxu0
        %839 = vmatprep.mubr.f32.mxu0 0.0
        %840 = vmatmul.mubr.f32.gmra.mxu0 %v425
        %v841 = vpop.f32.mrf.mxu0
        %v842 = vadd.f32 %v611, %v841
        %v843 = vpop.f32.mrf.mxu0
        %844 = vmatprep.mubr.f32.mxu0 0.0
        %845 = vmatmul.mubr.f32.gmra.mxu0 %v428
        %v846 = vpop.f32.mrf.mxu0
        %v847 = vadd.f32 %v616, %v846
        %v848 = vpop.f32.mrf.mxu0
        %849 = vmatprep.mubr.f32.mxu0 0.0
        %850 = vmatmul.mubr.f32.gmra.mxu0 %v431
        %v851 = vpop.f32.mrf.mxu0
        %v852 = vadd.f32 %v621, %v851
        %v853 = vpop.f32.mrf.mxu0
        %854 = vmatprep.mubr.f32.mxu0 0.0
        %855 = vmatmul.mubr.f32.gmra.mxu0 %v434
        %v856 = vpop.f32.mrf.mxu0
        %v857 = vadd.f32 %v626, %v856
        %v858 = vpop.f32.mrf.mxu0
        %859 = vmatprep.mubr.f32.mxu0 0.0
        %860 = vmatmul.mubr.f32.gmra.mxu0 %v437
        %v861 = vpop.f32.mrf.mxu0
        %v862 = vadd.f32 %v631, %v861
        %v863 = vpop.f32.mrf.mxu0
        %864 = vmatprep.mubr.f32.mxu0 0.0
        %865 = vmatmul.mubr.f32.gmra.mxu0 %v440
        %v866 = vpop.f32.mrf.mxu0
        %v867 = vadd.f32 %v636, %v866
        %v868 = vpop.f32.mrf.mxu0
        %869 = vmatprep.mubr.f32.mxu0 0.0
        %870 = vmatmul.mubr.f32.gmra.mxu0 %v443
        %v871 = vpop.f32.mrf.mxu0
        %v872 = vadd.f32 %v641, %v871
        %v873 = vpop.f32.mrf.mxu0
        %874 = vmatprep.mubr.f32.mxu0 0.0
        %875 = vmatmul.mubr.f32.gmra.mxu0 %v446
        %v876 = vpop.f32.mrf.mxu0
        %v877 = vadd.f32 %v646, %v876
        %v878 = vpop.f32.mrf.mxu0
        %879 = vmatprep.mubr.f32.mxu0 0.0
        %880 = vmatmul.mubr.f32.gmra.mxu0 %v449
        %v881 = vpop.f32.mrf.mxu0
        %v882 = vadd.f32 %v651, %v881
        %v883 = vpop.f32.mrf.mxu0
        %884 = vmatprep.mubr.f32.mxu0 0.0
        %885 = vmatmul.mubr.f32.gmra.mxu0 %v452
        %v886 = vpop.f32.mrf.mxu0
        %v887 = vadd.f32 %v656, %v886
        %v888 = vpop.f32.mrf.mxu0
        %889 = vmatprep.mubr.f32.mxu0 0.0
        %890 = vmatmul.mubr.f32.gmra.mxu0 %v455
        %v891 = vpop.f32.mrf.mxu0
        %v892 = vadd.f32 %v661, %v891
        %v893 = vpop.f32.mrf.mxu0
        %894 = vmatprep.mubr.f32.mxu0 0.0
        %895 = vmatmul.mubr.f32.gmra.mxu0 %v458
        %v896 = vpop.f32.mrf.mxu0
        %v897 = vadd.f32 %v666, %v896
        %v898 = vpop.f32.mrf.mxu0
        %899 = vmatprep.mubr.f32.mxu0 0.0
        %900 = vmatmul.mubr.f32.gmra.mxu0 %v461
        %v901 = vpop.f32.mrf.mxu0
        %v902 = vadd.f32 %v671, %v901
        %v903 = vpop.f32.mrf.mxu0
        %904 = vmatprep.mubr.f32.mxu0 0.0
        %905 = vmatmul.mubr.f32.gmra.mxu0 %v464
        %v906 = vpop.f32.mrf.mxu0
        %v907 = vadd.f32 %v676, %v906
        %v908 = vpop.f32.mrf.mxu0
        %909 = vmatprep.mubr.f32.mxu0 0.0
        %910 = vmatmul.mubr.f32.gmra.mxu0 %v467
        %v911 = vpop.f32.mrf.mxu0
        %v912 = vadd.f32 %v681, %v911
        %v913 = vpop.f32.mrf.mxu0
        %914 = vmatprep.mubr.f32.mxu0 0.0
        %915 = vmatmul.mubr.f32.gmra.mxu0 %v470
        %v916 = vpop.f32.mrf.mxu0
        %v917 = vadd.f32 %v686, %v916
        %v918 = vpop.f32.mrf.mxu0
        %919 = vmatprep.mubr.f32.mxu0 0.0
        %920 = vmatmul.mubr.f32.gmra.mxu0 %v473
        %v921 = vpop.f32.mrf.mxu0
        %v922 = vadd.f32 %v691, %v921
        %v923 = vpop.f32.mrf.mxu0
        %924 = vmatprep.mubr.f32.mxu0 0.0
        %925 = vmatmul.mubr.f32.gmra.mxu0 %v476
        %v926 = vpop.f32.mrf.mxu0
        %v927 = vadd.f32 %v696, %v926
        %v928 = vpop.f32.mrf.mxu0
        %929 = vmatprep.mubr.f32.mxu0 0.0
        %930 = vmatmul.mubr.f32.gmra.mxu0 %v479
        %v931 = vpop.f32.mrf.mxu0
        %v932 = vadd.f32 %v701, %v931
        %v933 = vpop.f32.mrf.mxu0
        %934 = vmatprep.mubr.f32.mxu0 0.0
        %935 = vmatmul.mubr.f32.gmra.mxu0 %v482
        %v936 = vpop.f32.mrf.mxu0
        %v937 = vadd.f32 %v706, %v936
        %v938 = vpop.f32.mrf.mxu0
        %939 = vmatprep.mubr.f32.mxu0 0.0
        %940 = vmatmul.mubr.f32.gmra.mxu0 %v485
        %v941 = vpop.f32.mrf.mxu0
        %v942 = vadd.f32 %v711, %v941
        %v943 = vpop.f32.mrf.mxu0
        %944 = vmatprep.mubr.f32.mxu0 0.0
        %945 = vmatmul.mubr.f32.gmra.mxu0 %v488
        %v946 = vpop.f32.mrf.mxu0
        %v947 = vadd.f32 %v716, %v946
        %v948 = vpop.f32.mrf.mxu0
        %949 = vmatprep.mubr.f32.mxu0 0.0
        %950 = vmatmul.mubr.f32.gmra.mxu0 %v491
        %v951 = vpop.f32.mrf.mxu0
        %v952 = vadd.f32 %v721, %v951
        %v953 = vpop.f32.mrf.mxu0
        %954 = vdwg.mxu0
        %v956 = vsel %vm191, %v363, 0
        %v959 = vsel %vm191, %v364, 0
        %961 = vmatprep.subr.mxu0 0.0
        %962 = vmatpush1.msra.mxu0 0.0
        %963 = vmatprep.subr.mxu0 0.0
        %964 = vmatpush1.msra.mxu0 0.0
        %965 = vmatprep.subr.mxu0 0.0
        %966 = vmatpush1.msra.mxu0 0.0
        %967 = vmatprep.subr.mxu0 0.0
        %968 = vmatpush1.msra.mxu0 0.0
        %969 = vmatprep.subr.mxu0 0.0
        %970 = vmatpush1.msra.mxu0 0.0
        %971 = vmatprep.subr.mxu0 0.0
        %972 = vmatpush1.msra.mxu0 0.0
        %973 = vmatprep.subr.mxu0 0.0
        %974 = vmatpush1.msra.mxu0 0.0
        %975 = vmatprep.subr.mxu0 0.0
        %976 = vmatpush1.msra.mxu0 0.0
        %977 = vmatprep.subr.mxu0 0.0
        %978 = vmatpush1.msra.mxu0 0.0
        %979 = vmatprep.subr.mxu0 0.0
        %980 = vmatpush1.msra.mxu0 0.0
        %981 = vmatprep.subr.mxu0 0.0
        %982 = vmatpush1.msra.mxu0 0.0
        %983 = vmatprep.subr.mxu0 0.0
        %984 = vmatpush1.msra.mxu0 0.0
        %985 = vmatprep.subr.mxu0 0.0
        %986 = vmatpush1.msra.mxu0 %v393
        %987 = vmatprep.subr.mxu0 0.0
        %988 = vmatpush1.msra.mxu0 %v392
        %989 = vmatprep.subr.mxu0 0.0
        %990 = vmatpush1.msra.mxu0 %v391
        %991 = vmatprep.subr.mxu0 0.0
        %992 = vmatpush1.msra.mxu0 %v390
        %993 = vmatprep.subr.mxu0 0.0
        %994 = vmatpush2.msra.mxu0 0.0
        %995 = vmatprep.subr.mxu0 0.0
        %996 = vmatpush2.msra.mxu0 0.0
        %997 = vmatprep.subr.mxu0 0.0
        %998 = vmatpush2.msra.mxu0 0.0
        %999 = vmatprep.subr.mxu0 0.0
        %1000 = vmatpush2.msra.mxu0 0.0
        %1001 = vmatprep.subr.mxu0 0.0
        %1002 = vmatpush2.msra.mxu0 0.0
        %1003 = vmatprep.subr.mxu0 0.0
        %1004 = vmatpush2.msra.mxu0 0.0
        %1005 = vmatprep.subr.mxu0 0.0
        %1006 = vmatpush2.msra.mxu0 0.0
        %1007 = vmatprep.subr.mxu0 0.0
        %1008 = vmatpush2.msra.mxu0 0.0
        %1009 = vmatprep.subr.mxu0 0.0
        %1010 = vmatpush2.msra.mxu0 0.0
        %1011 = vmatprep.subr.mxu0 0.0
        %1012 = vmatpush2.msra.mxu0 0.0
        %1013 = vmatprep.subr.mxu0 0.0
        %1014 = vmatpush2.msra.mxu0 0.0
        %1015 = vmatprep.subr.mxu0 0.0
        %1016 = vmatpush2.msra.mxu0 0.0
        %1017 = vmatprep.subr.mxu0 0.0
        %1018 = vmatpush2.msra.mxu0 0.0
        %1019 = vmatprep.subr.mxu0 0.0
        %1020 = vmatpush2.msra.mxu0 0.0
        %1021 = vmatprep.subr.mxu0 0.0
        %1022 = vmatpush2.msra.mxu0 0.0
        %1023 = vmatprep.subr.mxu0 0.0
        %1024 = vmatpush2.msra.mxu0 0.0
        %1025 = vmatprep.mubr.f32.mxu0 0.0
        %1026 = vmatmul.mubr.f32.gmra.mxu0 %v410
        %v1027 = vpop.f32.mrf.mxu0
        %v1028 = vadd.f32 0.0, %v1027
        %v1029 = vpop.f32.mrf.mxu0
        %1030 = vmatprep.mubr.f32.mxu0 0.0
        %1031 = vmatmul.mubr.f32.gmra.mxu0 %v413
        %v1032 = vpop.f32.mrf.mxu0
        %v1033 = vadd.f32 0.0, %v1032
        %v1034 = vpop.f32.mrf.mxu0
        %1035 = vmatprep.mubr.f32.mxu0 0.0
        %1036 = vmatmul.mubr.f32.gmra.mxu0 %v416
        %v1037 = vpop.f32.mrf.mxu0
        %v1038 = vadd.f32 0.0, %v1037
        %v1039 = vpop.f32.mrf.mxu0
        %1040 = vmatprep.mubr.f32.mxu0 0.0
        %1041 = vmatmul.mubr.f32.gmra.mxu0 %v419
        %v1042 = vpop.f32.mrf.mxu0
        %v1043 = vadd.f32 0.0, %v1042
        %v1044 = vpop.f32.mrf.mxu0
        %1045 = vmatprep.mubr.f32.mxu0 0.0
        %1046 = vmatmul.mubr.f32.gmra.mxu0 %v422
        %v1047 = vpop.f32.mrf.mxu0
        %v1048 = vadd.f32 0.0, %v1047
        %v1049 = vpop.f32.mrf.mxu0
        %1050 = vmatprep.mubr.f32.mxu0 0.0
        %1051 = vmatmul.mubr.f32.gmra.mxu0 %v425
        %v1052 = vpop.f32.mrf.mxu0
        %v1053 = vadd.f32 0.0, %v1052
        %v1054 = vpop.f32.mrf.mxu0
        %1055 = vmatprep.mubr.f32.mxu0 0.0
        %1056 = vmatmul.mubr.f32.gmra.mxu0 %v428
        %v1057 = vpop.f32.mrf.mxu0
        %v1058 = vadd.f32 0.0, %v1057
        %v1059 = vpop.f32.mrf.mxu0
        %1060 = vmatprep.mubr.f32.mxu0 0.0
        %1061 = vmatmul.mubr.f32.gmra.mxu0 %v431
        %v1062 = vpop.f32.mrf.mxu0
        %v1063 = vadd.f32 0.0, %v1062
        %v1064 = vpop.f32.mrf.mxu0
        %1065 = vmatprep.mubr.f32.mxu0 0.0
        %1066 = vmatmul.mubr.f32.gmra.mxu0 %v434
        %v1067 = vpop.f32.mrf.mxu0
        %v1068 = vadd.f32 0.0, %v1067
        %v1069 = vpop.f32.mrf.mxu0
        %1070 = vmatprep.mubr.f32.mxu0 0.0
        %1071 = vmatmul.mubr.f32.gmra.mxu0 %v437
        %v1072 = vpop.f32.mrf.mxu0
        %v1073 = vadd.f32 0.0, %v1072
        %v1074 = vpop.f32.mrf.mxu0
        %1075 = vmatprep.mubr.f32.mxu0 0.0
        %1076 = vmatmul.mubr.f32.gmra.mxu0 %v440
        %v1077 = vpop.f32.mrf.mxu0
        %v1078 = vadd.f32 0.0, %v1077
        %v1079 = vpop.f32.mrf.mxu0
        %1080 = vmatprep.mubr.f32.mxu0 0.0
        %1081 = vmatmul.mubr.f32.gmra.mxu0 %v443
        %v1082 = vpop.f32.mrf.mxu0
        %v1083 = vadd.f32 0.0, %v1082
        %v1084 = vpop.f32.mrf.mxu0
        %1085 = vmatprep.mubr.f32.mxu0 0.0
        %1086 = vmatmul.mubr.f32.gmra.mxu0 %v446
        %v1087 = vpop.f32.mrf.mxu0
        %v1088 = vadd.f32 0.0, %v1087
        %v1089 = vpop.f32.mrf.mxu0
        %1090 = vmatprep.mubr.f32.mxu0 0.0
        %1091 = vmatmul.mubr.f32.gmra.mxu0 %v449
        %v1092 = vpop.f32.mrf.mxu0
        %v1093 = vadd.f32 0.0, %v1092
        %v1094 = vpop.f32.mrf.mxu0
        %1095 = vmatprep.mubr.f32.mxu0 0.0
        %1096 = vmatmul.mubr.f32.gmra.mxu0 %v452
        %v1097 = vpop.f32.mrf.mxu0
        %v1098 = vadd.f32 0.0, %v1097
        %v1099 = vpop.f32.mrf.mxu0
        %1100 = vmatprep.mubr.f32.mxu0 0.0
        %1101 = vmatmul.mubr.f32.gmra.mxu0 %v455
        %v1102 = vpop.f32.mrf.mxu0
        %v1103 = vadd.f32 0.0, %v1102
        %v1104 = vpop.f32.mrf.mxu0
        %1105 = vmatprep.mubr.f32.mxu0 0.0
        %1106 = vmatmul.mubr.f32.gmra.mxu0 %v458
        %v1107 = vpop.f32.mrf.mxu0
        %v1108 = vadd.f32 0.0, %v1107
        %v1109 = vpop.f32.mrf.mxu0
        %1110 = vmatprep.mubr.f32.mxu0 0.0
        %1111 = vmatmul.mubr.f32.gmra.mxu0 %v461
        %v1112 = vpop.f32.mrf.mxu0
        %v1113 = vadd.f32 0.0, %v1112
        %v1114 = vpop.f32.mrf.mxu0
        %1115 = vmatprep.mubr.f32.mxu0 0.0
        %1116 = vmatmul.mubr.f32.gmra.mxu0 %v464
        %v1117 = vpop.f32.mrf.mxu0
        %v1118 = vadd.f32 0.0, %v1117
        %v1119 = vpop.f32.mrf.mxu0
        %1120 = vmatprep.mubr.f32.mxu0 0.0
        %1121 = vmatmul.mubr.f32.gmra.mxu0 %v467
        %v1122 = vpop.f32.mrf.mxu0
        %v1123 = vadd.f32 0.0, %v1122
        %v1124 = vpop.f32.mrf.mxu0
        %1125 = vmatprep.mubr.f32.mxu0 0.0
        %1126 = vmatmul.mubr.f32.gmra.mxu0 %v470
        %v1127 = vpop.f32.mrf.mxu0
        %v1128 = vadd.f32 0.0, %v1127
        %v1129 = vpop.f32.mrf.mxu0
        %1130 = vmatprep.mubr.f32.mxu0 0.0
        %1131 = vmatmul.mubr.f32.gmra.mxu0 %v473
        %v1132 = vpop.f32.mrf.mxu0
        %v1133 = vadd.f32 0.0, %v1132
        %v1134 = vpop.f32.mrf.mxu0
        %1135 = vmatprep.mubr.f32.mxu0 0.0
        %1136 = vmatmul.mubr.f32.gmra.mxu0 %v476
        %v1137 = vpop.f32.mrf.mxu0
        %v1138 = vadd.f32 0.0, %v1137
        %v1139 = vpop.f32.mrf.mxu0
        %1140 = vmatprep.mubr.f32.mxu0 0.0
        %1141 = vmatmul.mubr.f32.gmra.mxu0 %v479
        %v1142 = vpop.f32.mrf.mxu0
        %v1143 = vadd.f32 0.0, %v1142
        %v1144 = vpop.f32.mrf.mxu0
        %1145 = vmatprep.mubr.f32.mxu0 0.0
        %1146 = vmatmul.mubr.f32.gmra.mxu0 %v482
        %v1147 = vpop.f32.mrf.mxu0
        %v1148 = vadd.f32 0.0, %v1147
        %v1149 = vpop.f32.mrf.mxu0
        %1150 = vmatprep.mubr.f32.mxu0 0.0
        %1151 = vmatmul.mubr.f32.gmra.mxu0 %v485
        %v1152 = vpop.f32.mrf.mxu0
        %v1153 = vadd.f32 0.0, %v1152
        %v1154 = vpop.f32.mrf.mxu0
        %1155 = vmatprep.mubr.f32.mxu0 0.0
        %1156 = vmatmul.mubr.f32.gmra.mxu0 %v488
        %v1157 = vpop.f32.mrf.mxu0
        %v1158 = vadd.f32 0.0, %v1157
        %v1159 = vpop.f32.mrf.mxu0
        %1160 = vmatprep.mubr.f32.mxu0 0.0
        %1161 = vmatmul.mubr.f32.gmra.mxu0 %v491
        %v1162 = vpop.f32.mrf.mxu0
        %v1163 = vadd.f32 0.0, %v1162
        %v1164 = vpop.f32.mrf.mxu0
        %1165 = vmatprep.mubr.f32.mxu0 0.0
        %1166 = vmatmul.mubr.f32.gmra.mxu0 %v494
        %v1167 = vpop.f32.mrf.mxu0
        %v1168 = vadd.f32 0.0, %v1167
        %v1169 = vpop.f32.mrf.mxu0
        %1170 = vmatprep.mubr.f32.mxu0 0.0
        %1171 = vmatmul.mubr.f32.gmra.mxu0 %v497
        %v1172 = vpop.f32.mrf.mxu0
        %v1173 = vadd.f32 0.0, %v1172
        %v1174 = vpop.f32.mrf.mxu0
        %1175 = vmatprep.mubr.f32.mxu0 0.0
        %1176 = vmatmul.mubr.f32.gmra.mxu0 %v956
        %v1177 = vpop.f32.mrf.mxu0
        %v1178 = vadd.f32 0.0, %v1177
        %v1179 = vpop.f32.mrf.mxu0
        %1180 = vmatprep.mubr.f32.mxu0 0.0
        %1181 = vmatmul.mubr.f32.gmra.mxu0 %v959
        %v1182 = vpop.f32.mrf.mxu0
        %v1183 = vadd.f32 0.0, %v1182
        %v1184 = vpop.f32.mrf.mxu0
        %1185 = vdwg.mxu0
        %v1186 = vadd.f32 %v797, %v1028
        %v1187 = vadd.f32 %v802, %v1033
        %v1188 = vadd.f32 %v807, %v1038
        %v1189 = vadd.f32 %v812, %v1043
        %v1190 = vadd.f32 %v817, %v1048
        %v1191 = vadd.f32 %v822, %v1053
        %v1192 = vadd.f32 %v827, %v1058
        %v1193 = vadd.f32 %v832, %v1063
        %v1194 = vadd.f32 %v837, %v1068
        %v1195 = vadd.f32 %v842, %v1073
        %v1196 = vadd.f32 %v847, %v1078
        %v1197 = vadd.f32 %v852, %v1083
        %v1198 = vadd.f32 %v857, %v1088
        %v1199 = vadd.f32 %v862, %v1093
        %v1200 = vadd.f32 %v867, %v1098
        %v1201 = vadd.f32 %v872, %v1103
        %v1202 = vadd.f32 %v877, %v1108
        %v1203 = vadd.f32 %v882, %v1113
        %v1204 = vadd.f32 %v887, %v1118
        %v1205 = vadd.f32 %v892, %v1123
        %v1206 = vadd.f32 %v897, %v1128
        %v1207 = vadd.f32 %v902, %v1133
        %v1208 = vadd.f32 %v907, %v1138
        %v1209 = vadd.f32 %v912, %v1143
        %v1210 = vadd.f32 %v917, %v1148
        %v1211 = vadd.f32 %v922, %v1153
        %v1212 = vadd.f32 %v927, %v1158
        %v1213 = vadd.f32 %v932, %v1163
        %v1214 = vadd.f32 %v937, %v1168
        %v1215 = vadd.f32 %v942, %v1173
        %v1216 = vadd.f32 %v947, %v1178
        %v1217 = vadd.f32 %v952, %v1183
        %vm1236 = vcmask 1046528
        %v1237 = vrot.slane %v312, 1
        %v1238 = vrot.slane %v313, 1
        %v1239 = vsel %vm1236, %v1237, %v1238
        %v1240 = vrot.slane %v314, 1
        %v1241 = vsel %vm1236, %v1238, %v1240
        %v1242 = vrot.slane %v315, 1
        %v1243 = vrot.slane %v316, 1
        %v1244 = vsel %vm1236, %v1242, %v1243
        %v1245 = vrot.slane %v317, 1
        %v1246 = vsel %vm1236, %v1243, %v1245
        %v1247 = vrot.slane %v318, 1
        %v1248 = vrot.slane %v319, 1
        %v1249 = vsel %vm1236, %v1247, %v1248
        %v1250 = vrot.slane %v320, 1
        %v1251 = vsel %vm1236, %v1248, %v1250
        %v1252 = vrot.slane %v321, 1
        %v1253 = vrot.slane %v322, 1
        %v1254 = vsel %vm1236, %v1252, %v1253
        %v1255 = vrot.slane %v323, 1
        %v1256 = vsel %vm1236, %v1253, %v1255
        %v1257 = vrot.slane %v324, 1
        %v1258 = vrot.slane %v325, 1
        %v1259 = vsel %vm1236, %v1257, %v1258
        %v1260 = vrot.slane %v326, 1
        %v1261 = vsel %vm1236, %v1258, %v1260
        %v1262 = vrot.slane %v327, 1
        %v1263 = vrot.slane %v328, 1
        %v1264 = vsel %vm1236, %v1262, %v1263
        %v1265 = vrot.slane %v329, 1
        %v1266 = vsel %vm1236, %v1263, %v1265
        %v1267 = vrot.slane %v330, 1
        %v1268 = vrot.slane %v331, 1
        %v1269 = vsel %vm1236, %v1267, %v1268
        %v1270 = vrot.slane %v332, 1
        %v1271 = vsel %vm1236, %v1268, %v1270
        %v1272 = vrot.slane %v333, 1
        %v1273 = vrot.slane %v334, 1
        %v1274 = vsel %vm1236, %v1272, %v1273
        %v1275 = vrot.slane %v335, 1
        %v1276 = vsel %vm1236, %v1273, %v1275
        %v1277 = vrot.slane %v336, 1
        %v1278 = vrot.slane %v337, 1
        %v1279 = vsel %vm1236, %v1277, %v1278
        %v1280 = vrot.slane %v338, 1
        %v1281 = vsel %vm1236, %v1278, %v1280
        %v1282 = vrot.slane %v339, 1
        %v1283 = vrot.slane %v340, 1
        %v1284 = vsel %vm1236, %v1282, %v1283
        %v1285 = vrot.slane %v341, 1
        %v1286 = vsel %vm1236, %v1283, %v1285
        %v1287 = vrot.slane %v342, 1
        %v1288 = vrot.slane %v343, 1
        %v1289 = vsel %vm1236, %v1287, %v1288
        %v1290 = vrot.slane %v344, 1
        %v1291 = vsel %vm1236, %v1288, %v1290
        %v1292 = vrot.slane %v345, 1
        %v1293 = vrot.slane %v346, 1
        %v1294 = vsel %vm1236, %v1292, %v1293
        %v1295 = vrot.slane %v347, 1
        %v1296 = vsel %vm1236, %v1293, %v1295
        %v1297 = vrot.slane %v348, 1
        %v1298 = vrot.slane %v349, 1
        %v1299 = vsel %vm1236, %v1297, %v1298
        %v1300 = vrot.slane %v350, 1
        %v1301 = vsel %vm1236, %v1298, %v1300
        %v1302 = vrot.slane %v351, 1
        %v1303 = vrot.slane %v352, 1
        %v1304 = vsel %vm1236, %v1302, %v1303
        %v1305 = vrot.slane %v353, 1
        %v1306 = vsel %vm1236, %v1303, %v1305
        %v1307 = vrot.slane %v354, 1
        %v1308 = vrot.slane %v355, 1
        %v1309 = vsel %vm1236, %v1307, %v1308
        %v1310 = vrot.slane %v356, 1
        %v1311 = vsel %vm1236, %v1308, %v1310
        %v1312 = vrot.slane %v357, 1
        %v1313 = vrot.slane %v358, 1
        %v1314 = vsel %vm1236, %v1312, %v1313
        %v1315 = vrot.slane %v359, 1
        %v1316 = vsel %vm1236, %v1313, %v1315
        %v1317 = vrot.slane %v360, 1
        %v1318 = vrot.slane %v361, 1
        %v1319 = vsel %vm1236, %v1317, %v1318
        %v1320 = vrot.slane %v362, 1
        %v1321 = vsel %vm1236, %v1318, %v1320
        %v1322 = vrot.slane %v363, 1
        %v1323 = vrot.slane %v364, 1
        %v1324 = vsel %vm1236, %v1322, %v1323
        %v1325 = vrot.slane %v365, 1
        %v1326 = vsel %vm1236, %v1323, %v1325
        %v1327 = vsel %vm191, %v1239, 0
        %v1329 = vsel %vm191, %v1241, 0
        %v1331 = vsel %vm191, %v1244, 0
        %v1333 = vsel %vm191, %v1246, 0
        %v1335 = vsel %vm191, %v1249, 0
        %v1337 = vsel %vm191, %v1251, 0
        %v1339 = vsel %vm191, %v1254, 0
        %v1341 = vsel %vm191, %v1256, 0
        %v1343 = vsel %vm191, %v1259, 0
        %v1345 = vsel %vm191, %v1261, 0
        %v1347 = vsel %vm191, %v1264, 0
        %v1349 = vsel %vm191, %v1266, 0
        %v1351 = vsel %vm191, %v1269, 0
        %v1353 = vsel %vm191, %v1271, 0
        %v1355 = vsel %vm191, %v1274, 0
        %v1357 = vsel %vm191, %v1276, 0
        %v1359 = vsel %vm191, %v1279, 0
        %v1361 = vsel %vm191, %v1281, 0
        %v1363 = vsel %vm191, %v1284, 0
        %v1365 = vsel %vm191, %v1286, 0
        %v1367 = vsel %vm191, %v1289, 0
        %v1369 = vsel %vm191, %v1291, 0
        %v1371 = vsel %vm191, %v1294, 0
        %v1373 = vsel %vm191, %v1296, 0
        %v1375 = vsel %vm191, %v1299, 0
        %v1377 = vsel %vm191, %v1301, 0
        %v1379 = vsel %vm191, %v1304, 0
        %v1381 = vsel %vm191, %v1306, 0
        %v1383 = vsel %vm191, %v1309, 0
        %v1385 = vsel %vm191, %v1311, 0
        %v1387 = vsel %vm191, %v1314, 0
        %v1389 = vsel %vm191, %v1316, 0
        %1391 = vmatprep.subr.mxu0 0.0
        %1392 = vmatpush1.msra.mxu0 0.0
        %1393 = vmatprep.subr.mxu0 0.0
        %1394 = vmatpush1.msra.mxu0 0.0
        %1395 = vmatprep.subr.mxu0 0.0
        %1396 = vmatpush1.msra.mxu0 0.0
        %1397 = vmatprep.subr.mxu0 0.0
        %1398 = vmatpush1.msra.mxu0 0.0
        %1399 = vmatprep.subr.mxu0 0.0
        %1400 = vmatpush1.msra.mxu0 0.0
        %1401 = vmatprep.subr.mxu0 0.0
        %1402 = vmatpush1.msra.mxu0 0.0
        %1403 = vmatprep.subr.mxu0 0.0
        %1404 = vmatpush1.msra.mxu0 0.0
        %1405 = vmatprep.subr.mxu0 0.0
        %1406 = vmatpush1.msra.mxu0 0.0
        %1407 = vmatprep.subr.mxu0 0.0
        %1408 = vmatpush1.msra.mxu0 0.0
        %1409 = vmatprep.subr.mxu0 0.0
        %1410 = vmatpush1.msra.mxu0 0.0
        %1411 = vmatprep.subr.mxu0 0.0
        %1412 = vmatpush1.msra.mxu0 0.0
        %1413 = vmatprep.subr.mxu0 0.0
        %1414 = vmatpush1.msra.mxu0 0.0
        %1415 = vmatprep.subr.mxu0 0.0
        %1416 = vmatpush1.msra.mxu0 %v373
        %1417 = vmatprep.subr.mxu0 0.0
        %1418 = vmatpush1.msra.mxu0 %v372
        %1419 = vmatprep.subr.mxu0 0.0
        %1420 = vmatpush1.msra.mxu0 %v371
        %1421 = vmatprep.subr.mxu0 0.0
        %1422 = vmatpush1.msra.mxu0 %v370
        %1423 = vmatprep.subr.mxu0 0.0
        %1424 = vmatpush2.msra.mxu0 0.0
        %1425 = vmatprep.subr.mxu0 0.0
        %1426 = vmatpush2.msra.mxu0 0.0
        %1427 = vmatprep.subr.mxu0 0.0
        %1428 = vmatpush2.msra.mxu0 0.0
        %1429 = vmatprep.subr.mxu0 0.0
        %1430 = vmatpush2.msra.mxu0 0.0
        %1431 = vmatprep.subr.mxu0 0.0
        %1432 = vmatpush2.msra.mxu0 0.0
        %1433 = vmatprep.subr.mxu0 0.0
        %1434 = vmatpush2.msra.mxu0 0.0
        %1435 = vmatprep.subr.mxu0 0.0
        %1436 = vmatpush2.msra.mxu0 0.0
        %1437 = vmatprep.subr.mxu0 0.0
        %1438 = vmatpush2.msra.mxu0 0.0
        %1439 = vmatprep.subr.mxu0 0.0
        %1440 = vmatpush2.msra.mxu0 0.0
        %1441 = vmatprep.subr.mxu0 0.0
        %1442 = vmatpush2.msra.mxu0 0.0
        %1443 = vmatprep.subr.mxu0 0.0
        %1444 = vmatpush2.msra.mxu0 0.0
        %1445 = vmatprep.subr.mxu0 0.0
        %1446 = vmatpush2.msra.mxu0 0.0
        %1447 = vmatprep.subr.mxu0 0.0
        %1448 = vmatpush2.msra.mxu0 0.0
        %1449 = vmatprep.subr.mxu0 0.0
        %1450 = vmatpush2.msra.mxu0 0.0
        %1451 = vmatprep.subr.mxu0 0.0
        %1452 = vmatpush2.msra.mxu0 0.0
        %1453 = vmatprep.subr.mxu0 0.0
        %1454 = vmatpush2.msra.mxu0 0.0
        %1455 = vmatprep.mubr.f32.mxu0 0.0
        %1456 = vmatmul.mubr.f32.gmra.mxu0 %v1327
        %v1457 = vpop.f32.mrf.mxu0
        %v1458 = vadd.f32 0.0, %v1457
        %v1459 = vpop.f32.mrf.mxu0
        %1460 = vmatprep.mubr.f32.mxu0 0.0
        %1461 = vmatmul.mubr.f32.gmra.mxu0 %v1329
        %v1462 = vpop.f32.mrf.mxu0
        %v1463 = vadd.f32 0.0, %v1462
        %v1464 = vpop.f32.mrf.mxu0
        %1465 = vmatprep.mubr.f32.mxu0 0.0
        %1466 = vmatmul.mubr.f32.gmra.mxu0 %v1331
        %v1467 = vpop.f32.mrf.mxu0
        %v1468 = vadd.f32 0.0, %v1467
        %v1469 = vpop.f32.mrf.mxu0
        %1470 = vmatprep.mubr.f32.mxu0 0.0
        %1471 = vmatmul.mubr.f32.gmra.mxu0 %v1333
        %v1472 = vpop.f32.mrf.mxu0
        %v1473 = vadd.f32 0.0, %v1472
        %v1474 = vpop.f32.mrf.mxu0
        %1475 = vmatprep.mubr.f32.mxu0 0.0
        %1476 = vmatmul.mubr.f32.gmra.mxu0 %v1335
        %v1477 = vpop.f32.mrf.mxu0
        %v1478 = vadd.f32 0.0, %v1477
        %v1479 = vpop.f32.mrf.mxu0
        %1480 = vmatprep.mubr.f32.mxu0 0.0
        %1481 = vmatmul.mubr.f32.gmra.mxu0 %v1337
        %v1482 = vpop.f32.mrf.mxu0
        %v1483 = vadd.f32 0.0, %v1482
        %v1484 = vpop.f32.mrf.mxu0
        %1485 = vmatprep.mubr.f32.mxu0 0.0
        %1486 = vmatmul.mubr.f32.gmra.mxu0 %v1339
        %v1487 = vpop.f32.mrf.mxu0
        %v1488 = vadd.f32 0.0, %v1487
        %v1489 = vpop.f32.mrf.mxu0
        %1490 = vmatprep.mubr.f32.mxu0 0.0
        %1491 = vmatmul.mubr.f32.gmra.mxu0 %v1341
        %v1492 = vpop.f32.mrf.mxu0
        %v1493 = vadd.f32 0.0, %v1492
        %v1494 = vpop.f32.mrf.mxu0
        %1495 = vmatprep.mubr.f32.mxu0 0.0
        %1496 = vmatmul.mubr.f32.gmra.mxu0 %v1343
        %v1497 = vpop.f32.mrf.mxu0
        %v1498 = vadd.f32 0.0, %v1497
        %v1499 = vpop.f32.mrf.mxu0
        %1500 = vmatprep.mubr.f32.mxu0 0.0
        %1501 = vmatmul.mubr.f32.gmra.mxu0 %v1345
        %v1502 = vpop.f32.mrf.mxu0
        %v1503 = vadd.f32 0.0, %v1502
        %v1504 = vpop.f32.mrf.mxu0
        %1505 = vmatprep.mubr.f32.mxu0 0.0
        %1506 = vmatmul.mubr.f32.gmra.mxu0 %v1347
        %v1507 = vpop.f32.mrf.mxu0
        %v1508 = vadd.f32 0.0, %v1507
        %v1509 = vpop.f32.mrf.mxu0
        %1510 = vmatprep.mubr.f32.mxu0 0.0
        %1511 = vmatmul.mubr.f32.gmra.mxu0 %v1349
        %v1512 = vpop.f32.mrf.mxu0
        %v1513 = vadd.f32 0.0, %v1512
        %v1514 = vpop.f32.mrf.mxu0
        %1515 = vmatprep.mubr.f32.mxu0 0.0
        %1516 = vmatmul.mubr.f32.gmra.mxu0 %v1351
        %v1517 = vpop.f32.mrf.mxu0
        %v1518 = vadd.f32 0.0, %v1517
        %v1519 = vpop.f32.mrf.mxu0
        %1520 = vmatprep.mubr.f32.mxu0 0.0
        %1521 = vmatmul.mubr.f32.gmra.mxu0 %v1353
        %v1522 = vpop.f32.mrf.mxu0
        %v1523 = vadd.f32 0.0, %v1522
        %v1524 = vpop.f32.mrf.mxu0
        %1525 = vmatprep.mubr.f32.mxu0 0.0
        %1526 = vmatmul.mubr.f32.gmra.mxu0 %v1355
        %v1527 = vpop.f32.mrf.mxu0
        %v1528 = vadd.f32 0.0, %v1527
        %v1529 = vpop.f32.mrf.mxu0
        %1530 = vmatprep.mubr.f32.mxu0 0.0
        %1531 = vmatmul.mubr.f32.gmra.mxu0 %v1357
        %v1532 = vpop.f32.mrf.mxu0
        %v1533 = vadd.f32 0.0, %v1532
        %v1534 = vpop.f32.mrf.mxu0
        %1535 = vmatprep.mubr.f32.mxu0 0.0
        %1536 = vmatmul.mubr.f32.gmra.mxu0 %v1359
        %v1537 = vpop.f32.mrf.mxu0
        %v1538 = vadd.f32 0.0, %v1537
        %v1539 = vpop.f32.mrf.mxu0
        %1540 = vmatprep.mubr.f32.mxu0 0.0
        %1541 = vmatmul.mubr.f32.gmra.mxu0 %v1361
        %v1542 = vpop.f32.mrf.mxu0
        %v1543 = vadd.f32 0.0, %v1542
        %v1544 = vpop.f32.mrf.mxu0
        %1545 = vmatprep.mubr.f32.mxu0 0.0
        %1546 = vmatmul.mubr.f32.gmra.mxu0 %v1363
        %v1547 = vpop.f32.mrf.mxu0
        %v1548 = vadd.f32 0.0, %v1547
        %v1549 = vpop.f32.mrf.mxu0
        %1550 = vmatprep.mubr.f32.mxu0 0.0
        %1551 = vmatmul.mubr.f32.gmra.mxu0 %v1365
        %v1552 = vpop.f32.mrf.mxu0
        %v1553 = vadd.f32 0.0, %v1552
        %v1554 = vpop.f32.mrf.mxu0
        %1555 = vmatprep.mubr.f32.mxu0 0.0
        %1556 = vmatmul.mubr.f32.gmra.mxu0 %v1367
        %v1557 = vpop.f32.mrf.mxu0
        %v1558 = vadd.f32 0.0, %v1557
        %v1559 = vpop.f32.mrf.mxu0
        %1560 = vmatprep.mubr.f32.mxu0 0.0
        %1561 = vmatmul.mubr.f32.gmra.mxu0 %v1369
        %v1562 = vpop.f32.mrf.mxu0
        %v1563 = vadd.f32 0.0, %v1562
        %v1564 = vpop.f32.mrf.mxu0
        %1565 = vmatprep.mubr.f32.mxu0 0.0
        %1566 = vmatmul.mubr.f32.gmra.mxu0 %v1371
        %v1567 = vpop.f32.mrf.mxu0
        %v1568 = vadd.f32 0.0, %v1567
        %v1569 = vpop.f32.mrf.mxu0
        %1570 = vmatprep.mubr.f32.mxu0 0.0
        %1571 = vmatmul.mubr.f32.gmra.mxu0 %v1373
        %v1572 = vpop.f32.mrf.mxu0
        %v1573 = vadd.f32 0.0, %v1572
        %v1574 = vpop.f32.mrf.mxu0
        %1575 = vmatprep.mubr.f32.mxu0 0.0
        %1576 = vmatmul.mubr.f32.gmra.mxu0 %v1375
        %v1577 = vpop.f32.mrf.mxu0
        %v1578 = vadd.f32 0.0, %v1577
        %v1579 = vpop.f32.mrf.mxu0
        %1580 = vmatprep.mubr.f32.mxu0 0.0
        %1581 = vmatmul.mubr.f32.gmra.mxu0 %v1377
        %v1582 = vpop.f32.mrf.mxu0
        %v1583 = vadd.f32 0.0, %v1582
        %v1584 = vpop.f32.mrf.mxu0
        %1585 = vmatprep.mubr.f32.mxu0 0.0
        %1586 = vmatmul.mubr.f32.gmra.mxu0 %v1379
        %v1587 = vpop.f32.mrf.mxu0
        %v1588 = vadd.f32 0.0, %v1587
        %v1589 = vpop.f32.mrf.mxu0
        %1590 = vmatprep.mubr.f32.mxu0 0.0
        %1591 = vmatmul.mubr.f32.gmra.mxu0 %v1381
        %v1592 = vpop.f32.mrf.mxu0
        %v1593 = vadd.f32 0.0, %v1592
        %v1594 = vpop.f32.mrf.mxu0
        %1595 = vmatprep.mubr.f32.mxu0 0.0
        %1596 = vmatmul.mubr.f32.gmra.mxu0 %v1383
        %v1597 = vpop.f32.mrf.mxu0
        %v1598 = vadd.f32 0.0, %v1597
        %v1599 = vpop.f32.mrf.mxu0
        %1600 = vmatprep.mubr.f32.mxu0 0.0
        %1601 = vmatmul.mubr.f32.gmra.mxu0 %v1385
        %v1602 = vpop.f32.mrf.mxu0
        %v1603 = vadd.f32 0.0, %v1602
        %v1604 = vpop.f32.mrf.mxu0
        %1605 = vmatprep.mubr.f32.mxu0 0.0
        %1606 = vmatmul.mubr.f32.gmra.mxu0 %v1387
        %v1607 = vpop.f32.mrf.mxu0
        %v1608 = vadd.f32 0.0, %v1607
        %v1609 = vpop.f32.mrf.mxu0
        %1610 = vmatprep.mubr.f32.mxu0 0.0
        %1611 = vmatmul.mubr.f32.gmra.mxu0 %v1389
        %v1612 = vpop.f32.mrf.mxu0
        %v1613 = vadd.f32 0.0, %v1612
        %v1614 = vpop.f32.mrf.mxu0
        %1615 = vdwg.mxu0
        %v1616 = vadd.f32 %v1186, %v1458
        %v1617 = vadd.f32 %v1187, %v1463
        %v1618 = vadd.f32 %v1188, %v1468
        %v1619 = vadd.f32 %v1189, %v1473
        %v1620 = vadd.f32 %v1190, %v1478
        %v1621 = vadd.f32 %v1191, %v1483
        %v1622 = vadd.f32 %v1192, %v1488
        %v1623 = vadd.f32 %v1193, %v1493
        %v1624 = vadd.f32 %v1194, %v1498
        %v1625 = vadd.f32 %v1195, %v1503
        %v1626 = vadd.f32 %v1196, %v1508
        %v1627 = vadd.f32 %v1197, %v1513
        %v1628 = vadd.f32 %v1198, %v1518
        %v1629 = vadd.f32 %v1199, %v1523
        %v1630 = vadd.f32 %v1200, %v1528
        %v1631 = vadd.f32 %v1201, %v1533
        %v1632 = vadd.f32 %v1202, %v1538
        %v1633 = vadd.f32 %v1203, %v1543
        %v1634 = vadd.f32 %v1204, %v1548
        %v1635 = vadd.f32 %v1205, %v1553
        %v1636 = vadd.f32 %v1206, %v1558
        %v1637 = vadd.f32 %v1207, %v1563
        %v1638 = vadd.f32 %v1208, %v1568
        %v1639 = vadd.f32 %v1209, %v1573
        %v1640 = vadd.f32 %v1210, %v1578
        %v1641 = vadd.f32 %v1211, %v1583
        %v1642 = vadd.f32 %v1212, %v1588
        %v1643 = vadd.f32 %v1213, %v1593
        %v1644 = vadd.f32 %v1214, %v1598
        %v1645 = vadd.f32 %v1215, %v1603
        %v1646 = vadd.f32 %v1216, %v1608
        %v1647 = vadd.f32 %v1217, %v1613
        %v1648 = vsel %vm191, %v1319, 0
        %v1650 = vsel %vm191, %v1321, 0
        %1652 = vmatprep.subr.mxu0 0.0
        %1653 = vmatpush1.msra.mxu0 0.0
        %1654 = vmatprep.subr.mxu0 0.0
        %1655 = vmatpush1.msra.mxu0 0.0
        %1656 = vmatprep.subr.mxu0 0.0
        %1657 = vmatpush1.msra.mxu0 0.0
        %1658 = vmatprep.subr.mxu0 0.0
        %1659 = vmatpush1.msra.mxu0 0.0
        %1660 = vmatprep.subr.mxu0 0.0
        %1661 = vmatpush1.msra.mxu0 0.0
        %1662 = vmatprep.subr.mxu0 0.0
        %1663 = vmatpush1.msra.mxu0 0.0
        %1664 = vmatprep.subr.mxu0 0.0
        %1665 = vmatpush1.msra.mxu0 0.0
        %1666 = vmatprep.subr.mxu0 0.0
        %1667 = vmatpush1.msra.mxu0 0.0
        %1668 = vmatprep.subr.mxu0 0.0
        %1669 = vmatpush1.msra.mxu0 0.0
        %1670 = vmatprep.subr.mxu0 0.0
        %1671 = vmatpush1.msra.mxu0 0.0
        %1672 = vmatprep.subr.mxu0 0.0
        %1673 = vmatpush1.msra.mxu0 0.0
        %1674 = vmatprep.subr.mxu0 0.0
        %1675 = vmatpush1.msra.mxu0 0.0
        %1676 = vmatprep.subr.mxu0 0.0
        %1677 = vmatpush1.msra.mxu0 %v385
        %1678 = vmatprep.subr.mxu0 0.0
        %1679 = vmatpush1.msra.mxu0 %v384
        %1680 = vmatprep.subr.mxu0 0.0
        %1681 = vmatpush1.msra.mxu0 %v383
        %1682 = vmatprep.subr.mxu0 0.0
        %1683 = vmatpush1.msra.mxu0 %v382
        %1684 = vmatprep.subr.mxu0 0.0
        %1685 = vmatpush2.msra.mxu0 0.0
        %1686 = vmatprep.subr.mxu0 0.0
        %1687 = vmatpush2.msra.mxu0 0.0
        %1688 = vmatprep.subr.mxu0 0.0
        %1689 = vmatpush2.msra.mxu0 0.0
        %1690 = vmatprep.subr.mxu0 0.0
        %1691 = vmatpush2.msra.mxu0 0.0
        %1692 = vmatprep.subr.mxu0 0.0
        %1693 = vmatpush2.msra.mxu0 0.0
        %1694 = vmatprep.subr.mxu0 0.0
        %1695 = vmatpush2.msra.mxu0 0.0
        %1696 = vmatprep.subr.mxu0 0.0
        %1697 = vmatpush2.msra.mxu0 0.0
        %1698 = vmatprep.subr.mxu0 0.0
        %1699 = vmatpush2.msra.mxu0 0.0
        %1700 = vmatprep.subr.mxu0 0.0
        %1701 = vmatpush2.msra.mxu0 0.0
        %1702 = vmatprep.subr.mxu0 0.0
        %1703 = vmatpush2.msra.mxu0 0.0
        %1704 = vmatprep.subr.mxu0 0.0
        %1705 = vmatpush2.msra.mxu0 0.0
        %1706 = vmatprep.subr.mxu0 0.0
        %1707 = vmatpush2.msra.mxu0 0.0
        %1708 = vmatprep.subr.mxu0 0.0
        %1709 = vmatpush2.msra.mxu0 0.0
        %1710 = vmatprep.subr.mxu0 0.0
        %1711 = vmatpush2.msra.mxu0 0.0
        %1712 = vmatprep.subr.mxu0 0.0
        %1713 = vmatpush2.msra.mxu0 0.0
        %1714 = vmatprep.subr.mxu0 0.0
        %1715 = vmatpush2.msra.mxu0 0.0
        %1716 = vmatprep.mubr.f32.mxu0 0.0
        %1717 = vmatmul.mubr.f32.gmra.mxu0 %v1331
        %v1718 = vpop.f32.mrf.mxu0
        %v1719 = vadd.f32 0.0, %v1718
        %v1720 = vpop.f32.mrf.mxu0
        %1721 = vmatprep.mubr.f32.mxu0 0.0
        %1722 = vmatmul.mubr.f32.gmra.mxu0 %v1333
        %v1723 = vpop.f32.mrf.mxu0
        %v1724 = vadd.f32 0.0, %v1723
        %v1725 = vpop.f32.mrf.mxu0
        %1726 = vmatprep.mubr.f32.mxu0 0.0
        %1727 = vmatmul.mubr.f32.gmra.mxu0 %v1335
        %v1728 = vpop.f32.mrf.mxu0
        %v1729 = vadd.f32 0.0, %v1728
        %v1730 = vpop.f32.mrf.mxu0
        %1731 = vmatprep.mubr.f32.mxu0 0.0
        %1732 = vmatmul.mubr.f32.gmra.mxu0 %v1337
        %v1733 = vpop.f32.mrf.mxu0
        %v1734 = vadd.f32 0.0, %v1733
        %v1735 = vpop.f32.mrf.mxu0
        %1736 = vmatprep.mubr.f32.mxu0 0.0
        %1737 = vmatmul.mubr.f32.gmra.mxu0 %v1339
        %v1738 = vpop.f32.mrf.mxu0
        %v1739 = vadd.f32 0.0, %v1738
        %v1740 = vpop.f32.mrf.mxu0
        %1741 = vmatprep.mubr.f32.mxu0 0.0
        %1742 = vmatmul.mubr.f32.gmra.mxu0 %v1341
        %v1743 = vpop.f32.mrf.mxu0
        %v1744 = vadd.f32 0.0, %v1743
        %v1745 = vpop.f32.mrf.mxu0
        %1746 = vmatprep.mubr.f32.mxu0 0.0
        %1747 = vmatmul.mubr.f32.gmra.mxu0 %v1343
        %v1748 = vpop.f32.mrf.mxu0
        %v1749 = vadd.f32 0.0, %v1748
        %v1750 = vpop.f32.mrf.mxu0
        %1751 = vmatprep.mubr.f32.mxu0 0.0
        %1752 = vmatmul.mubr.f32.gmra.mxu0 %v1345
        %v1753 = vpop.f32.mrf.mxu0
        %v1754 = vadd.f32 0.0, %v1753
        %v1755 = vpop.f32.mrf.mxu0
        %1756 = vmatprep.mubr.f32.mxu0 0.0
        %1757 = vmatmul.mubr.f32.gmra.mxu0 %v1347
        %v1758 = vpop.f32.mrf.mxu0
        %v1759 = vadd.f32 0.0, %v1758
        %v1760 = vpop.f32.mrf.mxu0
        %1761 = vmatprep.mubr.f32.mxu0 0.0
        %1762 = vmatmul.mubr.f32.gmra.mxu0 %v1349
        %v1763 = vpop.f32.mrf.mxu0
        %v1764 = vadd.f32 0.0, %v1763
        %v1765 = vpop.f32.mrf.mxu0
        %1766 = vmatprep.mubr.f32.mxu0 0.0
        %1767 = vmatmul.mubr.f32.gmra.mxu0 %v1351
        %v1768 = vpop.f32.mrf.mxu0
        %v1769 = vadd.f32 0.0, %v1768
        %v1770 = vpop.f32.mrf.mxu0
        %1771 = vmatprep.mubr.f32.mxu0 0.0
        %1772 = vmatmul.mubr.f32.gmra.mxu0 %v1353
        %v1773 = vpop.f32.mrf.mxu0
        %v1774 = vadd.f32 0.0, %v1773
        %v1775 = vpop.f32.mrf.mxu0
        %1776 = vmatprep.mubr.f32.mxu0 0.0
        %1777 = vmatmul.mubr.f32.gmra.mxu0 %v1355
        %v1778 = vpop.f32.mrf.mxu0
        %v1779 = vadd.f32 0.0, %v1778
        %v1780 = vpop.f32.mrf.mxu0
        %1781 = vmatprep.mubr.f32.mxu0 0.0
        %1782 = vmatmul.mubr.f32.gmra.mxu0 %v1357
        %v1783 = vpop.f32.mrf.mxu0
        %v1784 = vadd.f32 0.0, %v1783
        %v1785 = vpop.f32.mrf.mxu0
        %1786 = vmatprep.mubr.f32.mxu0 0.0
        %1787 = vmatmul.mubr.f32.gmra.mxu0 %v1359
        %v1788 = vpop.f32.mrf.mxu0
        %v1789 = vadd.f32 0.0, %v1788
        %v1790 = vpop.f32.mrf.mxu0
        %1791 = vmatprep.mubr.f32.mxu0 0.0
        %1792 = vmatmul.mubr.f32.gmra.mxu0 %v1361
        %v1793 = vpop.f32.mrf.mxu0
        %v1794 = vadd.f32 0.0, %v1793
        %v1795 = vpop.f32.mrf.mxu0
        %1796 = vmatprep.mubr.f32.mxu0 0.0
        %1797 = vmatmul.mubr.f32.gmra.mxu0 %v1363
        %v1798 = vpop.f32.mrf.mxu0
        %v1799 = vadd.f32 0.0, %v1798
        %v1800 = vpop.f32.mrf.mxu0
        %1801 = vmatprep.mubr.f32.mxu0 0.0
        %1802 = vmatmul.mubr.f32.gmra.mxu0 %v1365
        %v1803 = vpop.f32.mrf.mxu0
        %v1804 = vadd.f32 0.0, %v1803
        %v1805 = vpop.f32.mrf.mxu0
        %1806 = vmatprep.mubr.f32.mxu0 0.0
        %1807 = vmatmul.mubr.f32.gmra.mxu0 %v1367
        %v1808 = vpop.f32.mrf.mxu0
        %v1809 = vadd.f32 0.0, %v1808
        %v1810 = vpop.f32.mrf.mxu0
        %1811 = vmatprep.mubr.f32.mxu0 0.0
        %1812 = vmatmul.mubr.f32.gmra.mxu0 %v1369
        %v1813 = vpop.f32.mrf.mxu0
        %v1814 = vadd.f32 0.0, %v1813
        %v1815 = vpop.f32.mrf.mxu0
        %1816 = vmatprep.mubr.f32.mxu0 0.0
        %1817 = vmatmul.mubr.f32.gmra.mxu0 %v1371
        %v1818 = vpop.f32.mrf.mxu0
        %v1819 = vadd.f32 0.0, %v1818
        %v1820 = vpop.f32.mrf.mxu0
        %1821 = vmatprep.mubr.f32.mxu0 0.0
        %1822 = vmatmul.mubr.f32.gmra.mxu0 %v1373
        %v1823 = vpop.f32.mrf.mxu0
        %v1824 = vadd.f32 0.0, %v1823
        %v1825 = vpop.f32.mrf.mxu0
        %1826 = vmatprep.mubr.f32.mxu0 0.0
        %1827 = vmatmul.mubr.f32.gmra.mxu0 %v1375
        %v1828 = vpop.f32.mrf.mxu0
        %v1829 = vadd.f32 0.0, %v1828
        %v1830 = vpop.f32.mrf.mxu0
        %1831 = vmatprep.mubr.f32.mxu0 0.0
        %1832 = vmatmul.mubr.f32.gmra.mxu0 %v1377
        %v1833 = vpop.f32.mrf.mxu0
        %v1834 = vadd.f32 0.0, %v1833
        %v1835 = vpop.f32.mrf.mxu0
        %1836 = vmatprep.mubr.f32.mxu0 0.0
        %1837 = vmatmul.mubr.f32.gmra.mxu0 %v1379
        %v1838 = vpop.f32.mrf.mxu0
        %v1839 = vadd.f32 0.0, %v1838
        %v1840 = vpop.f32.mrf.mxu0
        %1841 = vmatprep.mubr.f32.mxu0 0.0
        %1842 = vmatmul.mubr.f32.gmra.mxu0 %v1381
        %v1843 = vpop.f32.mrf.mxu0
        %v1844 = vadd.f32 0.0, %v1843
        %v1845 = vpop.f32.mrf.mxu0
        %1846 = vmatprep.mubr.f32.mxu0 0.0
        %1847 = vmatmul.mubr.f32.gmra.mxu0 %v1383
        %v1848 = vpop.f32.mrf.mxu0
        %v1849 = vadd.f32 0.0, %v1848
        %v1850 = vpop.f32.mrf.mxu0
        %1851 = vmatprep.mubr.f32.mxu0 0.0
        %1852 = vmatmul.mubr.f32.gmra.mxu0 %v1385
        %v1853 = vpop.f32.mrf.mxu0
        %v1854 = vadd.f32 0.0, %v1853
        %v1855 = vpop.f32.mrf.mxu0
        %1856 = vmatprep.mubr.f32.mxu0 0.0
        %1857 = vmatmul.mubr.f32.gmra.mxu0 %v1387
        %v1858 = vpop.f32.mrf.mxu0
        %v1859 = vadd.f32 0.0, %v1858
        %v1860 = vpop.f32.mrf.mxu0
        %1861 = vmatprep.mubr.f32.mxu0 0.0
        %1862 = vmatmul.mubr.f32.gmra.mxu0 %v1389
        %v1863 = vpop.f32.mrf.mxu0
        %v1864 = vadd.f32 0.0, %v1863
        %v1865 = vpop.f32.mrf.mxu0
        %1866 = vmatprep.mubr.f32.mxu0 0.0
        %1867 = vmatmul.mubr.f32.gmra.mxu0 %v1648
        %v1868 = vpop.f32.mrf.mxu0
        %v1869 = vadd.f32 0.0, %v1868
        %v1870 = vpop.f32.mrf.mxu0
        %1871 = vmatprep.mubr.f32.mxu0 0.0
        %1872 = vmatmul.mubr.f32.gmra.mxu0 %v1650
        %v1873 = vpop.f32.mrf.mxu0
        %v1874 = vadd.f32 0.0, %v1873
        %v1875 = vpop.f32.mrf.mxu0
        %1876 = vdwg.mxu0
        %v1877 = vadd.f32 %v1616, %v1719
        %v1878 = vadd.f32 %v1617, %v1724
        %v1879 = vadd.f32 %v1618, %v1729
        %v1880 = vadd.f32 %v1619, %v1734
        %v1881 = vadd.f32 %v1620, %v1739
        %v1882 = vadd.f32 %v1621, %v1744
        %v1883 = vadd.f32 %v1622, %v1749
        %v1884 = vadd.f32 %v1623, %v1754
        %v1885 = vadd.f32 %v1624, %v1759
        %v1886 = vadd.f32 %v1625, %v1764
        %v1887 = vadd.f32 %v1626, %v1769
        %v1888 = vadd.f32 %v1627, %v1774
        %v1889 = vadd.f32 %v1628, %v1779
        %v1890 = vadd.f32 %v1629, %v1784
        %v1891 = vadd.f32 %v1630, %v1789
        %v1892 = vadd.f32 %v1631, %v1794
        %v1893 = vadd.f32 %v1632, %v1799
        %v1894 = vadd.f32 %v1633, %v1804
        %v1895 = vadd.f32 %v1634, %v1809
        %v1896 = vadd.f32 %v1635, %v1814
        %v1897 = vadd.f32 %v1636, %v1819
        %v1898 = vadd.f32 %v1637, %v1824
        %v1899 = vadd.f32 %v1638, %v1829
        %v1900 = vadd.f32 %v1639, %v1834
        %v1901 = vadd.f32 %v1640, %v1839
        %v1902 = vadd.f32 %v1641, %v1844
        %v1903 = vadd.f32 %v1642, %v1849
        %v1904 = vadd.f32 %v1643, %v1854
        %v1905 = vadd.f32 %v1644, %v1859
        %v1906 = vadd.f32 %v1645, %v1864
        %v1907 = vadd.f32 %v1646, %v1869
        %v1908 = vadd.f32 %v1647, %v1874
        %v1909 = vsel %vm191, %v1324, 0
        %v1911 = vsel %vm191, %v1326, 0
        %1913 = vmatprep.subr.mxu0 0.0
        %1914 = vmatpush1.msra.mxu0 0.0
        %1915 = vmatprep.subr.mxu0 0.0
        %1916 = vmatpush1.msra.mxu0 0.0
        %1917 = vmatprep.subr.mxu0 0.0
        %1918 = vmatpush1.msra.mxu0 0.0
        %1919 = vmatprep.subr.mxu0 0.0
        %1920 = vmatpush1.msra.mxu0 0.0
        %1921 = vmatprep.subr.mxu0 0.0
        %1922 = vmatpush1.msra.mxu0 0.0
        %1923 = vmatprep.subr.mxu0 0.0
        %1924 = vmatpush1.msra.mxu0 0.0
        %1925 = vmatprep.subr.mxu0 0.0
        %1926 = vmatpush1.msra.mxu0 0.0
        %1927 = vmatprep.subr.mxu0 0.0
        %1928 = vmatpush1.msra.mxu0 0.0
        %1929 = vmatprep.subr.mxu0 0.0
        %1930 = vmatpush1.msra.mxu0 0.0
        %1931 = vmatprep.subr.mxu0 0.0
        %1932 = vmatpush1.msra.mxu0 0.0
        %1933 = vmatprep.subr.mxu0 0.0
        %1934 = vmatpush1.msra.mxu0 0.0
        %1935 = vmatprep.subr.mxu0 0.0
        %1936 = vmatpush1.msra.mxu0 0.0
        %1937 = vmatprep.subr.mxu0 0.0
        %1938 = vmatpush1.msra.mxu0 %v397
        %1939 = vmatprep.subr.mxu0 0.0
        %1940 = vmatpush1.msra.mxu0 %v396
        %1941 = vmatprep.subr.mxu0 0.0
        %1942 = vmatpush1.msra.mxu0 %v395
        %1943 = vmatprep.subr.mxu0 0.0
        %1944 = vmatpush1.msra.mxu0 %v394
        %1945 = vmatprep.subr.mxu0 0.0
        %1946 = vmatpush2.msra.mxu0 0.0
        %1947 = vmatprep.subr.mxu0 0.0
        %1948 = vmatpush2.msra.mxu0 0.0
        %1949 = vmatprep.subr.mxu0 0.0
        %1950 = vmatpush2.msra.mxu0 0.0
        %1951 = vmatprep.subr.mxu0 0.0
        %1952 = vmatpush2.msra.mxu0 0.0
        %1953 = vmatprep.subr.mxu0 0.0
        %1954 = vmatpush2.msra.mxu0 0.0
        %1955 = vmatprep.subr.mxu0 0.0
        %1956 = vmatpush2.msra.mxu0 0.0
        %1957 = vmatprep.subr.mxu0 0.0
        %1958 = vmatpush2.msra.mxu0 0.0
        %1959 = vmatprep.subr.mxu0 0.0
        %1960 = vmatpush2.msra.mxu0 0.0
        %1961 = vmatprep.subr.mxu0 0.0
        %1962 = vmatpush2.msra.mxu0 0.0
        %1963 = vmatprep.subr.mxu0 0.0
        %1964 = vmatpush2.msra.mxu0 0.0
        %1965 = vmatprep.subr.mxu0 0.0
        %1966 = vmatpush2.msra.mxu0 0.0
        %1967 = vmatprep.subr.mxu0 0.0
        %1968 = vmatpush2.msra.mxu0 0.0
        %1969 = vmatprep.subr.mxu0 0.0
        %1970 = vmatpush2.msra.mxu0 0.0
        %1971 = vmatprep.subr.mxu0 0.0
        %1972 = vmatpush2.msra.mxu0 0.0
        %1973 = vmatprep.subr.mxu0 0.0
        %1974 = vmatpush2.msra.mxu0 0.0
        %1975 = vmatprep.subr.mxu0 0.0
        %1976 = vmatpush2.msra.mxu0 0.0
        %1977 = vmatprep.mubr.f32.mxu0 0.0
        %1978 = vmatmul.mubr.f32.gmra.mxu0 %v1335
        %v1979 = vpop.f32.mrf.mxu0
        %v1980 = vadd.f32 0.0, %v1979
        %v1981 = vpop.f32.mrf.mxu0
        %1982 = vmatprep.mubr.f32.mxu0 0.0
        %1983 = vmatmul.mubr.f32.gmra.mxu0 %v1337
        %v1984 = vpop.f32.mrf.mxu0
        %v1985 = vadd.f32 0.0, %v1984
        %v1986 = vpop.f32.mrf.mxu0
        %1987 = vmatprep.mubr.f32.mxu0 0.0
        %1988 = vmatmul.mubr.f32.gmra.mxu0 %v1339
        %v1989 = vpop.f32.mrf.mxu0
        %v1990 = vadd.f32 0.0, %v1989
        %v1991 = vpop.f32.mrf.mxu0
        %1992 = vmatprep.mubr.f32.mxu0 0.0
        %1993 = vmatmul.mubr.f32.gmra.mxu0 %v1341
        %v1994 = vpop.f32.mrf.mxu0
        %v1995 = vadd.f32 0.0, %v1994
        %v1996 = vpop.f32.mrf.mxu0
        %1997 = vmatprep.mubr.f32.mxu0 0.0
        %1998 = vmatmul.mubr.f32.gmra.mxu0 %v1343
        %v1999 = vpop.f32.mrf.mxu0
        %v2000 = vadd.f32 0.0, %v1999
        %v2001 = vpop.f32.mrf.mxu0
        %2002 = vmatprep.mubr.f32.mxu0 0.0
        %2003 = vmatmul.mubr.f32.gmra.mxu0 %v1345
        %v2004 = vpop.f32.mrf.mxu0
        %v2005 = vadd.f32 0.0, %v2004
        %v2006 = vpop.f32.mrf.mxu0
        %2007 = vmatprep.mubr.f32.mxu0 0.0
        %2008 = vmatmul.mubr.f32.gmra.mxu0 %v1347
        %v2009 = vpop.f32.mrf.mxu0
        %v2010 = vadd.f32 0.0, %v2009
        %v2011 = vpop.f32.mrf.mxu0
        %2012 = vmatprep.mubr.f32.mxu0 0.0
        %2013 = vmatmul.mubr.f32.gmra.mxu0 %v1349
        %v2014 = vpop.f32.mrf.mxu0
        %v2015 = vadd.f32 0.0, %v2014
        %v2016 = vpop.f32.mrf.mxu0
        %2017 = vmatprep.mubr.f32.mxu0 0.0
        %2018 = vmatmul.mubr.f32.gmra.mxu0 %v1351
        %v2019 = vpop.f32.mrf.mxu0
        %v2020 = vadd.f32 0.0, %v2019
        %v2021 = vpop.f32.mrf.mxu0
        %2022 = vmatprep.mubr.f32.mxu0 0.0
        %2023 = vmatmul.mubr.f32.gmra.mxu0 %v1353
        %v2024 = vpop.f32.mrf.mxu0
        %v2025 = vadd.f32 0.0, %v2024
        %v2026 = vpop.f32.mrf.mxu0
        %2027 = vmatprep.mubr.f32.mxu0 0.0
        %2028 = vmatmul.mubr.f32.gmra.mxu0 %v1355
        %v2029 = vpop.f32.mrf.mxu0
        %v2030 = vadd.f32 0.0, %v2029
        %v2031 = vpop.f32.mrf.mxu0
        %2032 = vmatprep.mubr.f32.mxu0 0.0
        %2033 = vmatmul.mubr.f32.gmra.mxu0 %v1357
        %v2034 = vpop.f32.mrf.mxu0
        %v2035 = vadd.f32 0.0, %v2034
        %v2036 = vpop.f32.mrf.mxu0
        %2037 = vmatprep.mubr.f32.mxu0 0.0
        %2038 = vmatmul.mubr.f32.gmra.mxu0 %v1359
        %v2039 = vpop.f32.mrf.mxu0
        %v2040 = vadd.f32 0.0, %v2039
        %v2041 = vpop.f32.mrf.mxu0
        %2042 = vmatprep.mubr.f32.mxu0 0.0
        %2043 = vmatmul.mubr.f32.gmra.mxu0 %v1361
        %v2044 = vpop.f32.mrf.mxu0
        %v2045 = vadd.f32 0.0, %v2044
        %v2046 = vpop.f32.mrf.mxu0
        %2047 = vmatprep.mubr.f32.mxu0 0.0
        %2048 = vmatmul.mubr.f32.gmra.mxu0 %v1363
        %v2049 = vpop.f32.mrf.mxu0
        %v2050 = vadd.f32 0.0, %v2049
        %v2051 = vpop.f32.mrf.mxu0
        %2052 = vmatprep.mubr.f32.mxu0 0.0
        %2053 = vmatmul.mubr.f32.gmra.mxu0 %v1365
        %v2054 = vpop.f32.mrf.mxu0
        %v2055 = vadd.f32 0.0, %v2054
        %v2056 = vpop.f32.mrf.mxu0
        %2057 = vmatprep.mubr.f32.mxu0 0.0
        %2058 = vmatmul.mubr.f32.gmra.mxu0 %v1367
        %v2059 = vpop.f32.mrf.mxu0
        %v2060 = vadd.f32 0.0, %v2059
        %v2061 = vpop.f32.mrf.mxu0
        %2062 = vmatprep.mubr.f32.mxu0 0.0
        %2063 = vmatmul.mubr.f32.gmra.mxu0 %v1369
        %v2064 = vpop.f32.mrf.mxu0
        %v2065 = vadd.f32 0.0, %v2064
        %v2066 = vpop.f32.mrf.mxu0
        %2067 = vmatprep.mubr.f32.mxu0 0.0
        %2068 = vmatmul.mubr.f32.gmra.mxu0 %v1371
        %v2069 = vpop.f32.mrf.mxu0
        %v2070 = vadd.f32 0.0, %v2069
        %v2071 = vpop.f32.mrf.mxu0
        %2072 = vmatprep.mubr.f32.mxu0 0.0
        %2073 = vmatmul.mubr.f32.gmra.mxu0 %v1373
        %v2074 = vpop.f32.mrf.mxu0
        %v2075 = vadd.f32 0.0, %v2074
        %v2076 = vpop.f32.mrf.mxu0
        %2077 = vmatprep.mubr.f32.mxu0 0.0
        %2078 = vmatmul.mubr.f32.gmra.mxu0 %v1375
        %v2079 = vpop.f32.mrf.mxu0
        %v2080 = vadd.f32 0.0, %v2079
        %v2081 = vpop.f32.mrf.mxu0
        %2082 = vmatprep.mubr.f32.mxu0 0.0
        %2083 = vmatmul.mubr.f32.gmra.mxu0 %v1377
        %v2084 = vpop.f32.mrf.mxu0
        %v2085 = vadd.f32 0.0, %v2084
        %v2086 = vpop.f32.mrf.mxu0
        %2087 = vmatprep.mubr.f32.mxu0 0.0
        %2088 = vmatmul.mubr.f32.gmra.mxu0 %v1379
        %v2089 = vpop.f32.mrf.mxu0
        %v2090 = vadd.f32 0.0, %v2089
        %v2091 = vpop.f32.mrf.mxu0
        %2092 = vmatprep.mubr.f32.mxu0 0.0
        %2093 = vmatmul.mubr.f32.gmra.mxu0 %v1381
        %v2094 = vpop.f32.mrf.mxu0
        %v2095 = vadd.f32 0.0, %v2094
        %v2096 = vpop.f32.mrf.mxu0
        %2097 = vmatprep.mubr.f32.mxu0 0.0
        %2098 = vmatmul.mubr.f32.gmra.mxu0 %v1383
        %v2099 = vpop.f32.mrf.mxu0
        %v2100 = vadd.f32 0.0, %v2099
        %v2101 = vpop.f32.mrf.mxu0
        %2102 = vmatprep.mubr.f32.mxu0 0.0
        %2103 = vmatmul.mubr.f32.gmra.mxu0 %v1385
        %v2104 = vpop.f32.mrf.mxu0
        %v2105 = vadd.f32 0.0, %v2104
        %v2106 = vpop.f32.mrf.mxu0
        %2107 = vmatprep.mubr.f32.mxu0 0.0
        %2108 = vmatmul.mubr.f32.gmra.mxu0 %v1387
        %v2109 = vpop.f32.mrf.mxu0
        %v2110 = vadd.f32 0.0, %v2109
        %v2111 = vpop.f32.mrf.mxu0
        %2112 = vmatprep.mubr.f32.mxu0 0.0
        %2113 = vmatmul.mubr.f32.gmra.mxu0 %v1389
        %v2114 = vpop.f32.mrf.mxu0
        %v2115 = vadd.f32 0.0, %v2114
        %v2116 = vpop.f32.mrf.mxu0
        %2117 = vmatprep.mubr.f32.mxu0 0.0
        %2118 = vmatmul.mubr.f32.gmra.mxu0 %v1648
        %v2119 = vpop.f32.mrf.mxu0
        %v2120 = vadd.f32 0.0, %v2119
        %v2121 = vpop.f32.mrf.mxu0
        %2122 = vmatprep.mubr.f32.mxu0 0.0
        %2123 = vmatmul.mubr.f32.gmra.mxu0 %v1650
        %v2124 = vpop.f32.mrf.mxu0
        %v2125 = vadd.f32 0.0, %v2124
        %v2126 = vpop.f32.mrf.mxu0
        %2127 = vmatprep.mubr.f32.mxu0 0.0
        %2128 = vmatmul.mubr.f32.gmra.mxu0 %v1909
        %v2129 = vpop.f32.mrf.mxu0
        %v2130 = vadd.f32 0.0, %v2129
        %v2131 = vpop.f32.mrf.mxu0
        %2132 = vmatprep.mubr.f32.mxu0 0.0
        %2133 = vmatmul.mubr.f32.gmra.mxu0 %v1911
        %v2134 = vpop.f32.mrf.mxu0
        %v2135 = vadd.f32 0.0, %v2134
        %v2136 = vpop.f32.mrf.mxu0
        %2137 = vdwg.mxu0
        %v2138 = vadd.f32 %v1877, %v1980
        %v2139 = vadd.f32 %v1878, %v1985
        %v2140 = vadd.f32 %v1879, %v1990
        %v2141 = vadd.f32 %v1880, %v1995
        %v2142 = vadd.f32 %v1881, %v2000
        %v2143 = vadd.f32 %v1882, %v2005
        %v2144 = vadd.f32 %v1883, %v2010
        %v2145 = vadd.f32 %v1884, %v2015
        %v2146 = vadd.f32 %v1885, %v2020
        %v2147 = vadd.f32 %v1886, %v2025
        %v2148 = vadd.f32 %v1887, %v2030
        %v2149 = vadd.f32 %v1888, %v2035
        %v2150 = vadd.f32 %v1889, %v2040
        %v2151 = vadd.f32 %v1890, %v2045
        %v2152 = vadd.f32 %v1891, %v2050
        %v2153 = vadd.f32 %v1892, %v2055
        %v2154 = vadd.f32 %v1893, %v2060
        %v2155 = vadd.f32 %v1894, %v2065
        %v2156 = vadd.f32 %v1895, %v2070
        %v2157 = vadd.f32 %v1896, %v2075
        %v2158 = vadd.f32 %v1897, %v2080
        %v2159 = vadd.f32 %v1898, %v2085
        %v2160 = vadd.f32 %v1899, %v2090
        %v2161 = vadd.f32 %v1900, %v2095
        %v2162 = vadd.f32 %v1901, %v2100
        %v2163 = vadd.f32 %v1902, %v2105
        %v2164 = vadd.f32 %v1903, %v2110
        %v2165 = vadd.f32 %v1904, %v2115
        %v2166 = vadd.f32 %v1905, %v2120
        %v2167 = vadd.f32 %v1906, %v2125
        %v2168 = vadd.f32 %v1907, %v2130
        %v2169 = vadd.f32 %v1908, %v2135
        %vm2170 = vcmask 1045504
        %v2171 = vrot.slane %v312, 2
        %v2172 = vrot.slane %v313, 2
        %v2173 = vsel %vm2170, %v2171, %v2172
        %v2174 = vrot.slane %v314, 2
        %v2175 = vsel %vm2170, %v2172, %v2174
        %v2176 = vrot.slane %v315, 2
        %v2177 = vrot.slane %v316, 2
        %v2178 = vsel %vm2170, %v2176, %v2177
        %v2179 = vrot.slane %v317, 2
        %v2180 = vsel %vm2170, %v2177, %v2179
        %v2181 = vrot.slane %v318, 2
        %v2182 = vrot.slane %v319, 2
        %v2183 = vsel %vm2170, %v2181, %v2182
        %v2184 = vrot.slane %v320, 2
        %v2185 = vsel %vm2170, %v2182, %v2184
        %v2186 = vrot.slane %v321, 2
        %v2187 = vrot.slane %v322, 2
        %v2188 = vsel %vm2170, %v2186, %v2187
        %v2189 = vrot.slane %v323, 2
        %v2190 = vsel %vm2170, %v2187, %v2189
        %v2191 = vrot.slane %v324, 2
        %v2192 = vrot.slane %v325, 2
        %v2193 = vsel %vm2170, %v2191, %v2192
        %v2194 = vrot.slane %v326, 2
        %v2195 = vsel %vm2170, %v2192, %v2194
        %v2196 = vrot.slane %v327, 2
        %v2197 = vrot.slane %v328, 2
        %v2198 = vsel %vm2170, %v2196, %v2197
        %v2199 = vrot.slane %v329, 2
        %v2200 = vsel %vm2170, %v2197, %v2199
        %v2201 = vrot.slane %v330, 2
        %v2202 = vrot.slane %v331, 2
        %v2203 = vsel %vm2170, %v2201, %v2202
        %v2204 = vrot.slane %v332, 2
        %v2205 = vsel %vm2170, %v2202, %v2204
        %v2206 = vrot.slane %v333, 2
        %v2207 = vrot.slane %v334, 2
        %v2208 = vsel %vm2170, %v2206, %v2207
        %v2209 = vrot.slane %v335, 2
        %v2210 = vsel %vm2170, %v2207, %v2209
        %v2211 = vrot.slane %v336, 2
        %v2212 = vrot.slane %v337, 2
        %v2213 = vsel %vm2170, %v2211, %v2212
        %v2214 = vrot.slane %v338, 2
        %v2215 = vsel %vm2170, %v2212, %v2214
        %v2216 = vrot.slane %v339, 2
        %v2217 = vrot.slane %v340, 2
        %v2218 = vsel %vm2170, %v2216, %v2217
        %v2219 = vrot.slane %v341, 2
        %v2220 = vsel %vm2170, %v2217, %v2219
        %v2221 = vrot.slane %v342, 2
        %v2222 = vrot.slane %v343, 2
        %v2223 = vsel %vm2170, %v2221, %v2222
        %v2224 = vrot.slane %v344, 2
        %v2225 = vsel %vm2170, %v2222, %v2224
        %v2226 = vrot.slane %v345, 2
        %v2227 = vrot.slane %v346, 2
        %v2228 = vsel %vm2170, %v2226, %v2227
        %v2229 = vrot.slane %v347, 2
        %v2230 = vsel %vm2170, %v2227, %v2229
        %v2231 = vrot.slane %v348, 2
        %v2232 = vrot.slane %v349, 2
        %v2233 = vsel %vm2170, %v2231, %v2232
        %v2234 = vrot.slane %v350, 2
        %v2235 = vsel %vm2170, %v2232, %v2234
        %v2236 = vrot.slane %v351, 2
        %v2237 = vrot.slane %v352, 2
        %v2238 = vsel %vm2170, %v2236, %v2237
        %v2239 = vrot.slane %v353, 2
        %v2240 = vsel %vm2170, %v2237, %v2239
        %v2241 = vrot.slane %v354, 2
        %v2242 = vrot.slane %v355, 2
        %v2243 = vsel %vm2170, %v2241, %v2242
        %v2244 = vrot.slane %v356, 2
        %v2245 = vsel %vm2170, %v2242, %v2244
        %v2246 = vrot.slane %v357, 2
        %v2247 = vrot.slane %v358, 2
        %v2248 = vsel %vm2170, %v2246, %v2247
        %v2249 = vrot.slane %v359, 2
        %v2250 = vsel %vm2170, %v2247, %v2249
        %v2251 = vrot.slane %v360, 2
        %v2252 = vrot.slane %v361, 2
        %v2253 = vsel %vm2170, %v2251, %v2252
        %v2254 = vrot.slane %v362, 2
        %v2255 = vsel %vm2170, %v2252, %v2254
        %v2256 = vrot.slane %v363, 2
        %v2257 = vrot.slane %v364, 2
        %v2258 = vsel %vm2170, %v2256, %v2257
        %v2259 = vrot.slane %v365, 2
        %v2260 = vsel %vm2170, %v2257, %v2259
        %v2261 = vsel %vm191, %v2173, 0
        %v2263 = vsel %vm191, %v2175, 0
        %v2265 = vsel %vm191, %v2178, 0
        %v2267 = vsel %vm191, %v2180, 0
        %v2269 = vsel %vm191, %v2183, 0
        %v2271 = vsel %vm191, %v2185, 0
        %v2273 = vsel %vm191, %v2188, 0
        %v2275 = vsel %vm191, %v2190, 0
        %v2277 = vsel %vm191, %v2193, 0
        %v2279 = vsel %vm191, %v2195, 0
        %v2281 = vsel %vm191, %v2198, 0
        %v2283 = vsel %vm191, %v2200, 0
        %v2285 = vsel %vm191, %v2203, 0
        %v2287 = vsel %vm191, %v2205, 0
        %v2289 = vsel %vm191, %v2208, 0
        %v2291 = vsel %vm191, %v2210, 0
        %v2293 = vsel %vm191, %v2213, 0
        %v2295 = vsel %vm191, %v2215, 0
        %v2297 = vsel %vm191, %v2218, 0
        %v2299 = vsel %vm191, %v2220, 0
        %v2301 = vsel %vm191, %v2223, 0
        %v2303 = vsel %vm191, %v2225, 0
        %v2305 = vsel %vm191, %v2228, 0
        %v2307 = vsel %vm191, %v2230, 0
        %v2309 = vsel %vm191, %v2233, 0
        %v2311 = vsel %vm191, %v2235, 0
        %v2313 = vsel %vm191, %v2238, 0
        %v2315 = vsel %vm191, %v2240, 0
        %v2317 = vsel %vm191, %v2243, 0
        %v2319 = vsel %vm191, %v2245, 0
        %v2321 = vsel %vm191, %v2248, 0
        %v2323 = vsel %vm191, %v2250, 0
        %2325 = vmatprep.subr.mxu0 0.0
        %2326 = vmatpush1.msra.mxu0 0.0
        %2327 = vmatprep.subr.mxu0 0.0
        %2328 = vmatpush1.msra.mxu0 0.0
        %2329 = vmatprep.subr.mxu0 0.0
        %2330 = vmatpush1.msra.mxu0 0.0
        %2331 = vmatprep.subr.mxu0 0.0
        %2332 = vmatpush1.msra.mxu0 0.0
        %2333 = vmatprep.subr.mxu0 0.0
        %2334 = vmatpush1.msra.mxu0 0.0
        %2335 = vmatprep.subr.mxu0 0.0
        %2336 = vmatpush1.msra.mxu0 0.0
        %2337 = vmatprep.subr.mxu0 0.0
        %2338 = vmatpush1.msra.mxu0 0.0
        %2339 = vmatprep.subr.mxu0 0.0
        %2340 = vmatpush1.msra.mxu0 0.0
        %2341 = vmatprep.subr.mxu0 0.0
        %2342 = vmatpush1.msra.mxu0 0.0
        %2343 = vmatprep.subr.mxu0 0.0
        %2344 = vmatpush1.msra.mxu0 0.0
        %2345 = vmatprep.subr.mxu0 0.0
        %2346 = vmatpush1.msra.mxu0 0.0
        %2347 = vmatprep.subr.mxu0 0.0
        %2348 = vmatpush1.msra.mxu0 0.0
        %2349 = vmatprep.subr.mxu0 0.0
        %2350 = vmatpush1.msra.mxu0 %v377
        %2351 = vmatprep.subr.mxu0 0.0
        %2352 = vmatpush1.msra.mxu0 %v376
        %2353 = vmatprep.subr.mxu0 0.0
        %2354 = vmatpush1.msra.mxu0 %v375
        %2355 = vmatprep.subr.mxu0 0.0
        %2356 = vmatpush1.msra.mxu0 %v374
        %2357 = vmatprep.subr.mxu0 0.0
        %2358 = vmatpush2.msra.mxu0 0.0
        %2359 = vmatprep.subr.mxu0 0.0
        %2360 = vmatpush2.msra.mxu0 0.0
        %2361 = vmatprep.subr.mxu0 0.0
        %2362 = vmatpush2.msra.mxu0 0.0
        %2363 = vmatprep.subr.mxu0 0.0
        %2364 = vmatpush2.msra.mxu0 0.0
        %2365 = vmatprep.subr.mxu0 0.0
        %2366 = vmatpush2.msra.mxu0 0.0
        %2367 = vmatprep.subr.mxu0 0.0
        %2368 = vmatpush2.msra.mxu0 0.0
        %2369 = vmatprep.subr.mxu0 0.0
        %2370 = vmatpush2.msra.mxu0 0.0
        %2371 = vmatprep.subr.mxu0 0.0
        %2372 = vmatpush2.msra.mxu0 0.0
        %2373 = vmatprep.subr.mxu0 0.0
        %2374 = vmatpush2.msra.mxu0 0.0
        %2375 = vmatprep.subr.mxu0 0.0
        %2376 = vmatpush2.msra.mxu0 0.0
        %2377 = vmatprep.subr.mxu0 0.0
        %2378 = vmatpush2.msra.mxu0 0.0
        %2379 = vmatprep.subr.mxu0 0.0
        %2380 = vmatpush2.msra.mxu0 0.0
        %2381 = vmatprep.subr.mxu0 0.0
        %2382 = vmatpush2.msra.mxu0 0.0
        %2383 = vmatprep.subr.mxu0 0.0
        %2384 = vmatpush2.msra.mxu0 0.0
        %2385 = vmatprep.subr.mxu0 0.0
        %2386 = vmatpush2.msra.mxu0 0.0
        %2387 = vmatprep.subr.mxu0 0.0
        %2388 = vmatpush2.msra.mxu0 0.0
        %2389 = vmatprep.mubr.f32.mxu0 0.0
        %2390 = vmatmul.mubr.f32.gmra.mxu0 %v2261
        %v2391 = vpop.f32.mrf.mxu0
        %v2392 = vadd.f32 0.0, %v2391
        %v2393 = vpop.f32.mrf.mxu0
        %2394 = vmatprep.mubr.f32.mxu0 0.0
        %2395 = vmatmul.mubr.f32.gmra.mxu0 %v2263
        %v2396 = vpop.f32.mrf.mxu0
        %v2397 = vadd.f32 0.0, %v2396
        %v2398 = vpop.f32.mrf.mxu0
        %2399 = vmatprep.mubr.f32.mxu0 0.0
        %2400 = vmatmul.mubr.f32.gmra.mxu0 %v2265
        %v2401 = vpop.f32.mrf.mxu0
        %v2402 = vadd.f32 0.0, %v2401
        %v2403 = vpop.f32.mrf.mxu0
        %2404 = vmatprep.mubr.f32.mxu0 0.0
        %2405 = vmatmul.mubr.f32.gmra.mxu0 %v2267
        %v2406 = vpop.f32.mrf.mxu0
        %v2407 = vadd.f32 0.0, %v2406
        %v2408 = vpop.f32.mrf.mxu0
        %2409 = vmatprep.mubr.f32.mxu0 0.0
        %2410 = vmatmul.mubr.f32.gmra.mxu0 %v2269
        %v2411 = vpop.f32.mrf.mxu0
        %v2412 = vadd.f32 0.0, %v2411
        %v2413 = vpop.f32.mrf.mxu0
        %2414 = vmatprep.mubr.f32.mxu0 0.0
        %2415 = vmatmul.mubr.f32.gmra.mxu0 %v2271
        %v2416 = vpop.f32.mrf.mxu0
        %v2417 = vadd.f32 0.0, %v2416
        %v2418 = vpop.f32.mrf.mxu0
        %2419 = vmatprep.mubr.f32.mxu0 0.0
        %2420 = vmatmul.mubr.f32.gmra.mxu0 %v2273
        %v2421 = vpop.f32.mrf.mxu0
        %v2422 = vadd.f32 0.0, %v2421
        %v2423 = vpop.f32.mrf.mxu0
        %2424 = vmatprep.mubr.f32.mxu0 0.0
        %2425 = vmatmul.mubr.f32.gmra.mxu0 %v2275
        %v2426 = vpop.f32.mrf.mxu0
        %v2427 = vadd.f32 0.0, %v2426
        %v2428 = vpop.f32.mrf.mxu0
        %2429 = vmatprep.mubr.f32.mxu0 0.0
        %2430 = vmatmul.mubr.f32.gmra.mxu0 %v2277
        %v2431 = vpop.f32.mrf.mxu0
        %v2432 = vadd.f32 0.0, %v2431
        %v2433 = vpop.f32.mrf.mxu0
        %2434 = vmatprep.mubr.f32.mxu0 0.0
        %2435 = vmatmul.mubr.f32.gmra.mxu0 %v2279
        %v2436 = vpop.f32.mrf.mxu0
        %v2437 = vadd.f32 0.0, %v2436
        %v2438 = vpop.f32.mrf.mxu0
        %2439 = vmatprep.mubr.f32.mxu0 0.0
        %2440 = vmatmul.mubr.f32.gmra.mxu0 %v2281
        %v2441 = vpop.f32.mrf.mxu0
        %v2442 = vadd.f32 0.0, %v2441
        %v2443 = vpop.f32.mrf.mxu0
        %2444 = vmatprep.mubr.f32.mxu0 0.0
        %2445 = vmatmul.mubr.f32.gmra.mxu0 %v2283
        %v2446 = vpop.f32.mrf.mxu0
        %v2447 = vadd.f32 0.0, %v2446
        %v2448 = vpop.f32.mrf.mxu0
        %2449 = vmatprep.mubr.f32.mxu0 0.0
        %2450 = vmatmul.mubr.f32.gmra.mxu0 %v2285
        %v2451 = vpop.f32.mrf.mxu0
        %v2452 = vadd.f32 0.0, %v2451
        %v2453 = vpop.f32.mrf.mxu0
        %2454 = vmatprep.mubr.f32.mxu0 0.0
        %2455 = vmatmul.mubr.f32.gmra.mxu0 %v2287
        %v2456 = vpop.f32.mrf.mxu0
        %v2457 = vadd.f32 0.0, %v2456
        %v2458 = vpop.f32.mrf.mxu0
        %2459 = vmatprep.mubr.f32.mxu0 0.0
        %2460 = vmatmul.mubr.f32.gmra.mxu0 %v2289
        %v2461 = vpop.f32.mrf.mxu0
        %v2462 = vadd.f32 0.0, %v2461
        %v2463 = vpop.f32.mrf.mxu0
        %2464 = vmatprep.mubr.f32.mxu0 0.0
        %2465 = vmatmul.mubr.f32.gmra.mxu0 %v2291
        %v2466 = vpop.f32.mrf.mxu0
        %v2467 = vadd.f32 0.0, %v2466
        %v2468 = vpop.f32.mrf.mxu0
        %2469 = vmatprep.mubr.f32.mxu0 0.0
        %2470 = vmatmul.mubr.f32.gmra.mxu0 %v2293
        %v2471 = vpop.f32.mrf.mxu0
        %v2472 = vadd.f32 0.0, %v2471
        %v2473 = vpop.f32.mrf.mxu0
        %2474 = vmatprep.mubr.f32.mxu0 0.0
        %2475 = vmatmul.mubr.f32.gmra.mxu0 %v2295
        %v2476 = vpop.f32.mrf.mxu0
        %v2477 = vadd.f32 0.0, %v2476
        %v2478 = vpop.f32.mrf.mxu0
        %2479 = vmatprep.mubr.f32.mxu0 0.0
        %2480 = vmatmul.mubr.f32.gmra.mxu0 %v2297
        %v2481 = vpop.f32.mrf.mxu0
        %v2482 = vadd.f32 0.0, %v2481
        %v2483 = vpop.f32.mrf.mxu0
        %2484 = vmatprep.mubr.f32.mxu0 0.0
        %2485 = vmatmul.mubr.f32.gmra.mxu0 %v2299
        %v2486 = vpop.f32.mrf.mxu0
        %v2487 = vadd.f32 0.0, %v2486
        %v2488 = vpop.f32.mrf.mxu0
        %2489 = vmatprep.mubr.f32.mxu0 0.0
        %2490 = vmatmul.mubr.f32.gmra.mxu0 %v2301
        %v2491 = vpop.f32.mrf.mxu0
        %v2492 = vadd.f32 0.0, %v2491
        %v2493 = vpop.f32.mrf.mxu0
        %2494 = vmatprep.mubr.f32.mxu0 0.0
        %2495 = vmatmul.mubr.f32.gmra.mxu0 %v2303
        %v2496 = vpop.f32.mrf.mxu0
        %v2497 = vadd.f32 0.0, %v2496
        %v2498 = vpop.f32.mrf.mxu0
        %2499 = vmatprep.mubr.f32.mxu0 0.0
        %2500 = vmatmul.mubr.f32.gmra.mxu0 %v2305
        %v2501 = vpop.f32.mrf.mxu0
        %v2502 = vadd.f32 0.0, %v2501
        %v2503 = vpop.f32.mrf.mxu0
        %2504 = vmatprep.mubr.f32.mxu0 0.0
        %2505 = vmatmul.mubr.f32.gmra.mxu0 %v2307
        %v2506 = vpop.f32.mrf.mxu0
        %v2507 = vadd.f32 0.0, %v2506
        %v2508 = vpop.f32.mrf.mxu0
        %2509 = vmatprep.mubr.f32.mxu0 0.0
        %2510 = vmatmul.mubr.f32.gmra.mxu0 %v2309
        %v2511 = vpop.f32.mrf.mxu0
        %v2512 = vadd.f32 0.0, %v2511
        %v2513 = vpop.f32.mrf.mxu0
        %2514 = vmatprep.mubr.f32.mxu0 0.0
        %2515 = vmatmul.mubr.f32.gmra.mxu0 %v2311
        %v2516 = vpop.f32.mrf.mxu0
        %v2517 = vadd.f32 0.0, %v2516
        %v2518 = vpop.f32.mrf.mxu0
        %2519 = vmatprep.mubr.f32.mxu0 0.0
        %2520 = vmatmul.mubr.f32.gmra.mxu0 %v2313
        %v2521 = vpop.f32.mrf.mxu0
        %v2522 = vadd.f32 0.0, %v2521
        %v2523 = vpop.f32.mrf.mxu0
        %2524 = vmatprep.mubr.f32.mxu0 0.0
        %2525 = vmatmul.mubr.f32.gmra.mxu0 %v2315
        %v2526 = vpop.f32.mrf.mxu0
        %v2527 = vadd.f32 0.0, %v2526
        %v2528 = vpop.f32.mrf.mxu0
        %2529 = vmatprep.mubr.f32.mxu0 0.0
        %2530 = vmatmul.mubr.f32.gmra.mxu0 %v2317
        %v2531 = vpop.f32.mrf.mxu0
        %v2532 = vadd.f32 0.0, %v2531
        %v2533 = vpop.f32.mrf.mxu0
        %2534 = vmatprep.mubr.f32.mxu0 0.0
        %2535 = vmatmul.mubr.f32.gmra.mxu0 %v2319
        %v2536 = vpop.f32.mrf.mxu0
        %v2537 = vadd.f32 0.0, %v2536
        %v2538 = vpop.f32.mrf.mxu0
        %2539 = vmatprep.mubr.f32.mxu0 0.0
        %2540 = vmatmul.mubr.f32.gmra.mxu0 %v2321
        %v2541 = vpop.f32.mrf.mxu0
        %v2542 = vadd.f32 0.0, %v2541
        %v2543 = vpop.f32.mrf.mxu0
        %2544 = vmatprep.mubr.f32.mxu0 0.0
        %2545 = vmatmul.mubr.f32.gmra.mxu0 %v2323
        %v2546 = vpop.f32.mrf.mxu0
        %v2547 = vadd.f32 0.0, %v2546
        %v2548 = vpop.f32.mrf.mxu0
        %2549 = vdwg.mxu0
        %v2550 = vadd.f32 %v2138, %v2392
        %v2551 = vadd.f32 %v2139, %v2397
        %v2552 = vadd.f32 %v2140, %v2402
        %v2553 = vadd.f32 %v2141, %v2407
        %v2554 = vadd.f32 %v2142, %v2412
        %v2555 = vadd.f32 %v2143, %v2417
        %v2556 = vadd.f32 %v2144, %v2422
        %v2557 = vadd.f32 %v2145, %v2427
        %v2558 = vadd.f32 %v2146, %v2432
        %v2559 = vadd.f32 %v2147, %v2437
        %v2560 = vadd.f32 %v2148, %v2442
        %v2561 = vadd.f32 %v2149, %v2447
        %v2562 = vadd.f32 %v2150, %v2452
        %v2563 = vadd.f32 %v2151, %v2457
        %v2564 = vadd.f32 %v2152, %v2462
        %v2565 = vadd.f32 %v2153, %v2467
        %v2566 = vadd.f32 %v2154, %v2472
        %v2567 = vadd.f32 %v2155, %v2477
        %v2568 = vadd.f32 %v2156, %v2482
        %v2569 = vadd.f32 %v2157, %v2487
        %v2570 = vadd.f32 %v2158, %v2492
        %v2571 = vadd.f32 %v2159, %v2497
        %v2572 = vadd.f32 %v2160, %v2502
        %v2573 = vadd.f32 %v2161, %v2507
        %v2574 = vadd.f32 %v2162, %v2512
        %v2575 = vadd.f32 %v2163, %v2517
        %v2576 = vadd.f32 %v2164, %v2522
        %v2577 = vadd.f32 %v2165, %v2527
        %v2578 = vadd.f32 %v2166, %v2532
        %v2579 = vadd.f32 %v2167, %v2537
        %v2580 = vadd.f32 %v2168, %v2542
        %v2581 = vadd.f32 %v2169, %v2547
        %v2582 = vsel %vm191, %v2253, 0
        %v2584 = vsel %vm191, %v2255, 0
        %2586 = vmatprep.subr.mxu0 0.0
        %2587 = vmatpush1.msra.mxu0 0.0
        %2588 = vmatprep.subr.mxu0 0.0
        %2589 = vmatpush1.msra.mxu0 0.0
        %2590 = vmatprep.subr.mxu0 0.0
        %2591 = vmatpush1.msra.mxu0 0.0
        %2592 = vmatprep.subr.mxu0 0.0
        %2593 = vmatpush1.msra.mxu0 0.0
        %2594 = vmatprep.subr.mxu0 0.0
        %2595 = vmatpush1.msra.mxu0 0.0
        %2596 = vmatprep.subr.mxu0 0.0
        %2597 = vmatpush1.msra.mxu0 0.0
        %2598 = vmatprep.subr.mxu0 0.0
        %2599 = vmatpush1.msra.mxu0 0.0
        %2600 = vmatprep.subr.mxu0 0.0
        %2601 = vmatpush1.msra.mxu0 0.0
        %2602 = vmatprep.subr.mxu0 0.0
        %2603 = vmatpush1.msra.mxu0 0.0
        %2604 = vmatprep.subr.mxu0 0.0
        %2605 = vmatpush1.msra.mxu0 0.0
        %2606 = vmatprep.subr.mxu0 0.0
        %2607 = vmatpush1.msra.mxu0 0.0
        %2608 = vmatprep.subr.mxu0 0.0
        %2609 = vmatpush1.msra.mxu0 0.0
        %2610 = vmatprep.subr.mxu0 0.0
        %2611 = vmatpush1.msra.mxu0 %v389
        %2612 = vmatprep.subr.mxu0 0.0
        %2613 = vmatpush1.msra.mxu0 %v388
        %2614 = vmatprep.subr.mxu0 0.0
        %2615 = vmatpush1.msra.mxu0 %v387
        %2616 = vmatprep.subr.mxu0 0.0
        %2617 = vmatpush1.msra.mxu0 %v386
        %2618 = vmatprep.subr.mxu0 0.0
        %2619 = vmatpush2.msra.mxu0 0.0
        %2620 = vmatprep.subr.mxu0 0.0
        %2621 = vmatpush2.msra.mxu0 0.0
        %2622 = vmatprep.subr.mxu0 0.0
        %2623 = vmatpush2.msra.mxu0 0.0
        %2624 = vmatprep.subr.mxu0 0.0
        %2625 = vmatpush2.msra.mxu0 0.0
        %2626 = vmatprep.subr.mxu0 0.0
        %2627 = vmatpush2.msra.mxu0 0.0
        %2628 = vmatprep.subr.mxu0 0.0
        %2629 = vmatpush2.msra.mxu0 0.0
        %2630 = vmatprep.subr.mxu0 0.0
        %2631 = vmatpush2.msra.mxu0 0.0
        %2632 = vmatprep.subr.mxu0 0.0
        %2633 = vmatpush2.msra.mxu0 0.0
        %2634 = vmatprep.subr.mxu0 0.0
        %2635 = vmatpush2.msra.mxu0 0.0
        %2636 = vmatprep.subr.mxu0 0.0
        %2637 = vmatpush2.msra.mxu0 0.0
        %2638 = vmatprep.subr.mxu0 0.0
        %2639 = vmatpush2.msra.mxu0 0.0
        %2640 = vmatprep.subr.mxu0 0.0
        %2641 = vmatpush2.msra.mxu0 0.0
        %2642 = vmatprep.subr.mxu0 0.0
        %2643 = vmatpush2.msra.mxu0 0.0
        %2644 = vmatprep.subr.mxu0 0.0
        %2645 = vmatpush2.msra.mxu0 0.0
        %2646 = vmatprep.subr.mxu0 0.0
        %2647 = vmatpush2.msra.mxu0 0.0
        %2648 = vmatprep.subr.mxu0 0.0
        %2649 = vmatpush2.msra.mxu0 0.0
        %2650 = vmatprep.mubr.f32.mxu0 0.0
        %2651 = vmatmul.mubr.f32.gmra.mxu0 %v2265
        %v2652 = vpop.f32.mrf.mxu0
        %v2653 = vadd.f32 0.0, %v2652
        %v2654 = vpop.f32.mrf.mxu0
        %2655 = vmatprep.mubr.f32.mxu0 0.0
        %2656 = vmatmul.mubr.f32.gmra.mxu0 %v2267
        %v2657 = vpop.f32.mrf.mxu0
        %v2658 = vadd.f32 0.0, %v2657
        %v2659 = vpop.f32.mrf.mxu0
        %2660 = vmatprep.mubr.f32.mxu0 0.0
        %2661 = vmatmul.mubr.f32.gmra.mxu0 %v2269
        %v2662 = vpop.f32.mrf.mxu0
        %v2663 = vadd.f32 0.0, %v2662
        %v2664 = vpop.f32.mrf.mxu0
        %2665 = vmatprep.mubr.f32.mxu0 0.0
        %2666 = vmatmul.mubr.f32.gmra.mxu0 %v2271
        %v2667 = vpop.f32.mrf.mxu0
        %v2668 = vadd.f32 0.0, %v2667
        %v2669 = vpop.f32.mrf.mxu0
        %2670 = vmatprep.mubr.f32.mxu0 0.0
        %2671 = vmatmul.mubr.f32.gmra.mxu0 %v2273
        %v2672 = vpop.f32.mrf.mxu0
        %v2673 = vadd.f32 0.0, %v2672
        %v2674 = vpop.f32.mrf.mxu0
        %2675 = vmatprep.mubr.f32.mxu0 0.0
        %2676 = vmatmul.mubr.f32.gmra.mxu0 %v2275
        %v2677 = vpop.f32.mrf.mxu0
        %v2678 = vadd.f32 0.0, %v2677
        %v2679 = vpop.f32.mrf.mxu0
        %2680 = vmatprep.mubr.f32.mxu0 0.0
        %2681 = vmatmul.mubr.f32.gmra.mxu0 %v2277
        %v2682 = vpop.f32.mrf.mxu0
        %v2683 = vadd.f32 0.0, %v2682
        %v2684 = vpop.f32.mrf.mxu0
        %2685 = vmatprep.mubr.f32.mxu0 0.0
        %2686 = vmatmul.mubr.f32.gmra.mxu0 %v2279
        %v2687 = vpop.f32.mrf.mxu0
        %v2688 = vadd.f32 0.0, %v2687
        %v2689 = vpop.f32.mrf.mxu0
        %2690 = vmatprep.mubr.f32.mxu0 0.0
        %2691 = vmatmul.mubr.f32.gmra.mxu0 %v2281
        %v2692 = vpop.f32.mrf.mxu0
        %v2693 = vadd.f32 0.0, %v2692
        %v2694 = vpop.f32.mrf.mxu0
        %2695 = vmatprep.mubr.f32.mxu0 0.0
        %2696 = vmatmul.mubr.f32.gmra.mxu0 %v2283
        %v2697 = vpop.f32.mrf.mxu0
        %v2698 = vadd.f32 0.0, %v2697
        %v2699 = vpop.f32.mrf.mxu0
        %2700 = vmatprep.mubr.f32.mxu0 0.0
        %2701 = vmatmul.mubr.f32.gmra.mxu0 %v2285
        %v2702 = vpop.f32.mrf.mxu0
        %v2703 = vadd.f32 0.0, %v2702
        %v2704 = vpop.f32.mrf.mxu0
        %2705 = vmatprep.mubr.f32.mxu0 0.0
        %2706 = vmatmul.mubr.f32.gmra.mxu0 %v2287
        %v2707 = vpop.f32.mrf.mxu0
        %v2708 = vadd.f32 0.0, %v2707
        %v2709 = vpop.f32.mrf.mxu0
        %2710 = vmatprep.mubr.f32.mxu0 0.0
        %2711 = vmatmul.mubr.f32.gmra.mxu0 %v2289
        %v2712 = vpop.f32.mrf.mxu0
        %v2713 = vadd.f32 0.0, %v2712
        %v2714 = vpop.f32.mrf.mxu0
        %2715 = vmatprep.mubr.f32.mxu0 0.0
        %2716 = vmatmul.mubr.f32.gmra.mxu0 %v2291
        %v2717 = vpop.f32.mrf.mxu0
        %v2718 = vadd.f32 0.0, %v2717
        %v2719 = vpop.f32.mrf.mxu0
        %2720 = vmatprep.mubr.f32.mxu0 0.0
        %2721 = vmatmul.mubr.f32.gmra.mxu0 %v2293
        %v2722 = vpop.f32.mrf.mxu0
        %v2723 = vadd.f32 0.0, %v2722
        %v2724 = vpop.f32.mrf.mxu0
        %2725 = vmatprep.mubr.f32.mxu0 0.0
        %2726 = vmatmul.mubr.f32.gmra.mxu0 %v2295
        %v2727 = vpop.f32.mrf.mxu0
        %v2728 = vadd.f32 0.0, %v2727
        %v2729 = vpop.f32.mrf.mxu0
        %2730 = vmatprep.mubr.f32.mxu0 0.0
        %2731 = vmatmul.mubr.f32.gmra.mxu0 %v2297
        %v2732 = vpop.f32.mrf.mxu0
        %v2733 = vadd.f32 0.0, %v2732
        %v2734 = vpop.f32.mrf.mxu0
        %2735 = vmatprep.mubr.f32.mxu0 0.0
        %2736 = vmatmul.mubr.f32.gmra.mxu0 %v2299
        %v2737 = vpop.f32.mrf.mxu0
        %v2738 = vadd.f32 0.0, %v2737
        %v2739 = vpop.f32.mrf.mxu0
        %2740 = vmatprep.mubr.f32.mxu0 0.0
        %2741 = vmatmul.mubr.f32.gmra.mxu0 %v2301
        %v2742 = vpop.f32.mrf.mxu0
        %v2743 = vadd.f32 0.0, %v2742
        %v2744 = vpop.f32.mrf.mxu0
        %2745 = vmatprep.mubr.f32.mxu0 0.0
        %2746 = vmatmul.mubr.f32.gmra.mxu0 %v2303
        %v2747 = vpop.f32.mrf.mxu0
        %v2748 = vadd.f32 0.0, %v2747
        %v2749 = vpop.f32.mrf.mxu0
        %2750 = vmatprep.mubr.f32.mxu0 0.0
        %2751 = vmatmul.mubr.f32.gmra.mxu0 %v2305
        %v2752 = vpop.f32.mrf.mxu0
        %v2753 = vadd.f32 0.0, %v2752
        %v2754 = vpop.f32.mrf.mxu0
        %2755 = vmatprep.mubr.f32.mxu0 0.0
        %2756 = vmatmul.mubr.f32.gmra.mxu0 %v2307
        %v2757 = vpop.f32.mrf.mxu0
        %v2758 = vadd.f32 0.0, %v2757
        %v2759 = vpop.f32.mrf.mxu0
        %2760 = vmatprep.mubr.f32.mxu0 0.0
        %2761 = vmatmul.mubr.f32.gmra.mxu0 %v2309
        %v2762 = vpop.f32.mrf.mxu0
        %v2763 = vadd.f32 0.0, %v2762
        %v2764 = vpop.f32.mrf.mxu0
        %2765 = vmatprep.mubr.f32.mxu0 0.0
        %2766 = vmatmul.mubr.f32.gmra.mxu0 %v2311
        %v2767 = vpop.f32.mrf.mxu0
        %v2768 = vadd.f32 0.0, %v2767
        %v2769 = vpop.f32.mrf.mxu0
        %2770 = vmatprep.mubr.f32.mxu0 0.0
        %2771 = vmatmul.mubr.f32.gmra.mxu0 %v2313
        %v2772 = vpop.f32.mrf.mxu0
        %v2773 = vadd.f32 0.0, %v2772
        %v2774 = vpop.f32.mrf.mxu0
        %2775 = vmatprep.mubr.f32.mxu0 0.0
        %2776 = vmatmul.mubr.f32.gmra.mxu0 %v2315
        %v2777 = vpop.f32.mrf.mxu0
        %v2778 = vadd.f32 0.0, %v2777
        %v2779 = vpop.f32.mrf.mxu0
        %2780 = vmatprep.mubr.f32.mxu0 0.0
        %2781 = vmatmul.mubr.f32.gmra.mxu0 %v2317
        %v2782 = vpop.f32.mrf.mxu0
        %v2783 = vadd.f32 0.0, %v2782
        %v2784 = vpop.f32.mrf.mxu0
        %2785 = vmatprep.mubr.f32.mxu0 0.0
        %2786 = vmatmul.mubr.f32.gmra.mxu0 %v2319
        %v2787 = vpop.f32.mrf.mxu0
        %v2788 = vadd.f32 0.0, %v2787
        %v2789 = vpop.f32.mrf.mxu0
        %2790 = vmatprep.mubr.f32.mxu0 0.0
        %2791 = vmatmul.mubr.f32.gmra.mxu0 %v2321
        %v2792 = vpop.f32.mrf.mxu0
        %v2793 = vadd.f32 0.0, %v2792
        %v2794 = vpop.f32.mrf.mxu0
        %2795 = vmatprep.mubr.f32.mxu0 0.0
        %2796 = vmatmul.mubr.f32.gmra.mxu0 %v2323
        %v2797 = vpop.f32.mrf.mxu0
        %v2798 = vadd.f32 0.0, %v2797
        %v2799 = vpop.f32.mrf.mxu0
        %2800 = vmatprep.mubr.f32.mxu0 0.0
        %2801 = vmatmul.mubr.f32.gmra.mxu0 %v2582
        %v2802 = vpop.f32.mrf.mxu0
        %v2803 = vadd.f32 0.0, %v2802
        %v2804 = vpop.f32.mrf.mxu0
        %2805 = vmatprep.mubr.f32.mxu0 0.0
        %2806 = vmatmul.mubr.f32.gmra.mxu0 %v2584
        %v2807 = vpop.f32.mrf.mxu0
        %v2808 = vadd.f32 0.0, %v2807
        %v2809 = vpop.f32.mrf.mxu0
        %2810 = vdwg.mxu0
        %v2811 = vadd.f32 %v2550, %v2653
        %v2812 = vadd.f32 %v2551, %v2658
        %v2813 = vadd.f32 %v2552, %v2663
        %v2814 = vadd.f32 %v2553, %v2668
        %v2815 = vadd.f32 %v2554, %v2673
        %v2816 = vadd.f32 %v2555, %v2678
        %v2817 = vadd.f32 %v2556, %v2683
        %v2818 = vadd.f32 %v2557, %v2688
        %v2819 = vadd.f32 %v2558, %v2693
        %v2820 = vadd.f32 %v2559, %v2698
        %v2821 = vadd.f32 %v2560, %v2703
        %v2822 = vadd.f32 %v2561, %v2708
        %v2823 = vadd.f32 %v2562, %v2713
        %v2824 = vadd.f32 %v2563, %v2718
        %v2825 = vadd.f32 %v2564, %v2723
        %v2826 = vadd.f32 %v2565, %v2728
        %v2827 = vadd.f32 %v2566, %v2733
        %v2828 = vadd.f32 %v2567, %v2738
        %v2829 = vadd.f32 %v2568, %v2743
        %v2830 = vadd.f32 %v2569, %v2748
        %v2831 = vadd.f32 %v2570, %v2753
        %v2832 = vadd.f32 %v2571, %v2758
        %v2833 = vadd.f32 %v2572, %v2763
        %v2834 = vadd.f32 %v2573, %v2768
        %v2835 = vadd.f32 %v2574, %v2773
        %v2836 = vadd.f32 %v2575, %v2778
        %v2837 = vadd.f32 %v2576, %v2783
        %v2838 = vadd.f32 %v2577, %v2788
        %v2839 = vadd.f32 %v2578, %v2793
        %v2840 = vadd.f32 %v2579, %v2798
        %v2841 = vadd.f32 %v2580, %v2803
        %v2842 = vadd.f32 %v2581, %v2808
        %v2843 = vsel %vm191, %v2258, 0
        %v2845 = vsel %vm191, %v2260, 0
        %2847 = vmatprep.subr.mxu0 0.0
        %2848 = vmatpush1.msra.mxu0 0.0
        %2849 = vmatprep.subr.mxu0 0.0
        %2850 = vmatpush1.msra.mxu0 0.0
        %2851 = vmatprep.subr.mxu0 0.0
        %2852 = vmatpush1.msra.mxu0 0.0
        %2853 = vmatprep.subr.mxu0 0.0
        %2854 = vmatpush1.msra.mxu0 0.0
        %2855 = vmatprep.subr.mxu0 0.0
        %2856 = vmatpush1.msra.mxu0 0.0
        %2857 = vmatprep.subr.mxu0 0.0
        %2858 = vmatpush1.msra.mxu0 0.0
        %2859 = vmatprep.subr.mxu0 0.0
        %2860 = vmatpush1.msra.mxu0 0.0
        %2861 = vmatprep.subr.mxu0 0.0
        %2862 = vmatpush1.msra.mxu0 0.0
        %2863 = vmatprep.subr.mxu0 0.0
        %2864 = vmatpush1.msra.mxu0 0.0
        %2865 = vmatprep.subr.mxu0 0.0
        %2866 = vmatpush1.msra.mxu0 0.0
        %2867 = vmatprep.subr.mxu0 0.0
        %2868 = vmatpush1.msra.mxu0 0.0
        %2869 = vmatprep.subr.mxu0 0.0
        %2870 = vmatpush1.msra.mxu0 0.0
        %2871 = vmatprep.subr.mxu0 0.0
        %2872 = vmatpush1.msra.mxu0 %v401
        %2873 = vmatprep.subr.mxu0 0.0
        %2874 = vmatpush1.msra.mxu0 %v400
        %2875 = vmatprep.subr.mxu0 0.0
        %2876 = vmatpush1.msra.mxu0 %v399
        %2877 = vmatprep.subr.mxu0 0.0
        %2878 = vmatpush1.msra.mxu0 %v398
        %2879 = vmatprep.subr.mxu0 0.0
        %2880 = vmatpush2.msra.mxu0 0.0
        %2881 = vmatprep.subr.mxu0 0.0
        %2882 = vmatpush2.msra.mxu0 0.0
        %2883 = vmatprep.subr.mxu0 0.0
        %2884 = vmatpush2.msra.mxu0 0.0
        %2885 = vmatprep.subr.mxu0 0.0
        %2886 = vmatpush2.msra.mxu0 0.0
        %2887 = vmatprep.subr.mxu0 0.0
        %2888 = vmatpush2.msra.mxu0 0.0
        %2889 = vmatprep.subr.mxu0 0.0
        %2890 = vmatpush2.msra.mxu0 0.0
        %2891 = vmatprep.subr.mxu0 0.0
        %2892 = vmatpush2.msra.mxu0 0.0
        %2893 = vmatprep.subr.mxu0 0.0
        %2894 = vmatpush2.msra.mxu0 0.0
        %2895 = vmatprep.subr.mxu0 0.0
        %2896 = vmatpush2.msra.mxu0 0.0
        %2897 = vmatprep.subr.mxu0 0.0
        %2898 = vmatpush2.msra.mxu0 0.0
        %2899 = vmatprep.subr.mxu0 0.0
        %2900 = vmatpush2.msra.mxu0 0.0
        %2901 = vmatprep.subr.mxu0 0.0
        %2902 = vmatpush2.msra.mxu0 0.0
        %2903 = vmatprep.subr.mxu0 0.0
        %2904 = vmatpush2.msra.mxu0 0.0
        %2905 = vmatprep.subr.mxu0 0.0
        %2906 = vmatpush2.msra.mxu0 0.0
        %2907 = vmatprep.subr.mxu0 0.0
        %2908 = vmatpush2.msra.mxu0 0.0
        %2909 = vmatprep.subr.mxu0 0.0
        %2910 = vmatpush2.msra.mxu0 0.0
        %2911 = vmatprep.mubr.f32.mxu0 0.0
        %2912 = vmatmul.mubr.f32.gmra.mxu0 %v2269
        %v2913 = vpop.f32.mrf.mxu0
        %v2914 = vadd.f32 0.0, %v2913
        %v2915 = vpop.f32.mrf.mxu0
        %2916 = vmatprep.mubr.f32.mxu0 0.0
        %2917 = vmatmul.mubr.f32.gmra.mxu0 %v2271
        %v2918 = vpop.f32.mrf.mxu0
        %v2919 = vadd.f32 0.0, %v2918
        %v2920 = vpop.f32.mrf.mxu0
        %2921 = vmatprep.mubr.f32.mxu0 0.0
        %2922 = vmatmul.mubr.f32.gmra.mxu0 %v2273
        %v2923 = vpop.f32.mrf.mxu0
        %v2924 = vadd.f32 0.0, %v2923
        %v2925 = vpop.f32.mrf.mxu0
        %2926 = vmatprep.mubr.f32.mxu0 0.0
        %2927 = vmatmul.mubr.f32.gmra.mxu0 %v2275
        %v2928 = vpop.f32.mrf.mxu0
        %v2929 = vadd.f32 0.0, %v2928
        %v2930 = vpop.f32.mrf.mxu0
        %2931 = vmatprep.mubr.f32.mxu0 0.0
        %2932 = vmatmul.mubr.f32.gmra.mxu0 %v2277
        %v2933 = vpop.f32.mrf.mxu0
        %v2934 = vadd.f32 0.0, %v2933
        %v2935 = vpop.f32.mrf.mxu0
        %2936 = vmatprep.mubr.f32.mxu0 0.0
        %2937 = vmatmul.mubr.f32.gmra.mxu0 %v2279
        %v2938 = vpop.f32.mrf.mxu0
        %v2939 = vadd.f32 0.0, %v2938
        %v2940 = vpop.f32.mrf.mxu0
        %2941 = vmatprep.mubr.f32.mxu0 0.0
        %2942 = vmatmul.mubr.f32.gmra.mxu0 %v2281
        %v2943 = vpop.f32.mrf.mxu0
        %v2944 = vadd.f32 0.0, %v2943
        %v2945 = vpop.f32.mrf.mxu0
        %2946 = vmatprep.mubr.f32.mxu0 0.0
        %2947 = vmatmul.mubr.f32.gmra.mxu0 %v2283
        %v2948 = vpop.f32.mrf.mxu0
        %v2949 = vadd.f32 0.0, %v2948
        %v2950 = vpop.f32.mrf.mxu0
        %2951 = vmatprep.mubr.f32.mxu0 0.0
        %2952 = vmatmul.mubr.f32.gmra.mxu0 %v2285
        %v2953 = vpop.f32.mrf.mxu0
        %v2954 = vadd.f32 0.0, %v2953
        %v2955 = vpop.f32.mrf.mxu0
        %2956 = vmatprep.mubr.f32.mxu0 0.0
        %2957 = vmatmul.mubr.f32.gmra.mxu0 %v2287
        %v2958 = vpop.f32.mrf.mxu0
        %v2959 = vadd.f32 0.0, %v2958
        %v2960 = vpop.f32.mrf.mxu0
        %2961 = vmatprep.mubr.f32.mxu0 0.0
        %2962 = vmatmul.mubr.f32.gmra.mxu0 %v2289
        %v2963 = vpop.f32.mrf.mxu0
        %v2964 = vadd.f32 0.0, %v2963
        %v2965 = vpop.f32.mrf.mxu0
        %2966 = vmatprep.mubr.f32.mxu0 0.0
        %2967 = vmatmul.mubr.f32.gmra.mxu0 %v2291
        %v2968 = vpop.f32.mrf.mxu0
        %v2969 = vadd.f32 0.0, %v2968
        %v2970 = vpop.f32.mrf.mxu0
        %2971 = vmatprep.mubr.f32.mxu0 0.0
        %2972 = vmatmul.mubr.f32.gmra.mxu0 %v2293
        %v2973 = vpop.f32.mrf.mxu0
        %v2974 = vadd.f32 0.0, %v2973
        %v2975 = vpop.f32.mrf.mxu0
        %2976 = vmatprep.mubr.f32.mxu0 0.0
        %2977 = vmatmul.mubr.f32.gmra.mxu0 %v2295
        %v2978 = vpop.f32.mrf.mxu0
        %v2979 = vadd.f32 0.0, %v2978
        %v2980 = vpop.f32.mrf.mxu0
        %2981 = vmatprep.mubr.f32.mxu0 0.0
        %2982 = vmatmul.mubr.f32.gmra.mxu0 %v2297
        %v2983 = vpop.f32.mrf.mxu0
        %v2984 = vadd.f32 0.0, %v2983
        %v2985 = vpop.f32.mrf.mxu0
        %2986 = vmatprep.mubr.f32.mxu0 0.0
        %2987 = vmatmul.mubr.f32.gmra.mxu0 %v2299
        %v2988 = vpop.f32.mrf.mxu0
        %v2989 = vadd.f32 0.0, %v2988
        %v2990 = vpop.f32.mrf.mxu0
        %2991 = vmatprep.mubr.f32.mxu0 0.0
        %2992 = vmatmul.mubr.f32.gmra.mxu0 %v2301
        %v2993 = vpop.f32.mrf.mxu0
        %v2994 = vadd.f32 0.0, %v2993
        %v2995 = vpop.f32.mrf.mxu0
        %2996 = vmatprep.mubr.f32.mxu0 0.0
        %2997 = vmatmul.mubr.f32.gmra.mxu0 %v2303
        %v2998 = vpop.f32.mrf.mxu0
        %v2999 = vadd.f32 0.0, %v2998
        %v3000 = vpop.f32.mrf.mxu0
        %3001 = vmatprep.mubr.f32.mxu0 0.0
        %3002 = vmatmul.mubr.f32.gmra.mxu0 %v2305
        %v3003 = vpop.f32.mrf.mxu0
        %v3004 = vadd.f32 0.0, %v3003
        %v3005 = vpop.f32.mrf.mxu0
        %3006 = vmatprep.mubr.f32.mxu0 0.0
        %3007 = vmatmul.mubr.f32.gmra.mxu0 %v2307
        %v3008 = vpop.f32.mrf.mxu0
        %v3009 = vadd.f32 0.0, %v3008
        %v3010 = vpop.f32.mrf.mxu0
        %3011 = vmatprep.mubr.f32.mxu0 0.0
        %3012 = vmatmul.mubr.f32.gmra.mxu0 %v2309
        %v3013 = vpop.f32.mrf.mxu0
        %v3014 = vadd.f32 0.0, %v3013
        %v3015 = vpop.f32.mrf.mxu0
        %3016 = vmatprep.mubr.f32.mxu0 0.0
        %3017 = vmatmul.mubr.f32.gmra.mxu0 %v2311
        %v3018 = vpop.f32.mrf.mxu0
        %v3019 = vadd.f32 0.0, %v3018
        %v3020 = vpop.f32.mrf.mxu0
        %3021 = vmatprep.mubr.f32.mxu0 0.0
        %3022 = vmatmul.mubr.f32.gmra.mxu0 %v2313
        %v3023 = vpop.f32.mrf.mxu0
        %v3024 = vadd.f32 0.0, %v3023
        %v3025 = vpop.f32.mrf.mxu0
        %3026 = vmatprep.mubr.f32.mxu0 0.0
        %3027 = vmatmul.mubr.f32.gmra.mxu0 %v2315
        %v3028 = vpop.f32.mrf.mxu0
        %v3029 = vadd.f32 0.0, %v3028
        %v3030 = vpop.f32.mrf.mxu0
        %3031 = vmatprep.mubr.f32.mxu0 0.0
        %3032 = vmatmul.mubr.f32.gmra.mxu0 %v2317
        %v3033 = vpop.f32.mrf.mxu0
        %v3034 = vadd.f32 0.0, %v3033
        %v3035 = vpop.f32.mrf.mxu0
        %3036 = vmatprep.mubr.f32.mxu0 0.0
        %3037 = vmatmul.mubr.f32.gmra.mxu0 %v2319
        %v3038 = vpop.f32.mrf.mxu0
        %v3039 = vadd.f32 0.0, %v3038
        %v3040 = vpop.f32.mrf.mxu0
        %3041 = vmatprep.mubr.f32.mxu0 0.0
        %3042 = vmatmul.mubr.f32.gmra.mxu0 %v2321
        %v3043 = vpop.f32.mrf.mxu0
        %v3044 = vadd.f32 0.0, %v3043
        %v3045 = vpop.f32.mrf.mxu0
        %3046 = vmatprep.mubr.f32.mxu0 0.0
        %3047 = vmatmul.mubr.f32.gmra.mxu0 %v2323
        %v3048 = vpop.f32.mrf.mxu0
        %v3049 = vadd.f32 0.0, %v3048
        %v3050 = vpop.f32.mrf.mxu0
        %3051 = vmatprep.mubr.f32.mxu0 0.0
        %3052 = vmatmul.mubr.f32.gmra.mxu0 %v2582
        %v3053 = vpop.f32.mrf.mxu0
        %v3054 = vadd.f32 0.0, %v3053
        %v3055 = vpop.f32.mrf.mxu0
        %3056 = vmatprep.mubr.f32.mxu0 0.0
        %3057 = vmatmul.mubr.f32.gmra.mxu0 %v2584
        %v3058 = vpop.f32.mrf.mxu0
        %v3059 = vadd.f32 0.0, %v3058
        %v3060 = vpop.f32.mrf.mxu0
        %3061 = vmatprep.mubr.f32.mxu0 0.0
        %3062 = vmatmul.mubr.f32.gmra.mxu0 %v2843
        %v3063 = vpop.f32.mrf.mxu0
        %v3064 = vadd.f32 0.0, %v3063
        %v3065 = vpop.f32.mrf.mxu0
        %3066 = vmatprep.mubr.f32.mxu0 0.0
        %3067 = vmatmul.mubr.f32.gmra.mxu0 %v2845
        %v3068 = vpop.f32.mrf.mxu0
        %v3069 = vadd.f32 0.0, %v3068
        %v3070 = vpop.f32.mrf.mxu0
        %3071 = vdwg.mxu0
        %v3072 = vadd.f32 %v2811, %v2914
        %v3073 = vadd.f32 %v2812, %v2919
        %v3074 = vadd.f32 %v2813, %v2924
        %v3075 = vadd.f32 %v2814, %v2929
        %v3076 = vadd.f32 %v2815, %v2934
        %v3077 = vadd.f32 %v2816, %v2939
        %v3078 = vadd.f32 %v2817, %v2944
        %v3079 = vadd.f32 %v2818, %v2949
        %v3080 = vadd.f32 %v2819, %v2954
        %v3081 = vadd.f32 %v2820, %v2959
        %v3082 = vadd.f32 %v2821, %v2964
        %v3083 = vadd.f32 %v2822, %v2969
        %v3084 = vadd.f32 %v2823, %v2974
        %v3085 = vadd.f32 %v2824, %v2979
        %v3086 = vadd.f32 %v2825, %v2984
        %v3087 = vadd.f32 %v2826, %v2989
        %v3088 = vadd.f32 %v2827, %v2994
        %v3089 = vadd.f32 %v2828, %v2999
        %v3090 = vadd.f32 %v2829, %v3004
        %v3091 = vadd.f32 %v2830, %v3009
        %v3092 = vadd.f32 %v2831, %v3014
        %v3093 = vadd.f32 %v2832, %v3019
        %v3094 = vadd.f32 %v2833, %v3024
        %v3095 = vadd.f32 %v2834, %v3029
        %v3096 = vadd.f32 %v2835, %v3034
        %v3097 = vadd.f32 %v2836, %v3039
        %v3098 = vadd.f32 %v2837, %v3044
        %v3099 = vadd.f32 %v2838, %v3049
        %v3100 = vadd.f32 %v2839, %v3054
        %v3101 = vadd.f32 %v2840, %v3059
        %v3102 = vadd.f32 %v2841, %v3064
        %v3103 = vadd.f32 %v2842, %v3069
        %v3105 = vlaneseq
        %v3106 = vshrl.u32 %v3105, 7
        %v3107 = vsub.s32 0, %v3106
        %v3108 = vrot.slane %v402, %v3107
        %v3110 = vadd.f32 %v3072, %v3108
        %v3111 = vadd.f32 %v3073, %v3108
        %v3112 = vadd.f32 %v3074, %v3108
        %v3113 = vadd.f32 %v3075, %v3108
        %v3114 = vadd.f32 %v3076, %v3108
        %v3115 = vadd.f32 %v3077, %v3108
        %v3116 = vadd.f32 %v3078, %v3108
        %v3117 = vadd.f32 %v3079, %v3108
        %v3118 = vadd.f32 %v3080, %v3108
        %v3119 = vadd.f32 %v3081, %v3108
        %v3120 = vadd.f32 %v3082, %v3108
        %v3121 = vadd.f32 %v3083, %v3108
        %v3122 = vadd.f32 %v3084, %v3108
        %v3123 = vadd.f32 %v3085, %v3108
        %v3124 = vadd.f32 %v3086, %v3108
        %v3125 = vadd.f32 %v3087, %v3108
        %v3126 = vadd.f32 %v3088, %v3108
        %v3127 = vadd.f32 %v3089, %v3108
        %v3128 = vadd.f32 %v3090, %v3108
        %v3129 = vadd.f32 %v3091, %v3108
        %v3130 = vadd.f32 %v3092, %v3108
        %v3131 = vadd.f32 %v3093, %v3108
        %v3132 = vadd.f32 %v3094, %v3108
        %v3133 = vadd.f32 %v3095, %v3108
        %v3134 = vadd.f32 %v3096, %v3108
        %v3135 = vadd.f32 %v3097, %v3108
        %v3136 = vadd.f32 %v3098, %v3108
        %v3137 = vadd.f32 %v3099, %v3108
        %v3138 = vadd.f32 %v3100, %v3108
        %v3139 = vadd.f32 %v3101, %v3108
        %v3140 = vadd.f32 %v3102, %v3108
        %v3141 = vadd.f32 %v3103, %v3108
        %v3142 = vmul.f32 %v3110, 1.442695
        %v3143 = vpow.pop %v3142
        %v3144 = vmul.f32 %v3111, 1.442695
        %v3145 = vpow.pop %v3144
        %v3146 = vmul.f32 %v3112, 1.442695
        %v3147 = vpow.pop %v3146
        %v3148 = vmul.f32 %v3113, 1.442695
        %v3149 = vpow.pop %v3148
        %v3150 = vmul.f32 %v3114, 1.442695
        %v3151 = vpow.pop %v3150
        %v3152 = vmul.f32 %v3115, 1.442695
        %v3153 = vpow.pop %v3152
        %v3154 = vmul.f32 %v3116, 1.442695
        %v3155 = vpow.pop %v3154
        %v3156 = vmul.f32 %v3117, 1.442695
        %v3157 = vpow.pop %v3156
        %v3158 = vmul.f32 %v3118, 1.442695
        %v3159 = vpow.pop %v3158
        %v3160 = vmul.f32 %v3119, 1.442695
        %v3161 = vpow.pop %v3160
        %v3162 = vmul.f32 %v3120, 1.442695
        %v3163 = vpow.pop %v3162
        %v3164 = vmul.f32 %v3121, 1.442695
        %v3165 = vpow.pop %v3164
        %v3166 = vmul.f32 %v3122, 1.442695
        %v3167 = vpow.pop %v3166
        %v3168 = vmul.f32 %v3123, 1.442695
        %v3169 = vpow.pop %v3168
        %v3170 = vmul.f32 %v3124, 1.442695
        %v3171 = vpow.pop %v3170
        %v3172 = vmul.f32 %v3125, 1.442695
        %v3173 = vpow.pop %v3172
        %v3174 = vmul.f32 %v3126, 1.442695
        %v3175 = vpow.pop %v3174
        %v3176 = vmul.f32 %v3127, 1.442695
        %v3177 = vpow.pop %v3176
        %v3178 = vmul.f32 %v3128, 1.442695
        %v3179 = vpow.pop %v3178
        %v3180 = vmul.f32 %v3129, 1.442695
        %v3181 = vpow.pop %v3180
        %v3182 = vmul.f32 %v3130, 1.442695
        %v3183 = vpow.pop %v3182
        %v3184 = vmul.f32 %v3131, 1.442695
        %v3185 = vpow.pop %v3184
        %v3186 = vmul.f32 %v3132, 1.442695
        %v3187 = vpow.pop %v3186
        %v3188 = vmul.f32 %v3133, 1.442695
        %v3189 = vpow.pop %v3188
        %v3190 = vmul.f32 %v3134, 1.442695
        %v3191 = vpow.pop %v3190
        %v3192 = vmul.f32 %v3135, 1.442695
        %v3193 = vpow.pop %v3192
        %v3194 = vmul.f32 %v3136, 1.442695
        %v3195 = vpow.pop %v3194
        %v3196 = vmul.f32 %v3137, 1.442695
        %v3197 = vpow.pop %v3196
        %v3198 = vmul.f32 %v3138, 1.442695
        %v3199 = vpow.pop %v3198
        %v3200 = vmul.f32 %v3139, 1.442695
        %v3201 = vpow.pop %v3200
        %v3202 = vmul.f32 %v3140, 1.442695
        %v3203 = vpow.pop %v3202
        %v3204 = vmul.f32 %v3141, 1.442695
        %v3205 = vpow.pop %v3204
        %vm3206 = vcmask 31744
        %3207 = vst.msk [vmem:[%s190] sm:$0xff] %vm3206, %v3143
        %3208 = vst.msk [vmem:[%s190 + $0x8] sm:$0xff] %vm3206, %v3145
        %3209 = vst.msk [vmem:[%s190 + $0x10] sm:$0xff] %vm3206, %v3147
        %3210 = vst.msk [vmem:[%s190 + $0x18] sm:$0xff] %vm3206, %v3149
        %3211 = vst.msk [vmem:[%s190 + $0x20] sm:$0xff] %vm3206, %v3151
        %3212 = vst.msk [vmem:[%s190 + $0x28] sm:$0xff] %vm3206, %v3153
        %3213 = vst.msk [vmem:[%s190 + $0x30] sm:$0xff] %vm3206, %v3155
        %3214 = vst.msk [vmem:[%s190 + $0x38] sm:$0xff] %vm3206, %v3157
        %3215 = vst.msk [vmem:[%s190 + $0x40] sm:$0xff] %vm3206, %v3159
        %3216 = vst.msk [vmem:[%s190 + $0x48] sm:$0xff] %vm3206, %v3161
        %3217 = vst.msk [vmem:[%s190 + $0x50] sm:$0xff] %vm3206, %v3163
        %3218 = vst.msk [vmem:[%s190 + $0x58] sm:$0xff] %vm3206, %v3165
        %3219 = vst.msk [vmem:[%s190 + $0x60] sm:$0xff] %vm3206, %v3167
        %3220 = vst.msk [vmem:[%s190 + $0x68] sm:$0xff] %vm3206, %v3169
        %3221 = vst.msk [vmem:[%s190 + $0x70] sm:$0xff] %vm3206, %v3171
        %3222 = vst.msk [vmem:[%s190 + $0x78] sm:$0xff] %vm3206, %v3173
        %3223 = vst.msk [vmem:[%s190 + $0x80] sm:$0xff] %vm3206, %v3175
        %3224 = vst.msk [vmem:[%s190 + $0x88] sm:$0xff] %vm3206, %v3177
        %3225 = vst.msk [vmem:[%s190 + $0x90] sm:$0xff] %vm3206, %v3179
        %3226 = vst.msk [vmem:[%s190 + $0x98] sm:$0xff] %vm3206, %v3181
        %3227 = vst.msk [vmem:[%s190 + $0xa0] sm:$0xff] %vm3206, %v3183
        %3228 = vst.msk [vmem:[%s190 + $0xa8] sm:$0xff] %vm3206, %v3185
        %3229 = vst.msk [vmem:[%s190 + $0xb0] sm:$0xff] %vm3206, %v3187
        %3230 = vst.msk [vmem:[%s190 + $0xb8] sm:$0xff] %vm3206, %v3189
        %3231 = vst.msk [vmem:[%s190 + $0xc0] sm:$0xff] %vm3206, %v3191
        %3232 = vst.msk [vmem:[%s190 + $0xc8] sm:$0xff] %vm3206, %v3193
        %3233 = vst.msk [vmem:[%s190 + $0xd0] sm:$0xff] %vm3206, %v3195
        %3234 = vst.msk [vmem:[%s190 + $0xd8] sm:$0xff] %vm3206, %v3197
        %3235 = vst.msk [vmem:[%s190 + $0xe0] sm:$0xff] %vm3206, %v3199
        %3236 = vst.msk [vmem:[%s190 + $0xe8] sm:$0xff] %vm3206, %v3201
        %3237 = vst.msk [vmem:[%s190 + $0xf0] sm:$0xff] %vm3206, %v3203
        %3238 = vst.msk [vmem:[%s190 + $0xf8] sm:$0xff] %vm3206, %v3205
        %p3239 = scmp.lt.s32.totalorder %s17, 1
        %s3240 = scalar_select %p3239, %s17, 1
        %s3241 = smul.addr %s3240, 32
        %s3242 = smul.addr %s3241, 8
        %s3243 = scalar_lea.vmem %s3, %s3242
        // Predicated region
        $region37: #{tpu_custom_call.1} parent=31 // pred_check
          %p3244 = pneg %p103
        $region38: #{tpu_custom_call.1} parent=31 // pred_check_branch
          %3246 = sbr.rel (%p3244) target = $region40
        $region39: #{tpu_custom_call.1} parent=31 // pred_region
          _
        $region40: #{tpu_custom_call.1} parent=31 // pred_fallthru
          _
      $region32: #{tpu_custom_call.1} parent=5 // pred_fallthru
        _
      %p3247 = scmp.le.s32.totalorder 2, %s12
      // Predicated region
      $region41: #{tpu_custom_call.1} parent=5 // pred_check
        %p3248 = pneg %p3247
      $region42: #{tpu_custom_call.1} parent=5 // pred_check_branch
        %3250 = sbr.rel (%p3248) target = $region44
      $region43: #{tpu_custom_call.1} parent=5 // pred_region
        %s3251 = ssub.s32 %s12, 2
        // Predicated region
        $region45: #{tpu_custom_call.1} parent=43 // pred_check
          %p3252 = pneg %p109
        $region46: #{tpu_custom_call.1} parent=43 // pred_check_branch
          %3254 = sbr.rel (%p3252) target = $region48
        $region47: #{tpu_custom_call.1} parent=43 // pred_region
          %p3255 = scmp.lt.s32.totalorder %s18, 1
          %s3256 = scalar_select %p3255, %s18, 1
          %s3257 = smul.addr %s3256, 32
          %s3258 = smul.addr %s3257, 8
          %s3259 = scalar_lea.vmem %s3, %s3258
        $region48: #{tpu_custom_call.1} parent=43 // pred_fallthru
          _
      $region44: #{tpu_custom_call.1} parent=5 // pred_fallthru
        _
    $region6: #{tpu_custom_call.1} parent=1 // loop_footer
      %s16 = sadd.s32 1, %s12
    $region7: #{tpu_custom_call.1} parent=1 // loop_footer_branch
      %11 = sbr.rel target = $region3
    $region8: #{tpu_custom_call.1} parent=1 // loop_exit
      _
    %3260 = vsyncpa [#allocation4], 1
    %s3261 = scalar_lea.sflag [#allocation4], 1
    %3262 = vsyncpa %s3261, 1

</llo_original>
